<compile_context>
chip_gen: v5e
topology: v5e:2x2
jax: 0.10.0
libtpu: 0.0.40
codegen_flags: <defaults>
</compile_context>

<pallas_src>
import functools
import math

import jax
import jax.numpy as jnp
from jax import lax
from jax.experimental import pallas as pl
from jax.experimental.pallas import tpu as pltpu


# ----------------------------- generation-aware VMEM budget -----------------------------

def _vmem_limit_bytes():
    cap = 128 * 1024 * 1024
    try:
        info = pltpu.get_tpu_info()
        cap = int(getattr(info, "vmem_capacity_bytes", cap))
    except Exception:
        pass
    # Leave headroom for double-buffered operands + compiler-internal scratch.
    return max(32 * 1024 * 1024, min(int(cap * 0.6), 100 * 1024 * 1024))


_VMEM_LIMIT = _vmem_limit_bytes()


def _cparams(*sem):
    if sem:
        return pltpu.CompilerParams(dimension_semantics=tuple(sem),
                                    vmem_limit_bytes=_VMEM_LIMIT)
    return pltpu.CompilerParams(vmem_limit_bytes=_VMEM_LIMIT)


def _row_tile(m):
    """Row-block size for M-tiled kernels (full array when small, prefer big tiles)."""
    if m <= 512:
        return m
    for t in (512, 256, 128, 64, 32, 16, 8):
        if m % t == 0:
            return t
    return m


def _layernorm(z, g, b, eps):
    """torch-style custom LayerNorm: unbiased std, normalize by (std + eps)."""
    d = z.shape[-1]
    mean = jnp.mean(z, axis=-1, keepdims=True)
    diff = z - mean
    var = jnp.sum(diff * diff, axis=-1, keepdims=True) * (1.0 / (d - 1))
    std = jnp.sqrt(var)
    return g * diff * pl.reciprocal(std + eps, approx=True) + b


def _bf16(x):
    return x.astype(jnp.bfloat16)


# ----------------------------- Pallas kernels -----------------------------

def _mhsa_block_kernel(x_ref, wq_ref, bq_ref, wk_ref, bk_ref, wv_ref, bv_ref,
                       wm_ref, bm_ref, g_ref, be_ref, o_ref, *, scale, eps):
    """One (batch, head) step of fused self-attention: per-head QKV projection + attention +
    per-head merge-linear slice accumulated into the resident output block; residual +
    LayerNorm on the last head."""
    h = pl.program_id(1)
    x = x_ref[0]                                     # [S, D] f32 (resident per batch element)
    xb = _bf16(x)
    q = jnp.dot(xb, wq_ref[0], preferred_element_type=jnp.float32) + bq_ref[0]   # [S, Dh]
    k = jnp.dot(xb, wk_ref[0], preferred_element_type=jnp.float32) + bk_ref[0]
    v = jnp.dot(xb, wv_ref[0], preferred_element_type=jnp.float32) + bv_ref[0]
    q = q * scale
    s = lax.dot_general(_bf16(q), _bf16(k), (((1,), (1,)), ((), ())),
                        preferred_element_type=jnp.float32)                       # [S, S]
    s = s - jnp.max(s, axis=-1, keepdims=True)
    e = jnp.exp(s)
    p = e * pl.reciprocal(jnp.sum(e, axis=-1, keepdims=True), approx=True)
    att = jnp.dot(_bf16(p), _bf16(v), preferred_element_type=jnp.float32)         # [S, Dh]
    part = jnp.dot(_bf16(att), wm_ref[0], preferred_element_type=jnp.float32)     # [S, D]

    @pl.when(h == 0)
    def _():
        o_ref[0] = part

    @pl.when(h != 0)
    def _():
        o_ref[0] = o_ref[0] + part

    @pl.when(h == pl.num_programs(1) - 1)
    def _():
        z = x + o_ref[0] + bm_ref[...]
        o_ref[0] = _layernorm(z, g_ref[...], be_ref[...], eps)


def pallas_mhsa_block(x, p, *, eps=1e-6):
    B, S, D = x.shape
    H, _, Dh = p["q"]["w"].shape
    scale = 1.0 / math.sqrt(Dh)
    # TODO(synk): when B == 1 add a query-tile "parallel" axis so both v7x TensorCores get work.
    return pl.pallas_call(
        functools.partial(_mhsa_block_kernel, scale=scale, eps=eps),
        out_shape=jax.ShapeDtypeStruct((B, S, D), jnp.float32),
        grid=(B, H),
        in_specs=[pl.BlockSpec((1, S, D), lambda b, h: (b, 0, 0)),
                  pl.BlockSpec((1, D, Dh), lambda b, h: (h, 0, 0)),
                  pl.BlockSpec((1, 1, Dh), lambda b, h: (h, 0, 0)),
                  pl.BlockSpec((1, D, Dh), lambda b, h: (h, 0, 0)),
                  pl.BlockSpec((1, 1, Dh), lambda b, h: (h, 0, 0)),
                  pl.BlockSpec((1, D, Dh), lambda b, h: (h, 0, 0)),
                  pl.BlockSpec((1, 1, Dh), lambda b, h: (h, 0, 0)),
                  pl.BlockSpec((1, Dh, D), lambda b, h: (h, 0, 0)),
                  pl.BlockSpec((1, D), lambda b, h: (0, 0)),
                  pl.BlockSpec((1, D), lambda b, h: (0, 0)),
                  pl.BlockSpec((1, D), lambda b, h: (0, 0))],
        out_specs=pl.BlockSpec((1, S, D), lambda b, h: (b, 0, 0)),
        compiler_params=_cparams("parallel", "arbitrary"),
    )(x, p["q"]["w"], p["q"]["b"], p["k"]["w"], p["k"]["b"], p["v"]["w"], p["v"]["b"],
      p["merge"]["w"], p["merge"]["b"],
      p["norm1"]["g"].reshape(1, D), p["norm1"]["b"].reshape(1, D))


def _ffn_res_norm_kernel(x_ref, w1_ref, b1_ref, w2_ref, b2_ref, g_ref, be_ref, o_ref, *, eps):
    """LayerNorm(x + Linear(ReLU(Linear(x)))) — the SA FFN sublayer in one kernel."""
    x = x_ref[...]
    h = jnp.dot(_bf16(x), w1_ref[...], preferred_element_type=jnp.float32) + b1_ref[...]
    h = jnp.maximum(h, 0.0)
    z = x + jnp.dot(_bf16(h), w2_ref[...], preferred_element_type=jnp.float32) + b2_ref[...]
    o_ref[...] = _layernorm(z, g_ref[...], be_ref[...], eps)


def pallas_ffn_block(x, w1, b1, w2, b2, g, beta, eps=1e-6):
    lead = x.shape[:-1]
    D = x.shape[-1]
    F = w1.shape[1]
    x2 = x.reshape(-1, D)
    M = x2.shape[0]
    tm = _row_tile(M)
    # TODO(synk): add K/N tiling with a VMEM accumulator before scaling D/F to 2048-class sizes
    # (single-block weight staging does not fit v7x's 64 MiB VMEM there).
    out = pl.pallas_call(
        functools.partial(_ffn_res_norm_kernel, eps=eps),
        out_shape=jax.ShapeDtypeStruct((M, D), jnp.float32),
        grid=(M // tm,),
        in_specs=[pl.BlockSpec((tm, D), lambda i: (i, 0)),
                  pl.BlockSpec((D, F), lambda i: (0, 0)),
                  pl.BlockSpec((1, F), lambda i: (0, 0)),
                  pl.BlockSpec((F, D), lambda i: (0, 0)),
                  pl.BlockSpec((1, D), lambda i: (0, 0)),
                  pl.BlockSpec((1, D), lambda i: (0, 0)),
                  pl.BlockSpec((1, D), lambda i: (0, 0))],
        out_specs=pl.BlockSpec((tm, D), lambda i: (i, 0)),
        compiler_params=_cparams("parallel"),
    )(x2, w1, b1, w2, b2, g.reshape(1, D), beta.reshape(1, D))
    return out.reshape(*lead, D)


def _cross_block_kernel(img_ref, aud_ref, wiqk_ref, wiv_ref, waqk_ref, wav_ref,
                        wio_ref, bio_ref, wao_ref, bao_ref,
                        g1_ref, be1_ref, g2_ref, be2_ref, io_ref, ao_ref, *, scale, eps):
    """One (batch, head) step of the bidirectional cross-attention, with in-kernel qk|v
    projections, per-head to_out slices accumulated into the resident outputs, and
    (eval-mode dropout residual) + LayerNorm finalized on the last head."""
    h = pl.program_id(1)
    img = _bf16(img_ref[0])                         # [Si, Di]
    aud = _bf16(aud_ref[0])                         # [Sa, Da]
    qk_i = jnp.dot(img, wiqk_ref[0], preferred_element_type=jnp.float32) * scale   # [Si, Dh]
    v_i = jnp.dot(img, wiv_ref[0], preferred_element_type=jnp.float32)             # [Si, Dh]
    qk_a = jnp.dot(aud, waqk_ref[0], preferred_element_type=jnp.float32)           # [Sa, Dh]
    v_a = jnp.dot(aud, wav_ref[0], preferred_element_type=jnp.float32)             # [Sa, Dh]
    qi = _bf16(qk_i)
    qa = _bf16(qk_a)

    # image attends over audio (softmax along the audio axis)
    s_ia = lax.dot_general(qi, qa, (((1,), (1,)), ((), ())),
                           preferred_element_type=jnp.float32)                     # [Si, Sa]
    s_ia = s_ia - jnp.max(s_ia, axis=-1, keepdims=True)
    e_ia = jnp.exp(s_ia)
    p_ia = e_ia * pl.reciprocal(jnp.sum(e_ia, axis=-1, keepdims=True), approx=True)
    att_i = jnp.dot(_bf16(p_ia), _bf16(v_a), preferred_element_type=jnp.float32)   # [Si, Dh]

    # audio attends over image: similarity computed in natural NT form (no transposed-LHS dot)
    s_ai = lax.dot_general(qa, qi, (((1,), (1,)), ((), ())),
                           preferred_element_type=jnp.float32)                     # [Sa, Si]
    s_ai = s_ai - jnp.max(s_ai, axis=-1, keepdims=True)
    e_ai = jnp.exp(s_ai)
    p_ai = e_ai * pl.reciprocal(jnp.sum(e_ai, axis=-1, keepdims=True), approx=True)
    att_a = jnp.dot(_bf16(p_ai), _bf16(v_i), preferred_element_type=jnp.float32)   # [Sa, Dh]

    part_i = jnp.dot(_bf16(att_i), wio_ref[0], preferred_element_type=jnp.float32)  # [Si, Di]
    part_a = jnp.dot(_bf16(att_a), wao_ref[0], preferred_element_type=jnp.float32)  # [Sa, Da]

    @pl.when(h == 0)
    def _():
        io_ref[0] = part_i
        ao_ref[0] = part_a

    @pl.when(h != 0)
    def _():
        io_ref[0] = io_ref[0] + part_i
        ao_ref[0] = ao_ref[0] + part_a

    @pl.when(h == pl.num_programs(1) - 1)
    def _():
        # torch: norm(x + dropout(x)) -> in eval mode this is norm(2*x); reproduced literally.
        zi = 2.0 * (io_ref[0] + bio_ref[...])
        za = 2.0 * (ao_ref[0] + bao_ref[...])
        io_ref[0] = _layernorm(zi, g1_ref[...], be1_ref[...], eps)
        ao_ref[0] = _layernorm(za, g2_ref[...], be2_ref[...], eps)


def pallas_cross_block(image, audio, cp, *, eps=1e-6):
    B, Si, Di = image.shape
    _, Sa, Da = audio.shape
    H, _, Dh = cp["img_qk"]["w"].shape
    scale = 1.0 / math.sqrt(Dh)
    return pl.pallas_call(
        functools.partial(_cross_block_kernel, scale=scale, eps=eps),
        out_shape=(jax.ShapeDtypeStruct((B, Si, Di), jnp.float32),
                   jax.ShapeDtypeStruct((B, Sa, Da), jnp.float32)),
        grid=(B, H),
        in_specs=[pl.BlockSpec((1, Si, Di), lambda b, h: (b, 0, 0)),
                  pl.BlockSpec((1, Sa, Da), lambda b, h: (b, 0, 0)),
                  pl.BlockSpec((1, Di, Dh), lambda b, h: (h, 0, 0)),
                  pl.BlockSpec((1, Di, Dh), lambda b, h: (h, 0, 0)),
                  pl.BlockSpec((1, Da, Dh), lambda b, h: (h, 0, 0)),
                  pl.BlockSpec((1, Da, Dh), lambda b, h: (h, 0, 0)),
                  pl.BlockSpec((1, Dh, Di), lambda b, h: (h, 0, 0)),
                  pl.BlockSpec((1, Di), lambda b, h: (0, 0)),
                  pl.BlockSpec((1, Dh, Da), lambda b, h: (h, 0, 0)),
                  pl.BlockSpec((1, Da), lambda b, h: (0, 0)),
                  pl.BlockSpec((1, Di), lambda b, h: (0, 0)),
                  pl.BlockSpec((1, Di), lambda b, h: (0, 0)),
                  pl.BlockSpec((1, Da), lambda b, h: (0, 0)),
                  pl.BlockSpec((1, Da), lambda b, h: (0, 0))],
        out_specs=(pl.BlockSpec((1, Si, Di), lambda b, h: (b, 0, 0)),
                   pl.BlockSpec((1, Sa, Da), lambda b, h: (b, 0, 0))),
        compiler_params=_cparams("parallel", "arbitrary"),
    )(image, audio,
      cp["img_qk"]["w"], cp["img_v"]["w"], cp["aud_qk"]["w"], cp["aud_v"]["w"],
      cp["to_out"]["w"], cp["to_out"]["b"], cp["ctx_to_out"]["w"], cp["ctx_to_out"]["b"],
      cp["norm1"]["g"].reshape(1, Di), cp["norm1"]["b"].reshape(1, Di),
      cp["norm2"]["g"].reshape(1, Da), cp["norm2"]["b"].reshape(1, Da))


def _head_dual_kernel(img_ref, aud_ref, w2_ref, b2_ref, w1_ref, b1_ref,
                      w3_ref, b3_ref, w4_ref, b4_ref, io_ref, ao_ref):
    """Both output-head MLP chains in one kernel: linear2(image)/linear1(audio) -> shared
    linear3 -> shared linear4.  Intermediates stay in VMEM; shared weights staged once."""
    hi = jnp.dot(_bf16(img_ref[...]), w2_ref[...], preferred_element_type=jnp.float32) + b2_ref[...]
    ha = jnp.dot(_bf16(aud_ref[...]), w1_ref[...], preferred_element_type=jnp.float32) + b1_ref[...]
    hi = jnp.dot(_bf16(hi), w3_ref[...], preferred_element_type=jnp.float32) + b3_ref[...]
    ha = jnp.dot(_bf16(ha), w3_ref[...], preferred_element_type=jnp.float32) + b3_ref[...]
    io_ref[...] = jnp.dot(_bf16(hi), w4_ref[...], preferred_element_type=jnp.float32) + b4_ref[...]
    ao_ref[...] = jnp.dot(_bf16(ha), w4_ref[...], preferred_element_type=jnp.float32) + b4_ref[...]


def pallas_head_dual(image_out, audio_out, p):
    B, Si, Di = image_out.shape
    _, Sa, Da = audio_out.shape
    out3 = p["linear4"]["w"].shape[1]
    img2 = image_out.reshape(-1, Di)
    aud2 = audio_out.reshape(-1, Da)
    # TODO(synk): row-tile this kernel for production-scale B*S (single block is fine here).
    io, ao = pl.pallas_call(
        _head_dual_kernel,
        out_shape=(jax.ShapeDtypeStruct((img2.shape[0], out3), jnp.float32),
                   jax.ShapeDtypeStruct((aud2.shape[0], out3), jnp.float32)),
        compiler_params=_cparams(),
    )(img2, aud2,
      p["linear2"]["w"], p["linear2"]["b"], p["linear1"]["w"], p["linear1"]["b"],
      p["linear3"]["w"], p["linear3"]["b"], p["linear4"]["w"], p["linear4"]["b"])
    return io.reshape(B, Si, out3), ao.reshape(B, Sa, out3)


# ----------------------------- parameter init -----------------------------

def _init_linear(key, in_size, out_size, bias=True):
    kw, kb = jax.random.split(key)
    w = (jax.random.normal(kw, (in_size, out_size), jnp.float32) * 0.02).astype(jnp.bfloat16)
    b = (jax.random.normal(kb, (1, out_size), jnp.float32) * 0.02
         if bias else jnp.zeros((1, out_size), jnp.float32))
    return {"w": w, "b": b}


def _init_head_linear(key, in_size, n_head, d_head, bias=True):
    """nn.Linear(in, n_head*d_head) stored head-major [H, in, d_head] (bf16 weight)."""
    kw, kb = jax.random.split(key)
    w = (jax.random.normal(kw, (n_head, in_size, d_head), jnp.float32) * 0.02).astype(jnp.bfloat16)
    b = (jax.random.normal(kb, (n_head, 1, d_head), jnp.float32) * 0.02
         if bias else jnp.zeros((n_head, 1, d_head), jnp.float32))
    return {"w": w, "b": b}


def _init_merge(key, n_head, d_head, out_size):
    """nn.Linear(n_head*d_head, out) stored as per-head row slices [H, d_head, out]."""
    kw, kb = jax.random.split(key)
    w = (jax.random.normal(kw, (n_head, d_head, out_size), jnp.float32) * 0.02).astype(jnp.bfloat16)
    b = jax.random.normal(kb, (1, out_size), jnp.float32) * 0.02
    return {"w": w, "b": b}


def _init_layernorm(size):
    return {"g": jnp.ones((size,), jnp.float32), "b": jnp.zeros((size,), jnp.float32)}


def _init_sa(key, hidden, ff, n_head):
    d_head = hidden // n_head
    k = jax.random.split(key, 6)
    return {"q": _init_head_linear(k[0], hidden, n_head, d_head),
            "k": _init_head_linear(k[1], hidden, n_head, d_head),
            "v": _init_head_linear(k[2], hidden, n_head, d_head),
            "merge": _init_merge(k[3], n_head, d_head, hidden),
            "fc": _init_linear(k[4], hidden, ff),
            "out": _init_linear(k[5], ff, hidden),
            "norm1": _init_layernorm(hidden),
            "norm2": _init_layernorm(hidden)}


def _init_cross(key, dim_img, dim_aud, heads, dim_head):
    k = jax.random.split(key, 6)
    return {"img_qk": _init_head_linear(k[0], dim_img, heads, dim_head, bias=False),
            "img_v": _init_head_linear(k[1], dim_img, heads, dim_head, bias=False),
            "aud_qk": _init_head_linear(k[2], dim_aud, heads, dim_head, bias=False),
            "aud_v": _init_head_linear(k[3], dim_aud, heads, dim_head, bias=False),
            "to_out": _init_merge(k[4], heads, dim_head, dim_img),
            "ctx_to_out": _init_merge(k[5], heads, dim_head, dim_aud),
            "norm1": _init_layernorm(dim_img),
            "norm2": _init_layernorm(dim_aud)}


def init_sa3(key, *, hidden_size_image, hidden_size_audio, head_dim, n_head,
             n_layers, out_size1, out_size2, out_size3):
    keys = jax.random.split(key, 2 * n_layers + 4)
    dec_list = []
    for i in range(n_layers):
        k1, k2 = jax.random.split(keys[i])
        dec_list.append({"sa": _init_sa(k1, hidden_size_image, head_dim, n_head),
                         "cross": _init_cross(k2, hidden_size_image, hidden_size_audio,
                                              n_head, head_dim)})
    enc_list = [_init_sa(keys[n_layers + i], hidden_size_audio, head_dim, n_head)
                for i in range(n_layers)]
    return {"dec_list": dec_list, "enc_list": enc_list,
            "linear1": _init_linear(keys[2 * n_layers + 0], hidden_size_audio, out_size1),
            "linear2": _init_linear(keys[2 * n_layers + 1], hidden_size_image, out_size1),
            "linear3": _init_linear(keys[2 * n_layers + 2], out_size1, out_size2),
            "linear4": _init_linear(keys[2 * n_layers + 3], out_size2, out_size3)}


# ----------------------------- forward -----------------------------

def sa_fwd(p, y):
    # 1) fused per-head QKV projection + attention + merge + residual + norm1 (one call),
    # 2) FFN + residual + norm2 (one call).
    y1 = pallas_mhsa_block(y, p)
    y2 = pallas_ffn_block(y1, p["fc"]["w"], p["fc"]["b"], p["out"]["w"], p["out"]["b"],
                          p["norm2"]["g"], p["norm2"]["b"])
    return y2


def sa2_fwd(p, image, audio):
    y = sa_fwd(p["sa"], image)
    return pallas_cross_block(y, audio, p["cross"])


def sa3_fwd(p, image, audio):
    # The torch loops re-apply every enc/dec layer to the ORIGINAL inputs and keep only the
    # last layer's output; computing just the last layer of each list gives the identical
    # result while removing (n_layers-1) dead passes.
    y = sa_fwd(p["enc_list"][-1], audio)
    image_out, audio_out = sa2_fwd(p["dec_list"][-1], image, y)
    return pallas_head_dual(image_out, audio_out, p)


# ----------------------------- demo -----------------------------

if __name__ == "__main__":
    # Small, self-consistent hyperparameters (module defaults scaled down).
    B, Si, Sa = 2, 16, 8          # batch, image seq len, audio seq len
    Di, Da = 128, 64              # hidden_size_image, hidden_size_audio
    n_head = 4
    head_dim = 32                 # "head_dim"/"ff_dim" knob of SA3
    n_layers = 2
    out1, out2, out3 = 64, 32, 16

    key = jax.random.PRNGKey(0)
    kp, ki, ka = jax.random.split(key, 3)
    params = init_sa3(kp, hidden_size_image=Di, hidden_size_audio=Da, head_dim=head_dim,
                      n_head=n_head, n_layers=n_layers,
                      out_size1=out1, out_size2=out2, out_size3=out3)
    image = jax.random.normal(ki, (B, Si, Di), jnp.float32)
    audio = jax.random.normal(ka, (B, Sa, Da), jnp.float32)

    fwd = jax.jit(sa3_fwd)
    image_out3, audio_out3 = fwd(params, image, audio)
    jax.block_until_ready((image_out3, audio_out3))

    assert image_out3.shape == (B, Si, out3), image_out3.shape
    assert audio_out3.shape == (B, Sa, out3), audio_out3.shape
    assert bool(jnp.all(jnp.isfinite(image_out3))) and bool(jnp.all(jnp.isfinite(audio_out3)))
    print("KERNEL_OK")
</pallas_src>

<mosaic_0001>
module attributes {stable_mosaic.version = 11 : i64} {
  func.func @_mhsa_block_kernel(%arg0: i32, %arg1: i32, %arg2: memref<1x16x128xf32, #tpu.memory_space<vmem>>, %arg3: memref<1x128x32xbf16, #tpu.memory_space<vmem>>, %arg4: memref<1x1x32xf32, #tpu.memory_space<vmem>>, %arg5: memref<1x128x32xbf16, #tpu.memory_space<vmem>>, %arg6: memref<1x1x32xf32, #tpu.memory_space<vmem>>, %arg7: memref<1x128x32xbf16, #tpu.memory_space<vmem>>, %arg8: memref<1x1x32xf32, #tpu.memory_space<vmem>>, %arg9: memref<1x32x128xbf16, #tpu.memory_space<vmem>>, %arg10: memref<1x128xf32, #tpu.memory_space<vmem>>, %arg11: memref<1x128xf32, #tpu.memory_space<vmem>>, %arg12: memref<1x128xf32, #tpu.memory_space<vmem>>, %arg13: memref<1x16x128xf32, #tpu.memory_space<vmem>>) attributes {dimension_semantics = [#tpu.dimension_semantics<parallel>, #tpu.dimension_semantics<arbitrary>], iteration_bounds = array<i64: 2, 4>, scalar_prefetch = 0 : i64, scratch_operands = 0 : i64, tpu.core_type = #tpu.core_type<tc>, window_params = [{transform_indices = @transform_0, window_bounds = array<i64: 1, 16, 128>}, {transform_indices = @transform_1, window_bounds = array<i64: 1, 128, 32>}, {transform_indices = @transform_2, window_bounds = array<i64: 1, 1, 32>}, {transform_indices = @transform_3, window_bounds = array<i64: 1, 128, 32>}, {transform_indices = @transform_4, window_bounds = array<i64: 1, 1, 32>}, {transform_indices = @transform_5, window_bounds = array<i64: 1, 128, 32>}, {transform_indices = @transform_6, window_bounds = array<i64: 1, 1, 32>}, {transform_indices = @transform_7, window_bounds = array<i64: 1, 32, 128>}, {pipeline_mode = #tpu.pipeline_mode<synchronous>, transform_indices = @transform_8, window_bounds = array<i64: 1, 128>}, {pipeline_mode = #tpu.pipeline_mode<synchronous>, transform_indices = @transform_9, window_bounds = array<i64: 1, 128>}, {pipeline_mode = #tpu.pipeline_mode<synchronous>, transform_indices = @transform_10, window_bounds = array<i64: 1, 128>}, {transform_indices = @transform_11, window_bounds = array<i64: 1, 16, 128>}]} {
    %c0 = arith.constant 0 : index
    %c0_0 = arith.constant 0 : index
    %c0_1 = arith.constant 0 : index
    %0 = vector.load %arg2[%c0, %c0_0, %c0_1] : memref<1x16x128xf32, #tpu.memory_space<vmem>>, vector<1x16x128xf32>
    %1 = vector.shape_cast %0 : vector<1x16x128xf32> to vector<16x128xf32>
    %2 = arith.truncf %1 : vector<16x128xf32> to vector<16x128xbf16>
    %c0_2 = arith.constant 0 : index
    %c0_3 = arith.constant 0 : index
    %c0_4 = arith.constant 0 : index
    %3 = vector.load %arg3[%c0_2, %c0_3, %c0_4] : memref<1x128x32xbf16, #tpu.memory_space<vmem>>, vector<1x128x32xbf16>
    %4 = vector.shape_cast %3 : vector<1x128x32xbf16> to vector<128x32xbf16>
    %cst = arith.constant dense<0.000000e+00> : vector<16x32xf32>
    %5 = tpu.matmul %2, %4, %cst {dimension_numbers = #tpu.dot_dimension_numbers<[1], [0], [0], [1], [0, 0, 1, 1], [], []>} : vector<16x128xbf16>, vector<128x32xbf16>, vector<16x32xf32> -> vector<16x32xf32>
    %c0_5 = arith.constant 0 : index
    %c0_6 = arith.constant 0 : index
    %c0_7 = arith.constant 0 : index
    %6 = vector.load %arg4[%c0_5, %c0_6, %c0_7] : memref<1x1x32xf32, #tpu.memory_space<vmem>>, vector<1x1x32xf32>
    %7 = vector.shape_cast %6 : vector<1x1x32xf32> to vector<1x32xf32>
    %8 = vector.broadcast %7 : vector<1x32xf32> to vector<16x32xf32>
    %9 = arith.addf %5, %8 : vector<16x32xf32>
    %c0_8 = arith.constant 0 : index
    %c0_9 = arith.constant 0 : index
    %c0_10 = arith.constant 0 : index
    %10 = vector.load %arg5[%c0_8, %c0_9, %c0_10] : memref<1x128x32xbf16, #tpu.memory_space<vmem>>, vector<1x128x32xbf16>
    %11 = vector.shape_cast %10 : vector<1x128x32xbf16> to vector<128x32xbf16>
    %cst_11 = arith.constant dense<0.000000e+00> : vector<16x32xf32>
    %12 = tpu.matmul %2, %11, %cst_11 {dimension_numbers = #tpu.dot_dimension_numbers<[1], [0], [0], [1], [0, 0, 1, 1], [], []>} : vector<16x128xbf16>, vector<128x32xbf16>, vector<16x32xf32> -> vector<16x32xf32>
    %c0_12 = arith.constant 0 : index
    %c0_13 = arith.constant 0 : index
    %c0_14 = arith.constant 0 : index
    %13 = vector.load %arg6[%c0_12, %c0_13, %c0_14] : memref<1x1x32xf32, #tpu.memory_space<vmem>>, vector<1x1x32xf32>
    %14 = vector.shape_cast %13 : vector<1x1x32xf32> to vector<1x32xf32>
    %15 = vector.broadcast %14 : vector<1x32xf32> to vector<16x32xf32>
    %16 = arith.addf %12, %15 : vector<16x32xf32>
    %c0_15 = arith.constant 0 : index
    %c0_16 = arith.constant 0 : index
    %c0_17 = arith.constant 0 : index
    %17 = vector.load %arg7[%c0_15, %c0_16, %c0_17] : memref<1x128x32xbf16, #tpu.memory_space<vmem>>, vector<1x128x32xbf16>
    %18 = vector.shape_cast %17 : vector<1x128x32xbf16> to vector<128x32xbf16>
    %cst_18 = arith.constant dense<0.000000e+00> : vector<16x32xf32>
    %19 = tpu.matmul %2, %18, %cst_18 {dimension_numbers = #tpu.dot_dimension_numbers<[1], [0], [0], [1], [0, 0, 1, 1], [], []>} : vector<16x128xbf16>, vector<128x32xbf16>, vector<16x32xf32> -> vector<16x32xf32>
    %c0_19 = arith.constant 0 : index
    %c0_20 = arith.constant 0 : index
    %c0_21 = arith.constant 0 : index
    %20 = vector.load %arg8[%c0_19, %c0_20, %c0_21] : memref<1x1x32xf32, #tpu.memory_space<vmem>>, vector<1x1x32xf32>
    %21 = vector.shape_cast %20 : vector<1x1x32xf32> to vector<1x32xf32>
    %22 = vector.broadcast %21 : vector<1x32xf32> to vector<16x32xf32>
    %23 = arith.addf %19, %22 : vector<16x32xf32>
    %cst_22 = arith.constant 0.176776692 : f32
    %24 = vector.broadcast %cst_22 : f32 to vector<16x32xf32>
    %25 = arith.mulf %9, %24 : vector<16x32xf32>
    %26 = arith.truncf %25 : vector<16x32xf32> to vector<16x32xbf16>
    %27 = arith.truncf %16 : vector<16x32xf32> to vector<16x32xbf16>
    %cst_23 = arith.constant dense<0.000000e+00> : vector<16x16xf32>
    %28 = tpu.matmul %26, %27, %cst_23 {dimension_numbers = #tpu.dot_dimension_numbers<[1], [1], [0], [0], [0, 0, 1, 0], [], []>} : vector<16x32xbf16>, vector<16x32xbf16>, vector<16x16xf32> -> vector<16x16xf32>
    %cst_24 = arith.constant dense<0xFF800000> : vector<16xf32>
    %29 = vector.multi_reduction <maximumf>, %28, %cst_24 [1] : vector<16x16xf32> to vector<16xf32>
    %30 = vector.shape_cast %29 : vector<16xf32> to vector<16x1xf32>
    %31 = vector.broadcast %30 : vector<16x1xf32> to vector<16x16xf32>
    %32 = arith.subf %28, %31 : vector<16x16xf32>
    %33 = math.exp %32 : vector<16x16xf32>
    %cst_25 = arith.constant dense<0.000000e+00> : vector<16xf32>
    %34 = vector.multi_reduction <add>, %33, %cst_25 [1] : vector<16x16xf32> to vector<16xf32>
    %35 = vector.shape_cast %34 : vector<16xf32> to vector<16x1xf32>
    %36 = tpu.reciprocal %35 {approx = true} : vector<16x1xf32> -> vector<16x1xf32>
    %37 = vector.broadcast %36 : vector<16x1xf32> to vector<16x16xf32>
    %38 = arith.mulf %33, %37 : vector<16x16xf32>
    %39 = arith.truncf %38 : vector<16x16xf32> to vector<16x16xbf16>
    %40 = arith.truncf %23 : vector<16x32xf32> to vector<16x32xbf16>
    %cst_26 = arith.constant dense<0.000000e+00> : vector<16x32xf32>
    %41 = tpu.matmul %39, %40, %cst_26 {dimension_numbers = #tpu.dot_dimension_numbers<[1], [0], [0], [1], [0, 0, 1, 1], [], []>} : vector<16x16xbf16>, vector<16x32xbf16>, vector<16x32xf32> -> vector<16x32xf32>
    %42 = arith.truncf %41 : vector<16x32xf32> to vector<16x32xbf16>
    %c0_27 = arith.constant 0 : index
    %c0_28 = arith.constant 0 : index
    %c0_29 = arith.constant 0 : index
    %43 = vector.load %arg9[%c0_27, %c0_28, %c0_29] : memref<1x32x128xbf16, #tpu.memory_space<vmem>>, vector<1x32x128xbf16>
    %44 = vector.shape_cast %43 : vector<1x32x128xbf16> to vector<32x128xbf16>
    %cst_30 = arith.constant dense<0.000000e+00> : vector<16x128xf32>
    %45 = tpu.matmul %42, %44, %cst_30 {dimension_numbers = #tpu.dot_dimension_numbers<[1], [0], [0], [1], [0, 0, 1, 1], [], []>} : vector<16x32xbf16>, vector<32x128xbf16>, vector<16x128xf32> -> vector<16x128xf32>
    %c0_i32 = arith.constant 0 : i32
    %46 = arith.cmpi eq, %arg1, %c0_i32 : i32
    %47 = arith.extui %46 : i1 to i32
    %c0_i32_31 = arith.constant 0 : i32
    %48 = arith.cmpi ne, %47, %c0_i32_31 : i32
    scf.if %48 {
      %c0_35 = arith.constant 0 : index
      %c0_36 = arith.constant 0 : index
      %c0_37 = arith.constant 0 : index
      %55 = vector.load %arg13[%c0_35, %c0_36, %c0_37] : memref<1x16x128xf32, #tpu.memory_space<vmem>>, vector<1x16x128xf32>
      %56 = vector.shape_cast %55 : vector<1x16x128xf32> to vector<16x128xf32>
      %57 = vector.shape_cast %45 : vector<16x128xf32> to vector<1x16x128xf32>
      tpu.vector_store %arg13[%c0_35, %c0_36, %c0_37], %57 {strides = array<i32>} : memref<1x16x128xf32, #tpu.memory_space<vmem>>, vector<1x16x128xf32>,
    } else {
    }
    %c0_i32_32 = arith.constant 0 : i32
    %49 = arith.cmpi ne, %arg1, %c0_i32_32 : i32
    %50 = arith.extui %49 : i1 to i32
    %c0_i32_33 = arith.constant 0 : i32
    %51 = arith.cmpi ne, %50, %c0_i32_33 : i32
    scf.if %51 {
      %c0_35 = arith.constant 0 : index
      %c0_36 = arith.constant 0 : index
      %c0_37 = arith.constant 0 : index
      %55 = vector.load %arg13[%c0_35, %c0_36, %c0_37] : memref<1x16x128xf32, #tpu.memory_space<vmem>>, vector<1x16x128xf32>
      %56 = vector.shape_cast %55 : vector<1x16x128xf32> to vector<16x128xf32>
      %57 = arith.addf %56, %45 : vector<16x128xf32>
      %c0_38 = arith.constant 0 : index
      %c0_39 = arith.constant 0 : index
      %c0_40 = arith.constant 0 : index
      %58 = vector.load %arg13[%c0_38, %c0_39, %c0_40] : memref<1x16x128xf32, #tpu.memory_space<vmem>>, vector<1x16x128xf32>
      %59 = vector.shape_cast %58 : vector<1x16x128xf32> to vector<16x128xf32>
      %60 = vector.shape_cast %57 : vector<16x128xf32> to vector<1x16x128xf32>
      tpu.vector_store %arg13[%c0_38, %c0_39, %c0_40], %60 {strides = array<i32>} : memref<1x16x128xf32, #tpu.memory_space<vmem>>, vector<1x16x128xf32>,
    } else {
    }
    %c3_i32 = arith.constant 3 : i32
    %52 = arith.cmpi eq, %arg1, %c3_i32 : i32
    %53 = arith.extui %52 : i1 to i32
    %c0_i32_34 = arith.constant 0 : i32
    %54 = arith.cmpi ne, %53, %c0_i32_34 : i32
    scf.if %54 {
      %c0_35 = arith.constant 0 : index
      %c0_36 = arith.constant 0 : index
      %c0_37 = arith.constant 0 : index
      %55 = vector.load %arg13[%c0_35, %c0_36, %c0_37] : memref<1x16x128xf32, #tpu.memory_space<vmem>>, vector<1x16x128xf32>
      %56 = vector.shape_cast %55 : vector<1x16x128xf32> to vector<16x128xf32>
      %57 = arith.addf %1, %56 : vector<16x128xf32>
      %c0_38 = arith.constant 0 : index
      %c0_39 = arith.constant 0 : index
      %58 = vector.load %arg10[%c0_38, %c0_39] : memref<1x128xf32, #tpu.memory_space<vmem>>, vector<1x128xf32>
      %59 = vector.broadcast %58 : vector<1x128xf32> to vector<16x128xf32>
      %60 = arith.addf %57, %59 : vector<16x128xf32>
      %c0_40 = arith.constant 0 : index
      %c0_41 = arith.constant 0 : index
      %61 = vector.load %arg11[%c0_40, %c0_41] : memref<1x128xf32, #tpu.memory_space<vmem>>, vector<1x128xf32>
      %c0_42 = arith.constant 0 : index
      %c0_43 = arith.constant 0 : index
      %62 = vector.load %arg12[%c0_42, %c0_43] : memref<1x128xf32, #tpu.memory_space<vmem>>, vector<1x128xf32>
      %cst_44 = arith.constant dense<0.000000e+00> : vector<16xf32>
      %63 = vector.multi_reduction <add>, %60, %cst_44 [1] : vector<16x128xf32> to vector<16xf32>
      %64 = vector.shape_cast %63 : vector<16xf32> to vector<16x1xf32>
      %cst_45 = arith.constant 1.280000e+02 : f32
      %65 = vector.broadcast %cst_45 : f32 to vector<16x1xf32>
      %66 = arith.divf %64, %65 : vector<16x1xf32>
      %67 = vector.broadcast %66 : vector<16x1xf32> to vector<16x128xf32>
      %68 = arith.subf %60, %67 : vector<16x128xf32>
      %69 = arith.mulf %68, %68 : vector<16x128xf32>
      %cst_46 = arith.constant dense<0.000000e+00> : vector<16xf32>
      %70 = vector.multi_reduction <add>, %69, %cst_46 [1] : vector<16x128xf32> to vector<16xf32>
      %71 = vector.shape_cast %70 : vector<16xf32> to vector<16x1xf32>
      %cst_47 = arith.constant 0.00787401571 : f32
      %72 = vector.broadcast %cst_47 : f32 to vector<16x1xf32>
      %73 = arith.mulf %71, %72 : vector<16x1xf32>
      %74 = math.sqrt %73 : vector<16x1xf32>
      %75 = vector.broadcast %61 : vector<1x128xf32> to vector<16x128xf32>
      %76 = arith.mulf %75, %68 : vector<16x128xf32>
      %cst_48 = arith.constant 9.99999997E-7 : f32
      %77 = vector.broadcast %cst_48 : f32 to vector<16x1xf32>
      %78 = arith.addf %74, %77 : vector<16x1xf32>
      %79 = tpu.reciprocal %78 {approx = true} : vector<16x1xf32> -> vector<16x1xf32>
      %80 = vector.broadcast %79 : vector<16x1xf32> to vector<16x128xf32>
      %81 = arith.mulf %76, %80 : vector<16x128xf32>
      %82 = vector.broadcast %62 : vector<1x128xf32> to vector<16x128xf32>
      %83 = arith.addf %81, %82 : vector<16x128xf32>
      %c0_49 = arith.constant 0 : index
      %c0_50 = arith.constant 0 : index
      %c0_51 = arith.constant 0 : index
      %84 = vector.load %arg13[%c0_49, %c0_50, %c0_51] : memref<1x16x128xf32, #tpu.memory_space<vmem>>, vector<1x16x128xf32>
      %85 = vector.shape_cast %84 : vector<1x16x128xf32> to vector<16x128xf32>
      %86 = vector.shape_cast %83 : vector<16x128xf32> to vector<1x16x128xf32>
      tpu.vector_store %arg13[%c0_49, %c0_50, %c0_51], %86 {strides = array<i32>} : memref<1x16x128xf32, #tpu.memory_space<vmem>>, vector<1x16x128xf32>,
    } else {
    }
    return
  }
  func.func @transform_0(%arg0: i32, %arg1: i32) -> (i32, i32, i32) {
    %c0_i32 = arith.constant 0 : i32
    %c0_i32_0 = arith.constant 0 : i32
    %c0_i32_1 = arith.constant 0 : i32
    return %arg0, %c0_i32, %c0_i32_0 : i32, i32, i32
  }
  func.func @transform_1(%arg0: i32, %arg1: i32) -> (i32, i32, i32) {
    %c0_i32 = arith.constant 0 : i32
    %c0_i32_0 = arith.constant 0 : i32
    %c0_i32_1 = arith.constant 0 : i32
    return %arg1, %c0_i32, %c0_i32_0 : i32, i32, i32
  }
  func.func @transform_2(%arg0: i32, %arg1: i32) -> (i32, i32, i32) {
    %c0_i32 = arith.constant 0 : i32
    %c0_i32_0 = arith.constant 0 : i32
    %c0_i32_1 = arith.constant 0 : i32
    return %arg1, %c0_i32, %c0_i32_0 : i32, i32, i32
  }
  func.func @transform_3(%arg0: i32, %arg1: i32) -> (i32, i32, i32) {
    %c0_i32 = arith.constant 0 : i32
    %c0_i32_0 = arith.constant 0 : i32
    %c0_i32_1 = arith.constant 0 : i32
    return %arg1, %c0_i32, %c0_i32_0 : i32, i32, i32
  }
  func.func @transform_4(%arg0: i32, %arg1: i32) -> (i32, i32, i32) {
    %c0_i32 = arith.constant 0 : i32
    %c0_i32_0 = arith.constant 0 : i32
    %c0_i32_1 = arith.constant 0 : i32
    return %arg1, %c0_i32, %c0_i32_0 : i32, i32, i32
  }
  func.func @transform_5(%arg0: i32, %arg1: i32) -> (i32, i32, i32) {
    %c0_i32 = arith.constant 0 : i32
    %c0_i32_0 = arith.constant 0 : i32
    %c0_i32_1 = arith.constant 0 : i32
    return %arg1, %c0_i32, %c0_i32_0 : i32, i32, i32
  }
  func.func @transform_6(%arg0: i32, %arg1: i32) -> (i32, i32, i32) {
    %c0_i32 = arith.constant 0 : i32
    %c0_i32_0 = arith.constant 0 : i32
    %c0_i32_1 = arith.constant 0 : i32
    return %arg1, %c0_i32, %c0_i32_0 : i32, i32, i32
  }
  func.func @transform_7(%arg0: i32, %arg1: i32) -> (i32, i32, i32) {
    %c0_i32 = arith.constant 0 : i32
    %c0_i32_0 = arith.constant 0 : i32
    %c0_i32_1 = arith.constant 0 : i32
    return %arg1, %c0_i32, %c0_i32_0 : i32, i32, i32
  }
  func.func @transform_8(%arg0: i32, %arg1: i32) -> (i32, i32) {
    %c0_i32 = arith.constant 0 : i32
    %c0_i32_0 = arith.constant 0 : i32
    %c0_i32_1 = arith.constant 0 : i32
    return %c0_i32, %c0_i32_0 : i32, i32
  }
  func.func @transform_9(%arg0: i32, %arg1: i32) -> (i32, i32) {
    %c0_i32 = arith.constant 0 : i32
    %c0_i32_0 = arith.constant 0 : i32
    %c0_i32_1 = arith.constant 0 : i32
    return %c0_i32, %c0_i32_0 : i32, i32
  }
  func.func @transform_10(%arg0: i32, %arg1: i32) -> (i32, i32) {
    %c0_i32 = arith.constant 0 : i32
    %c0_i32_0 = arith.constant 0 : i32
    %c0_i32_1 = arith.constant 0 : i32
    return %c0_i32, %c0_i32_0 : i32, i32
  }
  func.func @transform_11(%arg0: i32, %arg1: i32) -> (i32, i32, i32) {
    %c0_i32 = arith.constant 0 : i32
    %c0_i32_0 = arith.constant 0 : i32
    %c0_i32_1 = arith.constant 0 : i32
    return %arg0, %c0_i32, %c0_i32_0 : i32, i32, i32
  }
}

module attributes {stable_mosaic.version = 11 : i64} {
  func.func @_ffn_res_norm_kernel(%arg0: i32, %arg1: memref<32x128xf32, #tpu.memory_space<vmem>>, %arg2: memref<128x32xbf16, #tpu.memory_space<vmem>>, %arg3: memref<1x32xf32, #tpu.memory_space<vmem>>, %arg4: memref<32x128xbf16, #tpu.memory_space<vmem>>, %arg5: memref<1x128xf32, #tpu.memory_space<vmem>>, %arg6: memref<1x128xf32, #tpu.memory_space<vmem>>, %arg7: memref<1x128xf32, #tpu.memory_space<vmem>>, %arg8: memref<32x128xf32, #tpu.memory_space<vmem>>) attributes {dimension_semantics = [#tpu.dimension_semantics<parallel>], iteration_bounds = array<i64: 1>, scalar_prefetch = 0 : i64, scratch_operands = 0 : i64, tpu.core_type = #tpu.core_type<tc>, window_params = [{transform_indices = @transform_0, window_bounds = array<i64: 32, 128>}, {pipeline_mode = #tpu.pipeline_mode<synchronous>, transform_indices = @transform_1, window_bounds = array<i64: 128, 32>}, {pipeline_mode = #tpu.pipeline_mode<synchronous>, transform_indices = @transform_2, window_bounds = array<i64: 1, 32>}, {pipeline_mode = #tpu.pipeline_mode<synchronous>, transform_indices = @transform_3, window_bounds = array<i64: 32, 128>}, {pipeline_mode = #tpu.pipeline_mode<synchronous>, transform_indices = @transform_4, window_bounds = array<i64: 1, 128>}, {pipeline_mode = #tpu.pipeline_mode<synchronous>, transform_indices = @transform_5, window_bounds = array<i64: 1, 128>}, {pipeline_mode = #tpu.pipeline_mode<synchronous>, transform_indices = @transform_6, window_bounds = array<i64: 1, 128>}, {transform_indices = @transform_7, window_bounds = array<i64: 32, 128>}]} {
    %c0 = arith.constant 0 : index
    %c0_0 = arith.constant 0 : index
    %0 = vector.load %arg1[%c0, %c0_0] : memref<32x128xf32, #tpu.memory_space<vmem>>, vector<32x128xf32>
    %1 = arith.truncf %0 : vector<32x128xf32> to vector<32x128xbf16>
    %c0_1 = arith.constant 0 : index
    %c0_2 = arith.constant 0 : index
    %2 = vector.load %arg2[%c0_1, %c0_2] : memref<128x32xbf16, #tpu.memory_space<vmem>>, vector<128x32xbf16>
    %cst = arith.constant dense<0.000000e+00> : vector<32x32xf32>
    %3 = tpu.matmul %1, %2, %cst {dimension_numbers = #tpu.dot_dimension_numbers<[1], [0], [0], [1], [0, 0, 1, 1], [], []>} : vector<32x128xbf16>, vector<128x32xbf16>, vector<32x32xf32> -> vector<32x32xf32>
    %c0_3 = arith.constant 0 : index
    %c0_4 = arith.constant 0 : index
    %4 = vector.load %arg3[%c0_3, %c0_4] : memref<1x32xf32, #tpu.memory_space<vmem>>, vector<1x32xf32>
    %5 = vector.broadcast %4 : vector<1x32xf32> to vector<32x32xf32>
    %6 = arith.addf %3, %5 : vector<32x32xf32>
    %cst_5 = arith.constant 0.000000e+00 : f32
    %7 = vector.broadcast %cst_5 : f32 to vector<32x32xf32>
    %8 = arith.maximumf %6, %7 : vector<32x32xf32>
    %9 = arith.truncf %8 : vector<32x32xf32> to vector<32x32xbf16>
    %c0_6 = arith.constant 0 : index
    %c0_7 = arith.constant 0 : index
    %10 = vector.load %arg4[%c0_6, %c0_7] : memref<32x128xbf16, #tpu.memory_space<vmem>>, vector<32x128xbf16>
    %cst_8 = arith.constant dense<0.000000e+00> : vector<32x128xf32>
    %11 = tpu.matmul %9, %10, %cst_8 {dimension_numbers = #tpu.dot_dimension_numbers<[1], [0], [0], [1], [0, 0, 1, 1], [], []>} : vector<32x32xbf16>, vector<32x128xbf16>, vector<32x128xf32> -> vector<32x128xf32>
    %12 = arith.addf %0, %11 : vector<32x128xf32>
    %c0_9 = arith.constant 0 : index
    %c0_10 = arith.constant 0 : index
    %13 = vector.load %arg5[%c0_9, %c0_10] : memref<1x128xf32, #tpu.memory_space<vmem>>, vector<1x128xf32>
    %14 = vector.broadcast %13 : vector<1x128xf32> to vector<32x128xf32>
    %15 = arith.addf %12, %14 : vector<32x128xf32>
    %c0_11 = arith.constant 0 : index
    %c0_12 = arith.constant 0 : index
    %16 = vector.load %arg6[%c0_11, %c0_12] : memref<1x128xf32, #tpu.memory_space<vmem>>, vector<1x128xf32>
    %c0_13 = arith.constant 0 : index
    %c0_14 = arith.constant 0 : index
    %17 = vector.load %arg7[%c0_13, %c0_14] : memref<1x128xf32, #tpu.memory_space<vmem>>, vector<1x128xf32>
    %cst_15 = arith.constant dense<0.000000e+00> : vector<32xf32>
    %18 = vector.multi_reduction <add>, %15, %cst_15 [1] : vector<32x128xf32> to vector<32xf32>
    %19 = vector.shape_cast %18 : vector<32xf32> to vector<32x1xf32>
    %cst_16 = arith.constant 1.280000e+02 : f32
    %20 = vector.broadcast %cst_16 : f32 to vector<32x1xf32>
    %21 = arith.divf %19, %20 : vector<32x1xf32>
    %22 = vector.broadcast %21 : vector<32x1xf32> to vector<32x128xf32>
    %23 = arith.subf %15, %22 : vector<32x128xf32>
    %24 = arith.mulf %23, %23 : vector<32x128xf32>
    %cst_17 = arith.constant dense<0.000000e+00> : vector<32xf32>
    %25 = vector.multi_reduction <add>, %24, %cst_17 [1] : vector<32x128xf32> to vector<32xf32>
    %26 = vector.shape_cast %25 : vector<32xf32> to vector<32x1xf32>
    %cst_18 = arith.constant 0.00787401571 : f32
    %27 = vector.broadcast %cst_18 : f32 to vector<32x1xf32>
    %28 = arith.mulf %26, %27 : vector<32x1xf32>
    %29 = math.sqrt %28 : vector<32x1xf32>
    %30 = vector.broadcast %16 : vector<1x128xf32> to vector<32x128xf32>
    %31 = arith.mulf %30, %23 : vector<32x128xf32>
    %cst_19 = arith.constant 9.99999997E-7 : f32
    %32 = vector.broadcast %cst_19 : f32 to vector<32x1xf32>
    %33 = arith.addf %29, %32 : vector<32x1xf32>
    %34 = tpu.reciprocal %33 {approx = true} : vector<32x1xf32> -> vector<32x1xf32>
    %35 = vector.broadcast %34 : vector<32x1xf32> to vector<32x128xf32>
    %36 = arith.mulf %31, %35 : vector<32x128xf32>
    %37 = vector.broadcast %17 : vector<1x128xf32> to vector<32x128xf32>
    %38 = arith.addf %36, %37 : vector<32x128xf32>
    %c0_20 = arith.constant 0 : index
    %c0_21 = arith.constant 0 : index
    %39 = vector.load %arg8[%c0_20, %c0_21] : memref<32x128xf32, #tpu.memory_space<vmem>>, vector<32x128xf32>
    tpu.vector_store %arg8[%c0_20, %c0_21], %38 {strides = array<i32>} : memref<32x128xf32, #tpu.memory_space<vmem>>, vector<32x128xf32>,
    return
  }
  func.func @transform_0(%arg0: i32) -> (i32, i32) {
    %c0_i32 = arith.constant 0 : i32
    %c0_i32_0 = arith.constant 0 : i32
    return %arg0, %c0_i32 : i32, i32
  }
  func.func @transform_1(%arg0: i32) -> (i32, i32) {
    %c0_i32 = arith.constant 0 : i32
    %c0_i32_0 = arith.constant 0 : i32
    %c0_i32_1 = arith.constant 0 : i32
    return %c0_i32, %c0_i32_0 : i32, i32
  }
  func.func @transform_2(%arg0: i32) -> (i32, i32) {
    %c0_i32 = arith.constant 0 : i32
    %c0_i32_0 = arith.constant 0 : i32
    %c0_i32_1 = arith.constant 0 : i32
    return %c0_i32, %c0_i32_0 : i32, i32
  }
  func.func @transform_3(%arg0: i32) -> (i32, i32) {
    %c0_i32 = arith.constant 0 : i32
    %c0_i32_0 = arith.constant 0 : i32
    %c0_i32_1 = arith.constant 0 : i32
    return %c0_i32, %c0_i32_0 : i32, i32
  }
  func.func @transform_4(%arg0: i32) -> (i32, i32) {
    %c0_i32 = arith.constant 0 : i32
    %c0_i32_0 = arith.constant 0 : i32
    %c0_i32_1 = arith.constant 0 : i32
    return %c0_i32, %c0_i32_0 : i32, i32
  }
  func.func @transform_5(%arg0: i32) -> (i32, i32) {
    %c0_i32 = arith.constant 0 : i32
    %c0_i32_0 = arith.constant 0 : i32
    %c0_i32_1 = arith.constant 0 : i32
    return %c0_i32, %c0_i32_0 : i32, i32
  }
  func.func @transform_6(%arg0: i32) -> (i32, i32) {
    %c0_i32 = arith.constant 0 : i32
    %c0_i32_0 = arith.constant 0 : i32
    %c0_i32_1 = arith.constant 0 : i32
    return %c0_i32, %c0_i32_0 : i32, i32
  }
  func.func @transform_7(%arg0: i32) -> (i32, i32) {
    %c0_i32 = arith.constant 0 : i32
    %c0_i32_0 = arith.constant 0 : i32
    return %arg0, %c0_i32 : i32, i32
  }
}

module attributes {stable_mosaic.version = 11 : i64} {
  func.func @_mhsa_block_kernel(%arg0: i32, %arg1: i32, %arg2: memref<1x8x64xf32, #tpu.memory_space<vmem>>, %arg3: memref<1x64x16xbf16, #tpu.memory_space<vmem>>, %arg4: memref<1x1x16xf32, #tpu.memory_space<vmem>>, %arg5: memref<1x64x16xbf16, #tpu.memory_space<vmem>>, %arg6: memref<1x1x16xf32, #tpu.memory_space<vmem>>, %arg7: memref<1x64x16xbf16, #tpu.memory_space<vmem>>, %arg8: memref<1x1x16xf32, #tpu.memory_space<vmem>>, %arg9: memref<1x16x64xbf16, #tpu.memory_space<vmem>>, %arg10: memref<1x64xf32, #tpu.memory_space<vmem>>, %arg11: memref<1x64xf32, #tpu.memory_space<vmem>>, %arg12: memref<1x64xf32, #tpu.memory_space<vmem>>, %arg13: memref<1x8x64xf32, #tpu.memory_space<vmem>>) attributes {dimension_semantics = [#tpu.dimension_semantics<parallel>, #tpu.dimension_semantics<arbitrary>], iteration_bounds = array<i64: 2, 4>, scalar_prefetch = 0 : i64, scratch_operands = 0 : i64, tpu.core_type = #tpu.core_type<tc>, window_params = [{transform_indices = @transform_0, window_bounds = array<i64: 1, 8, 64>}, {transform_indices = @transform_1, window_bounds = array<i64: 1, 64, 16>}, {transform_indices = @transform_2, window_bounds = array<i64: 1, 1, 16>}, {transform_indices = @transform_3, window_bounds = array<i64: 1, 64, 16>}, {transform_indices = @transform_4, window_bounds = array<i64: 1, 1, 16>}, {transform_indices = @transform_5, window_bounds = array<i64: 1, 64, 16>}, {transform_indices = @transform_6, window_bounds = array<i64: 1, 1, 16>}, {transform_indices = @transform_7, window_bounds = array<i64: 1, 16, 64>}, {pipeline_mode = #tpu.pipeline_mode<synchronous>, transform_indices = @transform_8, window_bounds = array<i64: 1, 64>}, {pipeline_mode = #tpu.pipeline_mode<synchronous>, transform_indices = @transform_9, window_bounds = array<i64: 1, 64>}, {pipeline_mode = #tpu.pipeline_mode<synchronous>, transform_indices = @transform_10, window_bounds = array<i64: 1, 64>}, {transform_indices = @transform_11, window_bounds = array<i64: 1, 8, 64>}]} {
    %c0 = arith.constant 0 : index
    %c0_0 = arith.constant 0 : index
    %c0_1 = arith.constant 0 : index
    %0 = vector.load %arg2[%c0, %c0_0, %c0_1] : memref<1x8x64xf32, #tpu.memory_space<vmem>>, vector<1x8x64xf32>
    %1 = vector.shape_cast %0 : vector<1x8x64xf32> to vector<8x64xf32>
    %2 = arith.truncf %1 : vector<8x64xf32> to vector<8x64xbf16>
    %c0_2 = arith.constant 0 : index
    %c0_3 = arith.constant 0 : index
    %c0_4 = arith.constant 0 : index
    %3 = vector.load %arg3[%c0_2, %c0_3, %c0_4] : memref<1x64x16xbf16, #tpu.memory_space<vmem>>, vector<1x64x16xbf16>
    %4 = vector.shape_cast %3 : vector<1x64x16xbf16> to vector<64x16xbf16>
    %cst = arith.constant dense<0.000000e+00> : vector<8x16xf32>
    %5 = tpu.matmul %2, %4, %cst {dimension_numbers = #tpu.dot_dimension_numbers<[1], [0], [0], [1], [0, 0, 1, 1], [], []>} : vector<8x64xbf16>, vector<64x16xbf16>, vector<8x16xf32> -> vector<8x16xf32>
    %c0_5 = arith.constant 0 : index
    %c0_6 = arith.constant 0 : index
    %c0_7 = arith.constant 0 : index
    %6 = vector.load %arg4[%c0_5, %c0_6, %c0_7] : memref<1x1x16xf32, #tpu.memory_space<vmem>>, vector<1x1x16xf32>
    %7 = vector.shape_cast %6 : vector<1x1x16xf32> to vector<1x16xf32>
    %8 = vector.broadcast %7 : vector<1x16xf32> to vector<8x16xf32>
    %9 = arith.addf %5, %8 : vector<8x16xf32>
    %c0_8 = arith.constant 0 : index
    %c0_9 = arith.constant 0 : index
    %c0_10 = arith.constant 0 : index
    %10 = vector.load %arg5[%c0_8, %c0_9, %c0_10] : memref<1x64x16xbf16, #tpu.memory_space<vmem>>, vector<1x64x16xbf16>
    %11 = vector.shape_cast %10 : vector<1x64x16xbf16> to vector<64x16xbf16>
    %cst_11 = arith.constant dense<0.000000e+00> : vector<8x16xf32>
    %12 = tpu.matmul %2, %11, %cst_11 {dimension_numbers = #tpu.dot_dimension_numbers<[1], [0], [0], [1], [0, 0, 1, 1], [], []>} : vector<8x64xbf16>, vector<64x16xbf16>, vector<8x16xf32> -> vector<8x16xf32>
    %c0_12 = arith.constant 0 : index
    %c0_13 = arith.constant 0 : index
    %c0_14 = arith.constant 0 : index
    %13 = vector.load %arg6[%c0_12, %c0_13, %c0_14] : memref<1x1x16xf32, #tpu.memory_space<vmem>>, vector<1x1x16xf32>
    %14 = vector.shape_cast %13 : vector<1x1x16xf32> to vector<1x16xf32>
    %15 = vector.broadcast %14 : vector<1x16xf32> to vector<8x16xf32>
    %16 = arith.addf %12, %15 : vector<8x16xf32>
    %c0_15 = arith.constant 0 : index
    %c0_16 = arith.constant 0 : index
    %c0_17 = arith.constant 0 : index
    %17 = vector.load %arg7[%c0_15, %c0_16, %c0_17] : memref<1x64x16xbf16, #tpu.memory_space<vmem>>, vector<1x64x16xbf16>
    %18 = vector.shape_cast %17 : vector<1x64x16xbf16> to vector<64x16xbf16>
    %cst_18 = arith.constant dense<0.000000e+00> : vector<8x16xf32>
    %19 = tpu.matmul %2, %18, %cst_18 {dimension_numbers = #tpu.dot_dimension_numbers<[1], [0], [0], [1], [0, 0, 1, 1], [], []>} : vector<8x64xbf16>, vector<64x16xbf16>, vector<8x16xf32> -> vector<8x16xf32>
    %c0_19 = arith.constant 0 : index
    %c0_20 = arith.constant 0 : index
    %c0_21 = arith.constant 0 : index
    %20 = vector.load %arg8[%c0_19, %c0_20, %c0_21] : memref<1x1x16xf32, #tpu.memory_space<vmem>>, vector<1x1x16xf32>
    %21 = vector.shape_cast %20 : vector<1x1x16xf32> to vector<1x16xf32>
    %22 = vector.broadcast %21 : vector<1x16xf32> to vector<8x16xf32>
    %23 = arith.addf %19, %22 : vector<8x16xf32>
    %cst_22 = arith.constant 2.500000e-01 : f32
    %24 = vector.broadcast %cst_22 : f32 to vector<8x16xf32>
    %25 = arith.mulf %9, %24 : vector<8x16xf32>
    %26 = arith.truncf %25 : vector<8x16xf32> to vector<8x16xbf16>
    %27 = arith.truncf %16 : vector<8x16xf32> to vector<8x16xbf16>
    %cst_23 = arith.constant dense<0.000000e+00> : vector<8x8xf32>
    %28 = tpu.matmul %26, %27, %cst_23 {dimension_numbers = #tpu.dot_dimension_numbers<[1], [1], [0], [0], [0, 0, 1, 0], [], []>} : vector<8x16xbf16>, vector<8x16xbf16>, vector<8x8xf32> -> vector<8x8xf32>
    %cst_24 = arith.constant dense<0xFF800000> : vector<8xf32>
    %29 = vector.multi_reduction <maximumf>, %28, %cst_24 [1] : vector<8x8xf32> to vector<8xf32>
    %30 = vector.shape_cast %29 : vector<8xf32> to vector<8x1xf32>
    %31 = vector.broadcast %30 : vector<8x1xf32> to vector<8x8xf32>
    %32 = arith.subf %28, %31 : vector<8x8xf32>
    %33 = math.exp %32 : vector<8x8xf32>
    %cst_25 = arith.constant dense<0.000000e+00> : vector<8xf32>
    %34 = vector.multi_reduction <add>, %33, %cst_25 [1] : vector<8x8xf32> to vector<8xf32>
    %35 = vector.shape_cast %34 : vector<8xf32> to vector<8x1xf32>
    %36 = tpu.reciprocal %35 {approx = true} : vector<8x1xf32> -> vector<8x1xf32>
    %37 = vector.broadcast %36 : vector<8x1xf32> to vector<8x8xf32>
    %38 = arith.mulf %33, %37 : vector<8x8xf32>
    %39 = arith.truncf %38 : vector<8x8xf32> to vector<8x8xbf16>
    %40 = arith.truncf %23 : vector<8x16xf32> to vector<8x16xbf16>
    %cst_26 = arith.constant dense<0.000000e+00> : vector<8x16xf32>
    %41 = tpu.matmul %39, %40, %cst_26 {dimension_numbers = #tpu.dot_dimension_numbers<[1], [0], [0], [1], [0, 0, 1, 1], [], []>} : vector<8x8xbf16>, vector<8x16xbf16>, vector<8x16xf32> -> vector<8x16xf32>
    %42 = arith.truncf %41 : vector<8x16xf32> to vector<8x16xbf16>
    %c0_27 = arith.constant 0 : index
    %c0_28 = arith.constant 0 : index
    %c0_29 = arith.constant 0 : index
    %43 = vector.load %arg9[%c0_27, %c0_28, %c0_29] : memref<1x16x64xbf16, #tpu.memory_space<vmem>>, vector<1x16x64xbf16>
    %44 = vector.shape_cast %43 : vector<1x16x64xbf16> to vector<16x64xbf16>
    %cst_30 = arith.constant dense<0.000000e+00> : vector<8x64xf32>
    %45 = tpu.matmul %42, %44, %cst_30 {dimension_numbers = #tpu.dot_dimension_numbers<[1], [0], [0], [1], [0, 0, 1, 1], [], []>} : vector<8x16xbf16>, vector<16x64xbf16>, vector<8x64xf32> -> vector<8x64xf32>
    %c0_i32 = arith.constant 0 : i32
    %46 = arith.cmpi eq, %arg1, %c0_i32 : i32
    %47 = arith.extui %46 : i1 to i32
    %c0_i32_31 = arith.constant 0 : i32
    %48 = arith.cmpi ne, %47, %c0_i32_31 : i32
    scf.if %48 {
      %c0_35 = arith.constant 0 : index
      %c0_36 = arith.constant 0 : index
      %c0_37 = arith.constant 0 : index
      %55 = vector.load %arg13[%c0_35, %c0_36, %c0_37] : memref<1x8x64xf32, #tpu.memory_space<vmem>>, vector<1x8x64xf32>
      %56 = vector.shape_cast %55 : vector<1x8x64xf32> to vector<8x64xf32>
      %57 = vector.shape_cast %45 : vector<8x64xf32> to vector<1x8x64xf32>
      tpu.vector_store %arg13[%c0_35, %c0_36, %c0_37], %57 {strides = array<i32>} : memref<1x8x64xf32, #tpu.memory_space<vmem>>, vector<1x8x64xf32>,
    } else {
    }
    %c0_i32_32 = arith.constant 0 : i32
    %49 = arith.cmpi ne, %arg1, %c0_i32_32 : i32
    %50 = arith.extui %49 : i1 to i32
    %c0_i32_33 = arith.constant 0 : i32
    %51 = arith.cmpi ne, %50, %c0_i32_33 : i32
    scf.if %51 {
      %c0_35 = arith.constant 0 : index
      %c0_36 = arith.constant 0 : index
      %c0_37 = arith.constant 0 : index
      %55 = vector.load %arg13[%c0_35, %c0_36, %c0_37] : memref<1x8x64xf32, #tpu.memory_space<vmem>>, vector<1x8x64xf32>
      %56 = vector.shape_cast %55 : vector<1x8x64xf32> to vector<8x64xf32>
      %57 = arith.addf %56, %45 : vector<8x64xf32>
      %c0_38 = arith.constant 0 : index
      %c0_39 = arith.constant 0 : index
      %c0_40 = arith.constant 0 : index
      %58 = vector.load %arg13[%c0_38, %c0_39, %c0_40] : memref<1x8x64xf32, #tpu.memory_space<vmem>>, vector<1x8x64xf32>
      %59 = vector.shape_cast %58 : vector<1x8x64xf32> to vector<8x64xf32>
      %60 = vector.shape_cast %57 : vector<8x64xf32> to vector<1x8x64xf32>
      tpu.vector_store %arg13[%c0_38, %c0_39, %c0_40], %60 {strides = array<i32>} : memref<1x8x64xf32, #tpu.memory_space<vmem>>, vector<1x8x64xf32>,
    } else {
    }
    %c3_i32 = arith.constant 3 : i32
    %52 = arith.cmpi eq, %arg1, %c3_i32 : i32
    %53 = arith.extui %52 : i1 to i32
    %c0_i32_34 = arith.constant 0 : i32
    %54 = arith.cmpi ne, %53, %c0_i32_34 : i32
    scf.if %54 {
      %c0_35 = arith.constant 0 : index
      %c0_36 = arith.constant 0 : index
      %c0_37 = arith.constant 0 : index
      %55 = vector.load %arg13[%c0_35, %c0_36, %c0_37] : memref<1x8x64xf32, #tpu.memory_space<vmem>>, vector<1x8x64xf32>
      %56 = vector.shape_cast %55 : vector<1x8x64xf32> to vector<8x64xf32>
      %57 = arith.addf %1, %56 : vector<8x64xf32>
      %c0_38 = arith.constant 0 : index
      %c0_39 = arith.constant 0 : index
      %58 = vector.load %arg10[%c0_38, %c0_39] : memref<1x64xf32, #tpu.memory_space<vmem>>, vector<1x64xf32>
      %59 = vector.broadcast %58 : vector<1x64xf32> to vector<8x64xf32>
      %60 = arith.addf %57, %59 : vector<8x64xf32>
      %c0_40 = arith.constant 0 : index
      %c0_41 = arith.constant 0 : index
      %61 = vector.load %arg11[%c0_40, %c0_41] : memref<1x64xf32, #tpu.memory_space<vmem>>, vector<1x64xf32>
      %c0_42 = arith.constant 0 : index
      %c0_43 = arith.constant 0 : index
      %62 = vector.load %arg12[%c0_42, %c0_43] : memref<1x64xf32, #tpu.memory_space<vmem>>, vector<1x64xf32>
      %cst_44 = arith.constant dense<0.000000e+00> : vector<8xf32>
      %63 = vector.multi_reduction <add>, %60, %cst_44 [1] : vector<8x64xf32> to vector<8xf32>
      %64 = vector.shape_cast %63 : vector<8xf32> to vector<8x1xf32>
      %cst_45 = arith.constant 6.400000e+01 : f32
      %65 = vector.broadcast %cst_45 : f32 to vector<8x1xf32>
      %66 = arith.divf %64, %65 : vector<8x1xf32>
      %67 = vector.broadcast %66 : vector<8x1xf32> to vector<8x64xf32>
      %68 = arith.subf %60, %67 : vector<8x64xf32>
      %69 = arith.mulf %68, %68 : vector<8x64xf32>
      %cst_46 = arith.constant dense<0.000000e+00> : vector<8xf32>
      %70 = vector.multi_reduction <add>, %69, %cst_46 [1] : vector<8x64xf32> to vector<8xf32>
      %71 = vector.shape_cast %70 : vector<8xf32> to vector<8x1xf32>
      %cst_47 = arith.constant 0.0158730168 : f32
      %72 = vector.broadcast %cst_47 : f32 to vector<8x1xf32>
      %73 = arith.mulf %71, %72 : vector<8x1xf32>
      %74 = math.sqrt %73 : vector<8x1xf32>
      %75 = vector.broadcast %61 : vector<1x64xf32> to vector<8x64xf32>
      %76 = arith.mulf %75, %68 : vector<8x64xf32>
      %cst_48 = arith.constant 9.99999997E-7 : f32
      %77 = vector.broadcast %cst_48 : f32 to vector<8x1xf32>
      %78 = arith.addf %74, %77 : vector<8x1xf32>
      %79 = tpu.reciprocal %78 {approx = true} : vector<8x1xf32> -> vector<8x1xf32>
      %80 = vector.broadcast %79 : vector<8x1xf32> to vector<8x64xf32>
      %81 = arith.mulf %76, %80 : vector<8x64xf32>
      %82 = vector.broadcast %62 : vector<1x64xf32> to vector<8x64xf32>
      %83 = arith.addf %81, %82 : vector<8x64xf32>
      %c0_49 = arith.constant 0 : index
      %c0_50 = arith.constant 0 : index
      %c0_51 = arith.constant 0 : index
      %84 = vector.load %arg13[%c0_49, %c0_50, %c0_51] : memref<1x8x64xf32, #tpu.memory_space<vmem>>, vector<1x8x64xf32>
      %85 = vector.shape_cast %84 : vector<1x8x64xf32> to vector<8x64xf32>
      %86 = vector.shape_cast %83 : vector<8x64xf32> to vector<1x8x64xf32>
      tpu.vector_store %arg13[%c0_49, %c0_50, %c0_51], %86 {strides = array<i32>} : memref<1x8x64xf32, #tpu.memory_space<vmem>>, vector<1x8x64xf32>,
    } else {
    }
    return
  }
  func.func @transform_0(%arg0: i32, %arg1: i32) -> (i32, i32, i32) {
    %c0_i32 = arith.constant 0 : i32
    %c0_i32_0 = arith.constant 0 : i32
    %c0_i32_1 = arith.constant 0 : i32
    return %arg0, %c0_i32, %c0_i32_0 : i32, i32, i32
  }
  func.func @transform_1(%arg0: i32, %arg1: i32) -> (i32, i32, i32) {
    %c0_i32 = arith.constant 0 : i32
    %c0_i32_0 = arith.constant 0 : i32
    %c0_i32_1 = arith.constant 0 : i32
    return %arg1, %c0_i32, %c0_i32_0 : i32, i32, i32
  }
  func.func @transform_2(%arg0: i32, %arg1: i32) -> (i32, i32, i32) {
    %c0_i32 = arith.constant 0 : i32
    %c0_i32_0 = arith.constant 0 : i32
    %c0_i32_1 = arith.constant 0 : i32
    return %arg1, %c0_i32, %c0_i32_0 : i32, i32, i32
  }
  func.func @transform_3(%arg0: i32, %arg1: i32) -> (i32, i32, i32) {
    %c0_i32 = arith.constant 0 : i32
    %c0_i32_0 = arith.constant 0 : i32
    %c0_i32_1 = arith.constant 0 : i32
    return %arg1, %c0_i32, %c0_i32_0 : i32, i32, i32
  }
  func.func @transform_4(%arg0: i32, %arg1: i32) -> (i32, i32, i32) {
    %c0_i32 = arith.constant 0 : i32
    %c0_i32_0 = arith.constant 0 : i32
    %c0_i32_1 = arith.constant 0 : i32
    return %arg1, %c0_i32, %c0_i32_0 : i32, i32, i32
  }
  func.func @transform_5(%arg0: i32, %arg1: i32) -> (i32, i32, i32) {
    %c0_i32 = arith.constant 0 : i32
    %c0_i32_0 = arith.constant 0 : i32
    %c0_i32_1 = arith.constant 0 : i32
    return %arg1, %c0_i32, %c0_i32_0 : i32, i32, i32
  }
  func.func @transform_6(%arg0: i32, %arg1: i32) -> (i32, i32, i32) {
    %c0_i32 = arith.constant 0 : i32
    %c0_i32_0 = arith.constant 0 : i32
    %c0_i32_1 = arith.constant 0 : i32
    return %arg1, %c0_i32, %c0_i32_0 : i32, i32, i32
  }
  func.func @transform_7(%arg0: i32, %arg1: i32) -> (i32, i32, i32) {
    %c0_i32 = arith.constant 0 : i32
    %c0_i32_0 = arith.constant 0 : i32
    %c0_i32_1 = arith.constant 0 : i32
    return %arg1, %c0_i32, %c0_i32_0 : i32, i32, i32
  }
  func.func @transform_8(%arg0: i32, %arg1: i32) -> (i32, i32) {
    %c0_i32 = arith.constant 0 : i32
    %c0_i32_0 = arith.constant 0 : i32
    %c0_i32_1 = arith.constant 0 : i32
    return %c0_i32, %c0_i32_0 : i32, i32
  }
  func.func @transform_9(%arg0: i32, %arg1: i32) -> (i32, i32) {
    %c0_i32 = arith.constant 0 : i32
    %c0_i32_0 = arith.constant 0 : i32
    %c0_i32_1 = arith.constant 0 : i32
    return %c0_i32, %c0_i32_0 : i32, i32
  }
  func.func @transform_10(%arg0: i32, %arg1: i32) -> (i32, i32) {
    %c0_i32 = arith.constant 0 : i32
    %c0_i32_0 = arith.constant 0 : i32
    %c0_i32_1 = arith.constant 0 : i32
    return %c0_i32, %c0_i32_0 : i32, i32
  }
  func.func @transform_11(%arg0: i32, %arg1: i32) -> (i32, i32, i32) {
    %c0_i32 = arith.constant 0 : i32
    %c0_i32_0 = arith.constant 0 : i32
    %c0_i32_1 = arith.constant 0 : i32
    return %arg0, %c0_i32, %c0_i32_0 : i32, i32, i32
  }
}

module attributes {stable_mosaic.version = 11 : i64} {
  func.func @_ffn_res_norm_kernel(%arg0: i32, %arg1: memref<16x64xf32, #tpu.memory_space<vmem>>, %arg2: memref<64x32xbf16, #tpu.memory_space<vmem>>, %arg3: memref<1x32xf32, #tpu.memory_space<vmem>>, %arg4: memref<32x64xbf16, #tpu.memory_space<vmem>>, %arg5: memref<1x64xf32, #tpu.memory_space<vmem>>, %arg6: memref<1x64xf32, #tpu.memory_space<vmem>>, %arg7: memref<1x64xf32, #tpu.memory_space<vmem>>, %arg8: memref<16x64xf32, #tpu.memory_space<vmem>>) attributes {dimension_semantics = [#tpu.dimension_semantics<parallel>], iteration_bounds = array<i64: 1>, scalar_prefetch = 0 : i64, scratch_operands = 0 : i64, tpu.core_type = #tpu.core_type<tc>, window_params = [{transform_indices = @transform_0, window_bounds = array<i64: 16, 64>}, {pipeline_mode = #tpu.pipeline_mode<synchronous>, transform_indices = @transform_1, window_bounds = array<i64: 64, 32>}, {pipeline_mode = #tpu.pipeline_mode<synchronous>, transform_indices = @transform_2, window_bounds = array<i64: 1, 32>}, {pipeline_mode = #tpu.pipeline_mode<synchronous>, transform_indices = @transform_3, window_bounds = array<i64: 32, 64>}, {pipeline_mode = #tpu.pipeline_mode<synchronous>, transform_indices = @transform_4, window_bounds = array<i64: 1, 64>}, {pipeline_mode = #tpu.pipeline_mode<synchronous>, transform_indices = @transform_5, window_bounds = array<i64: 1, 64>}, {pipeline_mode = #tpu.pipeline_mode<synchronous>, transform_indices = @transform_6, window_bounds = array<i64: 1, 64>}, {transform_indices = @transform_7, window_bounds = array<i64: 16, 64>}]} {
    %c0 = arith.constant 0 : index
    %c0_0 = arith.constant 0 : index
    %0 = vector.load %arg1[%c0, %c0_0] : memref<16x64xf32, #tpu.memory_space<vmem>>, vector<16x64xf32>
    %1 = arith.truncf %0 : vector<16x64xf32> to vector<16x64xbf16>
    %c0_1 = arith.constant 0 : index
    %c0_2 = arith.constant 0 : index
    %2 = vector.load %arg2[%c0_1, %c0_2] : memref<64x32xbf16, #tpu.memory_space<vmem>>, vector<64x32xbf16>
    %cst = arith.constant dense<0.000000e+00> : vector<16x32xf32>
    %3 = tpu.matmul %1, %2, %cst {dimension_numbers = #tpu.dot_dimension_numbers<[1], [0], [0], [1], [0, 0, 1, 1], [], []>} : vector<16x64xbf16>, vector<64x32xbf16>, vector<16x32xf32> -> vector<16x32xf32>
    %c0_3 = arith.constant 0 : index
    %c0_4 = arith.constant 0 : index
    %4 = vector.load %arg3[%c0_3, %c0_4] : memref<1x32xf32, #tpu.memory_space<vmem>>, vector<1x32xf32>
    %5 = vector.broadcast %4 : vector<1x32xf32> to vector<16x32xf32>
    %6 = arith.addf %3, %5 : vector<16x32xf32>
    %cst_5 = arith.constant 0.000000e+00 : f32
    %7 = vector.broadcast %cst_5 : f32 to vector<16x32xf32>
    %8 = arith.maximumf %6, %7 : vector<16x32xf32>
    %9 = arith.truncf %8 : vector<16x32xf32> to vector<16x32xbf16>
    %c0_6 = arith.constant 0 : index
    %c0_7 = arith.constant 0 : index
    %10 = vector.load %arg4[%c0_6, %c0_7] : memref<32x64xbf16, #tpu.memory_space<vmem>>, vector<32x64xbf16>
    %cst_8 = arith.constant dense<0.000000e+00> : vector<16x64xf32>
    %11 = tpu.matmul %9, %10, %cst_8 {dimension_numbers = #tpu.dot_dimension_numbers<[1], [0], [0], [1], [0, 0, 1, 1], [], []>} : vector<16x32xbf16>, vector<32x64xbf16>, vector<16x64xf32> -> vector<16x64xf32>
    %12 = arith.addf %0, %11 : vector<16x64xf32>
    %c0_9 = arith.constant 0 : index
    %c0_10 = arith.constant 0 : index
    %13 = vector.load %arg5[%c0_9, %c0_10] : memref<1x64xf32, #tpu.memory_space<vmem>>, vector<1x64xf32>
    %14 = vector.broadcast %13 : vector<1x64xf32> to vector<16x64xf32>
    %15 = arith.addf %12, %14 : vector<16x64xf32>
    %c0_11 = arith.constant 0 : index
    %c0_12 = arith.constant 0 : index
    %16 = vector.load %arg6[%c0_11, %c0_12] : memref<1x64xf32, #tpu.memory_space<vmem>>, vector<1x64xf32>
    %c0_13 = arith.constant 0 : index
    %c0_14 = arith.constant 0 : index
    %17 = vector.load %arg7[%c0_13, %c0_14] : memref<1x64xf32, #tpu.memory_space<vmem>>, vector<1x64xf32>
    %cst_15 = arith.constant dense<0.000000e+00> : vector<16xf32>
    %18 = vector.multi_reduction <add>, %15, %cst_15 [1] : vector<16x64xf32> to vector<16xf32>
    %19 = vector.shape_cast %18 : vector<16xf32> to vector<16x1xf32>
    %cst_16 = arith.constant 6.400000e+01 : f32
    %20 = vector.broadcast %cst_16 : f32 to vector<16x1xf32>
    %21 = arith.divf %19, %20 : vector<16x1xf32>
    %22 = vector.broadcast %21 : vector<16x1xf32> to vector<16x64xf32>
    %23 = arith.subf %15, %22 : vector<16x64xf32>
    %24 = arith.mulf %23, %23 : vector<16x64xf32>
    %cst_17 = arith.constant dense<0.000000e+00> : vector<16xf32>
    %25 = vector.multi_reduction <add>, %24, %cst_17 [1] : vector<16x64xf32> to vector<16xf32>
    %26 = vector.shape_cast %25 : vector<16xf32> to vector<16x1xf32>
    %cst_18 = arith.constant 0.0158730168 : f32
    %27 = vector.broadcast %cst_18 : f32 to vector<16x1xf32>
    %28 = arith.mulf %26, %27 : vector<16x1xf32>
    %29 = math.sqrt %28 : vector<16x1xf32>
    %30 = vector.broadcast %16 : vector<1x64xf32> to vector<16x64xf32>
    %31 = arith.mulf %30, %23 : vector<16x64xf32>
    %cst_19 = arith.constant 9.99999997E-7 : f32
    %32 = vector.broadcast %cst_19 : f32 to vector<16x1xf32>
    %33 = arith.addf %29, %32 : vector<16x1xf32>
    %34 = tpu.reciprocal %33 {approx = true} : vector<16x1xf32> -> vector<16x1xf32>
    %35 = vector.broadcast %34 : vector<16x1xf32> to vector<16x64xf32>
    %36 = arith.mulf %31, %35 : vector<16x64xf32>
    %37 = vector.broadcast %17 : vector<1x64xf32> to vector<16x64xf32>
    %38 = arith.addf %36, %37 : vector<16x64xf32>
    %c0_20 = arith.constant 0 : index
    %c0_21 = arith.constant 0 : index
    %39 = vector.load %arg8[%c0_20, %c0_21] : memref<16x64xf32, #tpu.memory_space<vmem>>, vector<16x64xf32>
    tpu.vector_store %arg8[%c0_20, %c0_21], %38 {strides = array<i32>} : memref<16x64xf32, #tpu.memory_space<vmem>>, vector<16x64xf32>,
    return
  }
  func.func @transform_0(%arg0: i32) -> (i32, i32) {
    %c0_i32 = arith.constant 0 : i32
    %c0_i32_0 = arith.constant 0 : i32
    return %arg0, %c0_i32 : i32, i32
  }
  func.func @transform_1(%arg0: i32) -> (i32, i32) {
    %c0_i32 = arith.constant 0 : i32
    %c0_i32_0 = arith.constant 0 : i32
    %c0_i32_1 = arith.constant 0 : i32
    return %c0_i32, %c0_i32_0 : i32, i32
  }
  func.func @transform_2(%arg0: i32) -> (i32, i32) {
    %c0_i32 = arith.constant 0 : i32
    %c0_i32_0 = arith.constant 0 : i32
    %c0_i32_1 = arith.constant 0 : i32
    return %c0_i32, %c0_i32_0 : i32, i32
  }
  func.func @transform_3(%arg0: i32) -> (i32, i32) {
    %c0_i32 = arith.constant 0 : i32
    %c0_i32_0 = arith.constant 0 : i32
    %c0_i32_1 = arith.constant 0 : i32
    return %c0_i32, %c0_i32_0 : i32, i32
  }
  func.func @transform_4(%arg0: i32) -> (i32, i32) {
    %c0_i32 = arith.constant 0 : i32
    %c0_i32_0 = arith.constant 0 : i32
    %c0_i32_1 = arith.constant 0 : i32
    return %c0_i32, %c0_i32_0 : i32, i32
  }
  func.func @transform_5(%arg0: i32) -> (i32, i32) {
    %c0_i32 = arith.constant 0 : i32
    %c0_i32_0 = arith.constant 0 : i32
    %c0_i32_1 = arith.constant 0 : i32
    return %c0_i32, %c0_i32_0 : i32, i32
  }
  func.func @transform_6(%arg0: i32) -> (i32, i32) {
    %c0_i32 = arith.constant 0 : i32
    %c0_i32_0 = arith.constant 0 : i32
    %c0_i32_1 = arith.constant 0 : i32
    return %c0_i32, %c0_i32_0 : i32, i32
  }
  func.func @transform_7(%arg0: i32) -> (i32, i32) {
    %c0_i32 = arith.constant 0 : i32
    %c0_i32_0 = arith.constant 0 : i32
    return %arg0, %c0_i32 : i32, i32
  }
}

module attributes {stable_mosaic.version = 11 : i64} {
  func.func @_cross_block_kernel(%arg0: i32, %arg1: i32, %arg2: memref<1x16x128xf32, #tpu.memory_space<vmem>>, %arg3: memref<1x8x64xf32, #tpu.memory_space<vmem>>, %arg4: memref<1x128x32xbf16, #tpu.memory_space<vmem>>, %arg5: memref<1x128x32xbf16, #tpu.memory_space<vmem>>, %arg6: memref<1x64x32xbf16, #tpu.memory_space<vmem>>, %arg7: memref<1x64x32xbf16, #tpu.memory_space<vmem>>, %arg8: memref<1x32x128xbf16, #tpu.memory_space<vmem>>, %arg9: memref<1x128xf32, #tpu.memory_space<vmem>>, %arg10: memref<1x32x64xbf16, #tpu.memory_space<vmem>>, %arg11: memref<1x64xf32, #tpu.memory_space<vmem>>, %arg12: memref<1x128xf32, #tpu.memory_space<vmem>>, %arg13: memref<1x128xf32, #tpu.memory_space<vmem>>, %arg14: memref<1x64xf32, #tpu.memory_space<vmem>>, %arg15: memref<1x64xf32, #tpu.memory_space<vmem>>, %arg16: memref<1x16x128xf32, #tpu.memory_space<vmem>>, %arg17: memref<1x8x64xf32, #tpu.memory_space<vmem>>) attributes {dimension_semantics = [#tpu.dimension_semantics<parallel>, #tpu.dimension_semantics<arbitrary>], iteration_bounds = array<i64: 2, 4>, scalar_prefetch = 0 : i64, scratch_operands = 0 : i64, tpu.core_type = #tpu.core_type<tc>, window_params = [{transform_indices = @transform_0, window_bounds = array<i64: 1, 16, 128>}, {transform_indices = @transform_1, window_bounds = array<i64: 1, 8, 64>}, {transform_indices = @transform_2, window_bounds = array<i64: 1, 128, 32>}, {transform_indices = @transform_3, window_bounds = array<i64: 1, 128, 32>}, {transform_indices = @transform_4, window_bounds = array<i64: 1, 64, 32>}, {transform_indices = @transform_5, window_bounds = array<i64: 1, 64, 32>}, {transform_indices = @transform_6, window_bounds = array<i64: 1, 32, 128>}, {pipeline_mode = #tpu.pipeline_mode<synchronous>, transform_indices = @transform_7, window_bounds = array<i64: 1, 128>}, {transform_indices = @transform_8, window_bounds = array<i64: 1, 32, 64>}, {pipeline_mode = #tpu.pipeline_mode<synchronous>, transform_indices = @transform_9, window_bounds = array<i64: 1, 64>}, {pipeline_mode = #tpu.pipeline_mode<synchronous>, transform_indices = @transform_10, window_bounds = array<i64: 1, 128>}, {pipeline_mode = #tpu.pipeline_mode<synchronous>, transform_indices = @transform_11, window_bounds = array<i64: 1, 128>}, {pipeline_mode = #tpu.pipeline_mode<synchronous>, transform_indices = @transform_12, window_bounds = array<i64: 1, 64>}, {pipeline_mode = #tpu.pipeline_mode<synchronous>, transform_indices = @transform_13, window_bounds = array<i64: 1, 64>}, {transform_indices = @transform_14, window_bounds = array<i64: 1, 16, 128>}, {transform_indices = @transform_15, window_bounds = array<i64: 1, 8, 64>}]} {
    %c0 = arith.constant 0 : index
    %c0_0 = arith.constant 0 : index
    %c0_1 = arith.constant 0 : index
    %0 = vector.load %arg2[%c0, %c0_0, %c0_1] : memref<1x16x128xf32, #tpu.memory_space<vmem>>, vector<1x16x128xf32>
    %1 = vector.shape_cast %0 : vector<1x16x128xf32> to vector<16x128xf32>
    %2 = arith.truncf %1 : vector<16x128xf32> to vector<16x128xbf16>
    %c0_2 = arith.constant 0 : index
    %c0_3 = arith.constant 0 : index
    %c0_4 = arith.constant 0 : index
    %3 = vector.load %arg3[%c0_2, %c0_3, %c0_4] : memref<1x8x64xf32, #tpu.memory_space<vmem>>, vector<1x8x64xf32>
    %4 = vector.shape_cast %3 : vector<1x8x64xf32> to vector<8x64xf32>
    %5 = arith.truncf %4 : vector<8x64xf32> to vector<8x64xbf16>
    %c0_5 = arith.constant 0 : index
    %c0_6 = arith.constant 0 : index
    %c0_7 = arith.constant 0 : index
    %6 = vector.load %arg4[%c0_5, %c0_6, %c0_7] : memref<1x128x32xbf16, #tpu.memory_space<vmem>>, vector<1x128x32xbf16>
    %7 = vector.shape_cast %6 : vector<1x128x32xbf16> to vector<128x32xbf16>
    %cst = arith.constant dense<0.000000e+00> : vector<16x32xf32>
    %8 = tpu.matmul %2, %7, %cst {dimension_numbers = #tpu.dot_dimension_numbers<[1], [0], [0], [1], [0, 0, 1, 1], [], []>} : vector<16x128xbf16>, vector<128x32xbf16>, vector<16x32xf32> -> vector<16x32xf32>
    %cst_8 = arith.constant 0.176776692 : f32
    %9 = vector.broadcast %cst_8 : f32 to vector<16x32xf32>
    %10 = arith.mulf %8, %9 : vector<16x32xf32>
    %c0_9 = arith.constant 0 : index
    %c0_10 = arith.constant 0 : index
    %c0_11 = arith.constant 0 : index
    %11 = vector.load %arg5[%c0_9, %c0_10, %c0_11] : memref<1x128x32xbf16, #tpu.memory_space<vmem>>, vector<1x128x32xbf16>
    %12 = vector.shape_cast %11 : vector<1x128x32xbf16> to vector<128x32xbf16>
    %cst_12 = arith.constant dense<0.000000e+00> : vector<16x32xf32>
    %13 = tpu.matmul %2, %12, %cst_12 {dimension_numbers = #tpu.dot_dimension_numbers<[1], [0], [0], [1], [0, 0, 1, 1], [], []>} : vector<16x128xbf16>, vector<128x32xbf16>, vector<16x32xf32> -> vector<16x32xf32>
    %c0_13 = arith.constant 0 : index
    %c0_14 = arith.constant 0 : index
    %c0_15 = arith.constant 0 : index
    %14 = vector.load %arg6[%c0_13, %c0_14, %c0_15] : memref<1x64x32xbf16, #tpu.memory_space<vmem>>, vector<1x64x32xbf16>
    %15 = vector.shape_cast %14 : vector<1x64x32xbf16> to vector<64x32xbf16>
    %cst_16 = arith.constant dense<0.000000e+00> : vector<8x32xf32>
    %16 = tpu.matmul %5, %15, %cst_16 {dimension_numbers = #tpu.dot_dimension_numbers<[1], [0], [0], [1], [0, 0, 1, 1], [], []>} : vector<8x64xbf16>, vector<64x32xbf16>, vector<8x32xf32> -> vector<8x32xf32>
    %c0_17 = arith.constant 0 : index
    %c0_18 = arith.constant 0 : index
    %c0_19 = arith.constant 0 : index
    %17 = vector.load %arg7[%c0_17, %c0_18, %c0_19] : memref<1x64x32xbf16, #tpu.memory_space<vmem>>, vector<1x64x32xbf16>
    %18 = vector.shape_cast %17 : vector<1x64x32xbf16> to vector<64x32xbf16>
    %cst_20 = arith.constant dense<0.000000e+00> : vector<8x32xf32>
    %19 = tpu.matmul %5, %18, %cst_20 {dimension_numbers = #tpu.dot_dimension_numbers<[1], [0], [0], [1], [0, 0, 1, 1], [], []>} : vector<8x64xbf16>, vector<64x32xbf16>, vector<8x32xf32> -> vector<8x32xf32>
    %20 = arith.truncf %10 : vector<16x32xf32> to vector<16x32xbf16>
    %21 = arith.truncf %16 : vector<8x32xf32> to vector<8x32xbf16>
    %cst_21 = arith.constant dense<0.000000e+00> : vector<16x8xf32>
    %22 = tpu.matmul %20, %21, %cst_21 {dimension_numbers = #tpu.dot_dimension_numbers<[1], [1], [0], [0], [0, 0, 1, 0], [], []>} : vector<16x32xbf16>, vector<8x32xbf16>, vector<16x8xf32> -> vector<16x8xf32>
    %cst_22 = arith.constant dense<0xFF800000> : vector<16xf32>
    %23 = vector.multi_reduction <maximumf>, %22, %cst_22 [1] : vector<16x8xf32> to vector<16xf32>
    %24 = vector.shape_cast %23 : vector<16xf32> to vector<16x1xf32>
    %25 = vector.broadcast %24 : vector<16x1xf32> to vector<16x8xf32>
    %26 = arith.subf %22, %25 : vector<16x8xf32>
    %27 = math.exp %26 : vector<16x8xf32>
    %cst_23 = arith.constant dense<0.000000e+00> : vector<16xf32>
    %28 = vector.multi_reduction <add>, %27, %cst_23 [1] : vector<16x8xf32> to vector<16xf32>
    %29 = vector.shape_cast %28 : vector<16xf32> to vector<16x1xf32>
    %30 = tpu.reciprocal %29 {approx = true} : vector<16x1xf32> -> vector<16x1xf32>
    %31 = vector.broadcast %30 : vector<16x1xf32> to vector<16x8xf32>
    %32 = arith.mulf %27, %31 : vector<16x8xf32>
    %33 = arith.truncf %32 : vector<16x8xf32> to vector<16x8xbf16>
    %34 = arith.truncf %19 : vector<8x32xf32> to vector<8x32xbf16>
    %cst_24 = arith.constant dense<0.000000e+00> : vector<16x32xf32>
    %35 = tpu.matmul %33, %34, %cst_24 {dimension_numbers = #tpu.dot_dimension_numbers<[1], [0], [0], [1], [0, 0, 1, 1], [], []>} : vector<16x8xbf16>, vector<8x32xbf16>, vector<16x32xf32> -> vector<16x32xf32>
    %cst_25 = arith.constant dense<0.000000e+00> : vector<8x16xf32>
    %36 = tpu.matmul %21, %20, %cst_25 {dimension_numbers = #tpu.dot_dimension_numbers<[1], [1], [0], [0], [0, 0, 1, 0], [], []>} : vector<8x32xbf16>, vector<16x32xbf16>, vector<8x16xf32> -> vector<8x16xf32>
    %cst_26 = arith.constant dense<0xFF800000> : vector<8xf32>
    %37 = vector.multi_reduction <maximumf>, %36, %cst_26 [1] : vector<8x16xf32> to vector<8xf32>
    %38 = vector.shape_cast %37 : vector<8xf32> to vector<8x1xf32>
    %39 = vector.broadcast %38 : vector<8x1xf32> to vector<8x16xf32>
    %40 = arith.subf %36, %39 : vector<8x16xf32>
    %41 = math.exp %40 : vector<8x16xf32>
    %cst_27 = arith.constant dense<0.000000e+00> : vector<8xf32>
    %42 = vector.multi_reduction <add>, %41, %cst_27 [1] : vector<8x16xf32> to vector<8xf32>
    %43 = vector.shape_cast %42 : vector<8xf32> to vector<8x1xf32>
    %44 = tpu.reciprocal %43 {approx = true} : vector<8x1xf32> -> vector<8x1xf32>
    %45 = vector.broadcast %44 : vector<8x1xf32> to vector<8x16xf32>
    %46 = arith.mulf %41, %45 : vector<8x16xf32>
    %47 = arith.truncf %46 : vector<8x16xf32> to vector<8x16xbf16>
    %48 = arith.truncf %13 : vector<16x32xf32> to vector<16x32xbf16>
    %cst_28 = arith.constant dense<0.000000e+00> : vector<8x32xf32>
    %49 = tpu.matmul %47, %48, %cst_28 {dimension_numbers = #tpu.dot_dimension_numbers<[1], [0], [0], [1], [0, 0, 1, 1], [], []>} : vector<8x16xbf16>, vector<16x32xbf16>, vector<8x32xf32> -> vector<8x32xf32>
    %50 = arith.truncf %35 : vector<16x32xf32> to vector<16x32xbf16>
    %c0_29 = arith.constant 0 : index
    %c0_30 = arith.constant 0 : index
    %c0_31 = arith.constant 0 : index
    %51 = vector.load %arg8[%c0_29, %c0_30, %c0_31] : memref<1x32x128xbf16, #tpu.memory_space<vmem>>, vector<1x32x128xbf16>
    %52 = vector.shape_cast %51 : vector<1x32x128xbf16> to vector<32x128xbf16>
    %cst_32 = arith.constant dense<0.000000e+00> : vector<16x128xf32>
    %53 = tpu.matmul %50, %52, %cst_32 {dimension_numbers = #tpu.dot_dimension_numbers<[1], [0], [0], [1], [0, 0, 1, 1], [], []>} : vector<16x32xbf16>, vector<32x128xbf16>, vector<16x128xf32> -> vector<16x128xf32>
    %54 = arith.truncf %49 : vector<8x32xf32> to vector<8x32xbf16>
    %c0_33 = arith.constant 0 : index
    %c0_34 = arith.constant 0 : index
    %c0_35 = arith.constant 0 : index
    %55 = vector.load %arg10[%c0_33, %c0_34, %c0_35] : memref<1x32x64xbf16, #tpu.memory_space<vmem>>, vector<1x32x64xbf16>
    %56 = vector.shape_cast %55 : vector<1x32x64xbf16> to vector<32x64xbf16>
    %cst_36 = arith.constant dense<0.000000e+00> : vector<8x64xf32>
    %57 = tpu.matmul %54, %56, %cst_36 {dimension_numbers = #tpu.dot_dimension_numbers<[1], [0], [0], [1], [0, 0, 1, 1], [], []>} : vector<8x32xbf16>, vector<32x64xbf16>, vector<8x64xf32> -> vector<8x64xf32>
    %c0_i32 = arith.constant 0 : i32
    %58 = arith.cmpi eq, %arg1, %c0_i32 : i32
    %59 = arith.extui %58 : i1 to i32
    %c0_i32_37 = arith.constant 0 : i32
    %60 = arith.cmpi ne, %59, %c0_i32_37 : i32
    scf.if %60 {
      %c0_41 = arith.constant 0 : index
      %c0_42 = arith.constant 0 : index
      %c0_43 = arith.constant 0 : index
      %67 = vector.load %arg16[%c0_41, %c0_42, %c0_43] : memref<1x16x128xf32, #tpu.memory_space<vmem>>, vector<1x16x128xf32>
      %68 = vector.shape_cast %67 : vector<1x16x128xf32> to vector<16x128xf32>
      %69 = vector.shape_cast %53 : vector<16x128xf32> to vector<1x16x128xf32>
      tpu.vector_store %arg16[%c0_41, %c0_42, %c0_43], %69 {strides = array<i32>} : memref<1x16x128xf32, #tpu.memory_space<vmem>>, vector<1x16x128xf32>,
      %c0_44 = arith.constant 0 : index
      %c0_45 = arith.constant 0 : index
      %c0_46 = arith.constant 0 : index
      %70 = vector.load %arg17[%c0_44, %c0_45, %c0_46] : memref<1x8x64xf32, #tpu.memory_space<vmem>>, vector<1x8x64xf32>
      %71 = vector.shape_cast %70 : vector<1x8x64xf32> to vector<8x64xf32>
      %72 = vector.shape_cast %57 : vector<8x64xf32> to vector<1x8x64xf32>
      tpu.vector_store %arg17[%c0_44, %c0_45, %c0_46], %72 {strides = array<i32>} : memref<1x8x64xf32, #tpu.memory_space<vmem>>, vector<1x8x64xf32>,
    } else {
    }
    %c0_i32_38 = arith.constant 0 : i32
    %61 = arith.cmpi ne, %arg1, %c0_i32_38 : i32
    %62 = arith.extui %61 : i1 to i32
    %c0_i32_39 = arith.constant 0 : i32
    %63 = arith.cmpi ne, %62, %c0_i32_39 : i32
    scf.if %63 {
      %c0_41 = arith.constant 0 : index
      %c0_42 = arith.constant 0 : index
      %c0_43 = arith.constant 0 : index
      %67 = vector.load %arg16[%c0_41, %c0_42, %c0_43] : memref<1x16x128xf32, #tpu.memory_space<vmem>>, vector<1x16x128xf32>
      %68 = vector.shape_cast %67 : vector<1x16x128xf32> to vector<16x128xf32>
      %69 = arith.addf %68, %53 : vector<16x128xf32>
      %c0_44 = arith.constant 0 : index
      %c0_45 = arith.constant 0 : index
      %c0_46 = arith.constant 0 : index
      %70 = vector.load %arg16[%c0_44, %c0_45, %c0_46] : memref<1x16x128xf32, #tpu.memory_space<vmem>>, vector<1x16x128xf32>
      %71 = vector.shape_cast %70 : vector<1x16x128xf32> to vector<16x128xf32>
      %72 = vector.shape_cast %69 : vector<16x128xf32> to vector<1x16x128xf32>
      tpu.vector_store %arg16[%c0_44, %c0_45, %c0_46], %72 {strides = array<i32>} : memref<1x16x128xf32, #tpu.memory_space<vmem>>, vector<1x16x128xf32>,
      %c0_47 = arith.constant 0 : index
      %c0_48 = arith.constant 0 : index
      %c0_49 = arith.constant 0 : index
      %73 = vector.load %arg17[%c0_47, %c0_48, %c0_49] : memref<1x8x64xf32, #tpu.memory_space<vmem>>, vector<1x8x64xf32>
      %74 = vector.shape_cast %73 : vector<1x8x64xf32> to vector<8x64xf32>
      %75 = arith.addf %74, %57 : vector<8x64xf32>
      %c0_50 = arith.constant 0 : index
      %c0_51 = arith.constant 0 : index
      %c0_52 = arith.constant 0 : index
      %76 = vector.load %arg17[%c0_50, %c0_51, %c0_52] : memref<1x8x64xf32, #tpu.memory_space<vmem>>, vector<1x8x64xf32>
      %77 = vector.shape_cast %76 : vector<1x8x64xf32> to vector<8x64xf32>
      %78 = vector.shape_cast %75 : vector<8x64xf32> to vector<1x8x64xf32>
      tpu.vector_store %arg17[%c0_50, %c0_51, %c0_52], %78 {strides = array<i32>} : memref<1x8x64xf32, #tpu.memory_space<vmem>>, vector<1x8x64xf32>,
    } else {
    }
    %c3_i32 = arith.constant 3 : i32
    %64 = arith.cmpi eq, %arg1, %c3_i32 : i32
    %65 = arith.extui %64 : i1 to i32
    %c0_i32_40 = arith.constant 0 : i32
    %66 = arith.cmpi ne, %65, %c0_i32_40 : i32
    scf.if %66 {
      %c0_41 = arith.constant 0 : index
      %c0_42 = arith.constant 0 : index
      %c0_43 = arith.constant 0 : index
      %67 = vector.load %arg16[%c0_41, %c0_42, %c0_43] : memref<1x16x128xf32, #tpu.memory_space<vmem>>, vector<1x16x128xf32>
      %68 = vector.shape_cast %67 : vector<1x16x128xf32> to vector<16x128xf32>
      %c0_44 = arith.constant 0 : index
      %c0_45 = arith.constant 0 : index
      %69 = vector.load %arg9[%c0_44, %c0_45] : memref<1x128xf32, #tpu.memory_space<vmem>>, vector<1x128xf32>
      %70 = vector.broadcast %69 : vector<1x128xf32> to vector<16x128xf32>
      %71 = arith.addf %68, %70 : vector<16x128xf32>
      %cst_46 = arith.constant 2.000000e+00 : f32
      %72 = vector.broadcast %cst_46 : f32 to vector<16x128xf32>
      %73 = arith.mulf %72, %71 : vector<16x128xf32>
      %c0_47 = arith.constant 0 : index
      %c0_48 = arith.constant 0 : index
      %c0_49 = arith.constant 0 : index
      %74 = vector.load %arg17[%c0_47, %c0_48, %c0_49] : memref<1x8x64xf32, #tpu.memory_space<vmem>>, vector<1x8x64xf32>
      %75 = vector.shape_cast %74 : vector<1x8x64xf32> to vector<8x64xf32>
      %c0_50 = arith.constant 0 : index
      %c0_51 = arith.constant 0 : index
      %76 = vector.load %arg11[%c0_50, %c0_51] : memref<1x64xf32, #tpu.memory_space<vmem>>, vector<1x64xf32>
      %77 = vector.broadcast %76 : vector<1x64xf32> to vector<8x64xf32>
      %78 = arith.addf %75, %77 : vector<8x64xf32>
      %cst_52 = arith.constant 2.000000e+00 : f32
      %79 = vector.broadcast %cst_52 : f32 to vector<8x64xf32>
      %80 = arith.mulf %79, %78 : vector<8x64xf32>
      %c0_53 = arith.constant 0 : index
      %c0_54 = arith.constant 0 : index
      %81 = vector.load %arg12[%c0_53, %c0_54] : memref<1x128xf32, #tpu.memory_space<vmem>>, vector<1x128xf32>
      %c0_55 = arith.constant 0 : index
      %c0_56 = arith.constant 0 : index
      %82 = vector.load %arg13[%c0_55, %c0_56] : memref<1x128xf32, #tpu.memory_space<vmem>>, vector<1x128xf32>
      %cst_57 = arith.constant dense<0.000000e+00> : vector<16xf32>
      %83 = vector.multi_reduction <add>, %73, %cst_57 [1] : vector<16x128xf32> to vector<16xf32>
      %84 = vector.shape_cast %83 : vector<16xf32> to vector<16x1xf32>
      %cst_58 = arith.constant 1.280000e+02 : f32
      %85 = vector.broadcast %cst_58 : f32 to vector<16x1xf32>
      %86 = arith.divf %84, %85 : vector<16x1xf32>
      %87 = vector.broadcast %86 : vector<16x1xf32> to vector<16x128xf32>
      %88 = arith.subf %73, %87 : vector<16x128xf32>
      %89 = arith.mulf %88, %88 : vector<16x128xf32>
      %cst_59 = arith.constant dense<0.000000e+00> : vector<16xf32>
      %90 = vector.multi_reduction <add>, %89, %cst_59 [1] : vector<16x128xf32> to vector<16xf32>
      %91 = vector.shape_cast %90 : vector<16xf32> to vector<16x1xf32>
      %cst_60 = arith.constant 0.00787401571 : f32
      %92 = vector.broadcast %cst_60 : f32 to vector<16x1xf32>
      %93 = arith.mulf %91, %92 : vector<16x1xf32>
      %94 = math.sqrt %93 : vector<16x1xf32>
      %95 = vector.broadcast %81 : vector<1x128xf32> to vector<16x128xf32>
      %96 = arith.mulf %95, %88 : vector<16x128xf32>
      %cst_61 = arith.constant 9.99999997E-7 : f32
      %97 = vector.broadcast %cst_61 : f32 to vector<16x1xf32>
      %98 = arith.addf %94, %97 : vector<16x1xf32>
      %99 = tpu.reciprocal %98 {approx = true} : vector<16x1xf32> -> vector<16x1xf32>
      %100 = vector.broadcast %99 : vector<16x1xf32> to vector<16x128xf32>
      %101 = arith.mulf %96, %100 : vector<16x128xf32>
      %102 = vector.broadcast %82 : vector<1x128xf32> to vector<16x128xf32>
      %103 = arith.addf %101, %102 : vector<16x128xf32>
      %c0_62 = arith.constant 0 : index
      %c0_63 = arith.constant 0 : index
      %c0_64 = arith.constant 0 : index
      %104 = vector.load %arg16[%c0_62, %c0_63, %c0_64] : memref<1x16x128xf32, #tpu.memory_space<vmem>>, vector<1x16x128xf32>
      %105 = vector.shape_cast %104 : vector<1x16x128xf32> to vector<16x128xf32>
      %106 = vector.shape_cast %103 : vector<16x128xf32> to vector<1x16x128xf32>
      tpu.vector_store %arg16[%c0_62, %c0_63, %c0_64], %106 {strides = array<i32>} : memref<1x16x128xf32, #tpu.memory_space<vmem>>, vector<1x16x128xf32>,
      %c0_65 = arith.constant 0 : index
      %c0_66 = arith.constant 0 : index
      %107 = vector.load %arg14[%c0_65, %c0_66] : memref<1x64xf32, #tpu.memory_space<vmem>>, vector<1x64xf32>
      %c0_67 = arith.constant 0 : index
      %c0_68 = arith.constant 0 : index
      %108 = vector.load %arg15[%c0_67, %c0_68] : memref<1x64xf32, #tpu.memory_space<vmem>>, vector<1x64xf32>
      %cst_69 = arith.constant dense<0.000000e+00> : vector<8xf32>
      %109 = vector.multi_reduction <add>, %80, %cst_69 [1] : vector<8x64xf32> to vector<8xf32>
      %110 = vector.shape_cast %109 : vector<8xf32> to vector<8x1xf32>
      %cst_70 = arith.constant 6.400000e+01 : f32
      %111 = vector.broadcast %cst_70 : f32 to vector<8x1xf32>
      %112 = arith.divf %110, %111 : vector<8x1xf32>
      %113 = vector.broadcast %112 : vector<8x1xf32> to vector<8x64xf32>
      %114 = arith.subf %80, %113 : vector<8x64xf32>
      %115 = arith.mulf %114, %114 : vector<8x64xf32>
      %cst_71 = arith.constant dense<0.000000e+00> : vector<8xf32>
      %116 = vector.multi_reduction <add>, %115, %cst_71 [1] : vector<8x64xf32> to vector<8xf32>
      %117 = vector.shape_cast %116 : vector<8xf32> to vector<8x1xf32>
      %cst_72 = arith.constant 0.0158730168 : f32
      %118 = vector.broadcast %cst_72 : f32 to vector<8x1xf32>
      %119 = arith.mulf %117, %118 : vector<8x1xf32>
      %120 = math.sqrt %119 : vector<8x1xf32>
      %121 = vector.broadcast %107 : vector<1x64xf32> to vector<8x64xf32>
      %122 = arith.mulf %121, %114 : vector<8x64xf32>
      %cst_73 = arith.constant 9.99999997E-7 : f32
      %123 = vector.broadcast %cst_73 : f32 to vector<8x1xf32>
      %124 = arith.addf %120, %123 : vector<8x1xf32>
      %125 = tpu.reciprocal %124 {approx = true} : vector<8x1xf32> -> vector<8x1xf32>
      %126 = vector.broadcast %125 : vector<8x1xf32> to vector<8x64xf32>
      %127 = arith.mulf %122, %126 : vector<8x64xf32>
      %128 = vector.broadcast %108 : vector<1x64xf32> to vector<8x64xf32>
      %129 = arith.addf %127, %128 : vector<8x64xf32>
      %c0_74 = arith.constant 0 : index
      %c0_75 = arith.constant 0 : index
      %c0_76 = arith.constant 0 : index
      %130 = vector.load %arg17[%c0_74, %c0_75, %c0_76] : memref<1x8x64xf32, #tpu.memory_space<vmem>>, vector<1x8x64xf32>
      %131 = vector.shape_cast %130 : vector<1x8x64xf32> to vector<8x64xf32>
      %132 = vector.shape_cast %129 : vector<8x64xf32> to vector<1x8x64xf32>
      tpu.vector_store %arg17[%c0_74, %c0_75, %c0_76], %132 {strides = array<i32>} : memref<1x8x64xf32, #tpu.memory_space<vmem>>, vector<1x8x64xf32>,
    } else {
    }
    return
  }
  func.func @transform_0(%arg0: i32, %arg1: i32) -> (i32, i32, i32) {
    %c0_i32 = arith.constant 0 : i32
    %c0_i32_0 = arith.constant 0 : i32
    %c0_i32_1 = arith.constant 0 : i32
    return %arg0, %c0_i32, %c0_i32_0 : i32, i32, i32
  }
  func.func @transform_1(%arg0: i32, %arg1: i32) -> (i32, i32, i32) {
    %c0_i32 = arith.constant 0 : i32
    %c0_i32_0 = arith.constant 0 : i32
    %c0_i32_1 = arith.constant 0 : i32
    return %arg0, %c0_i32, %c0_i32_0 : i32, i32, i32
  }
  func.func @transform_2(%arg0: i32, %arg1: i32) -> (i32, i32, i32) {
    %c0_i32 = arith.constant 0 : i32
    %c0_i32_0 = arith.constant 0 : i32
    %c0_i32_1 = arith.constant 0 : i32
    return %arg1, %c0_i32, %c0_i32_0 : i32, i32, i32
  }
  func.func @transform_3(%arg0: i32, %arg1: i32) -> (i32, i32, i32) {
    %c0_i32 = arith.constant 0 : i32
    %c0_i32_0 = arith.constant 0 : i32
    %c0_i32_1 = arith.constant 0 : i32
    return %arg1, %c0_i32, %c0_i32_0 : i32, i32, i32
  }
  func.func @transform_4(%arg0: i32, %arg1: i32) -> (i32, i32, i32) {
    %c0_i32 = arith.constant 0 : i32
    %c0_i32_0 = arith.constant 0 : i32
    %c0_i32_1 = arith.constant 0 : i32
    return %arg1, %c0_i32, %c0_i32_0 : i32, i32, i32
  }
  func.func @transform_5(%arg0: i32, %arg1: i32) -> (i32, i32, i32) {
    %c0_i32 = arith.constant 0 : i32
    %c0_i32_0 = arith.constant 0 : i32
    %c0_i32_1 = arith.constant 0 : i32
    return %arg1, %c0_i32, %c0_i32_0 : i32, i32, i32
  }
  func.func @transform_6(%arg0: i32, %arg1: i32) -> (i32, i32, i32) {
    %c0_i32 = arith.constant 0 : i32
    %c0_i32_0 = arith.constant 0 : i32
    %c0_i32_1 = arith.constant 0 : i32
    return %arg1, %c0_i32, %c0_i32_0 : i32, i32, i32
  }
  func.func @transform_7(%arg0: i32, %arg1: i32) -> (i32, i32) {
    %c0_i32 = arith.constant 0 : i32
    %c0_i32_0 = arith.constant 0 : i32
    %c0_i32_1 = arith.constant 0 : i32
    return %c0_i32, %c0_i32_0 : i32, i32
  }
  func.func @transform_8(%arg0: i32, %arg1: i32) -> (i32, i32, i32) {
    %c0_i32 = arith.constant 0 : i32
    %c0_i32_0 = arith.constant 0 : i32
    %c0_i32_1 = arith.constant 0 : i32
    return %arg1, %c0_i32, %c0_i32_0 : i32, i32, i32
  }
  func.func @transform_9(%arg0: i32, %arg1: i32) -> (i32, i32) {
    %c0_i32 = arith.constant 0 : i32
    %c0_i32_0 = arith.constant 0 : i32
    %c0_i32_1 = arith.constant 0 : i32
    return %c0_i32, %c0_i32_0 : i32, i32
  }
  func.func @transform_10(%arg0: i32, %arg1: i32) -> (i32, i32) {
    %c0_i32 = arith.constant 0 : i32
    %c0_i32_0 = arith.constant 0 : i32
    %c0_i32_1 = arith.constant 0 : i32
    return %c0_i32, %c0_i32_0 : i32, i32
  }
  func.func @transform_11(%arg0: i32, %arg1: i32) -> (i32, i32) {
    %c0_i32 = arith.constant 0 : i32
    %c0_i32_0 = arith.constant 0 : i32
    %c0_i32_1 = arith.constant 0 : i32
    return %c0_i32, %c0_i32_0 : i32, i32
  }
  func.func @transform_12(%arg0: i32, %arg1: i32) -> (i32, i32) {
    %c0_i32 = arith.constant 0 : i32
    %c0_i32_0 = arith.constant 0 : i32
    %c0_i32_1 = arith.constant 0 : i32
    return %c0_i32, %c0_i32_0 : i32, i32
  }
  func.func @transform_13(%arg0: i32, %arg1: i32) -> (i32, i32) {
    %c0_i32 = arith.constant 0 : i32
    %c0_i32_0 = arith.constant 0 : i32
    %c0_i32_1 = arith.constant 0 : i32
    return %c0_i32, %c0_i32_0 : i32, i32
  }
  func.func @transform_14(%arg0: i32, %arg1: i32) -> (i32, i32, i32) {
    %c0_i32 = arith.constant 0 : i32
    %c0_i32_0 = arith.constant 0 : i32
    %c0_i32_1 = arith.constant 0 : i32
    return %arg0, %c0_i32, %c0_i32_0 : i32, i32, i32
  }
  func.func @transform_15(%arg0: i32, %arg1: i32) -> (i32, i32, i32) {
    %c0_i32 = arith.constant 0 : i32
    %c0_i32_0 = arith.constant 0 : i32
    %c0_i32_1 = arith.constant 0 : i32
    return %arg0, %c0_i32, %c0_i32_0 : i32, i32, i32
  }
}

module attributes {stable_mosaic.version = 11 : i64} {
  func.func @_head_dual_kernel(%arg0: memref<32x128xf32, #tpu.memory_space<vmem>>, %arg1: memref<16x64xf32, #tpu.memory_space<vmem>>, %arg2: memref<128x64xbf16, #tpu.memory_space<vmem>>, %arg3: memref<1x64xf32, #tpu.memory_space<vmem>>, %arg4: memref<64x64xbf16, #tpu.memory_space<vmem>>, %arg5: memref<1x64xf32, #tpu.memory_space<vmem>>, %arg6: memref<64x32xbf16, #tpu.memory_space<vmem>>, %arg7: memref<1x32xf32, #tpu.memory_space<vmem>>, %arg8: memref<32x16xbf16, #tpu.memory_space<vmem>>, %arg9: memref<1x16xf32, #tpu.memory_space<vmem>>, %arg10: memref<32x16xf32, #tpu.memory_space<vmem>>, %arg11: memref<16x16xf32, #tpu.memory_space<vmem>>) attributes {dimension_semantics = [], scalar_prefetch = 0 : i64, scratch_operands = 0 : i64, tpu.core_type = #tpu.core_type<tc>} {
    %c0 = arith.constant 0 : index
    %c0_0 = arith.constant 0 : index
    %0 = vector.load %arg0[%c0, %c0_0] : memref<32x128xf32, #tpu.memory_space<vmem>>, vector<32x128xf32>
    %1 = arith.truncf %0 : vector<32x128xf32> to vector<32x128xbf16>
    %c0_1 = arith.constant 0 : index
    %c0_2 = arith.constant 0 : index
    %2 = vector.load %arg2[%c0_1, %c0_2] : memref<128x64xbf16, #tpu.memory_space<vmem>>, vector<128x64xbf16>
    %cst = arith.constant dense<0.000000e+00> : vector<32x64xf32>
    %3 = tpu.matmul %1, %2, %cst {dimension_numbers = #tpu.dot_dimension_numbers<[1], [0], [0], [1], [0, 0, 1, 1], [], []>} : vector<32x128xbf16>, vector<128x64xbf16>, vector<32x64xf32> -> vector<32x64xf32>
    %c0_3 = arith.constant 0 : index
    %c0_4 = arith.constant 0 : index
    %4 = vector.load %arg3[%c0_3, %c0_4] : memref<1x64xf32, #tpu.memory_space<vmem>>, vector<1x64xf32>
    %5 = vector.broadcast %4 : vector<1x64xf32> to vector<32x64xf32>
    %6 = arith.addf %3, %5 : vector<32x64xf32>
    %c0_5 = arith.constant 0 : index
    %c0_6 = arith.constant 0 : index
    %7 = vector.load %arg1[%c0_5, %c0_6] : memref<16x64xf32, #tpu.memory_space<vmem>>, vector<16x64xf32>
    %8 = arith.truncf %7 : vector<16x64xf32> to vector<16x64xbf16>
    %c0_7 = arith.constant 0 : index
    %c0_8 = arith.constant 0 : index
    %9 = vector.load %arg4[%c0_7, %c0_8] : memref<64x64xbf16, #tpu.memory_space<vmem>>, vector<64x64xbf16>
    %cst_9 = arith.constant dense<0.000000e+00> : vector<16x64xf32>
    %10 = tpu.matmul %8, %9, %cst_9 {dimension_numbers = #tpu.dot_dimension_numbers<[1], [0], [0], [1], [0, 0, 1, 1], [], []>} : vector<16x64xbf16>, vector<64x64xbf16>, vector<16x64xf32> -> vector<16x64xf32>
    %c0_10 = arith.constant 0 : index
    %c0_11 = arith.constant 0 : index
    %11 = vector.load %arg5[%c0_10, %c0_11] : memref<1x64xf32, #tpu.memory_space<vmem>>, vector<1x64xf32>
    %12 = vector.broadcast %11 : vector<1x64xf32> to vector<16x64xf32>
    %13 = arith.addf %10, %12 : vector<16x64xf32>
    %14 = arith.truncf %6 : vector<32x64xf32> to vector<32x64xbf16>
    %c0_12 = arith.constant 0 : index
    %c0_13 = arith.constant 0 : index
    %15 = vector.load %arg6[%c0_12, %c0_13] : memref<64x32xbf16, #tpu.memory_space<vmem>>, vector<64x32xbf16>
    %cst_14 = arith.constant dense<0.000000e+00> : vector<32x32xf32>
    %16 = tpu.matmul %14, %15, %cst_14 {dimension_numbers = #tpu.dot_dimension_numbers<[1], [0], [0], [1], [0, 0, 1, 1], [], []>} : vector<32x64xbf16>, vector<64x32xbf16>, vector<32x32xf32> -> vector<32x32xf32>
    %c0_15 = arith.constant 0 : index
    %c0_16 = arith.constant 0 : index
    %17 = vector.load %arg7[%c0_15, %c0_16] : memref<1x32xf32, #tpu.memory_space<vmem>>, vector<1x32xf32>
    %18 = vector.broadcast %17 : vector<1x32xf32> to vector<32x32xf32>
    %19 = arith.addf %16, %18 : vector<32x32xf32>
    %20 = arith.truncf %13 : vector<16x64xf32> to vector<16x64xbf16>
    %c0_17 = arith.constant 0 : index
    %c0_18 = arith.constant 0 : index
    %21 = vector.load %arg6[%c0_17, %c0_18] : memref<64x32xbf16, #tpu.memory_space<vmem>>, vector<64x32xbf16>
    %cst_19 = arith.constant dense<0.000000e+00> : vector<16x32xf32>
    %22 = tpu.matmul %20, %21, %cst_19 {dimension_numbers = #tpu.dot_dimension_numbers<[1], [0], [0], [1], [0, 0, 1, 1], [], []>} : vector<16x64xbf16>, vector<64x32xbf16>, vector<16x32xf32> -> vector<16x32xf32>
    %c0_20 = arith.constant 0 : index
    %c0_21 = arith.constant 0 : index
    %23 = vector.load %arg7[%c0_20, %c0_21] : memref<1x32xf32, #tpu.memory_space<vmem>>, vector<1x32xf32>
    %24 = vector.broadcast %23 : vector<1x32xf32> to vector<16x32xf32>
    %25 = arith.addf %22, %24 : vector<16x32xf32>
    %26 = arith.truncf %19 : vector<32x32xf32> to vector<32x32xbf16>
    %c0_22 = arith.constant 0 : index
    %c0_23 = arith.constant 0 : index
    %27 = vector.load %arg8[%c0_22, %c0_23] : memref<32x16xbf16, #tpu.memory_space<vmem>>, vector<32x16xbf16>
    %cst_24 = arith.constant dense<0.000000e+00> : vector<32x16xf32>
    %28 = tpu.matmul %26, %27, %cst_24 {dimension_numbers = #tpu.dot_dimension_numbers<[1], [0], [0], [1], [0, 0, 1, 1], [], []>} : vector<32x32xbf16>, vector<32x16xbf16>, vector<32x16xf32> -> vector<32x16xf32>
    %c0_25 = arith.constant 0 : index
    %c0_26 = arith.constant 0 : index
    %29 = vector.load %arg9[%c0_25, %c0_26] : memref<1x16xf32, #tpu.memory_space<vmem>>, vector<1x16xf32>
    %30 = vector.broadcast %29 : vector<1x16xf32> to vector<32x16xf32>
    %31 = arith.addf %28, %30 : vector<32x16xf32>
    %c0_27 = arith.constant 0 : index
    %c0_28 = arith.constant 0 : index
    %32 = vector.load %arg10[%c0_27, %c0_28] : memref<32x16xf32, #tpu.memory_space<vmem>>, vector<32x16xf32>
    tpu.vector_store %arg10[%c0_27, %c0_28], %31 {strides = array<i32>} : memref<32x16xf32, #tpu.memory_space<vmem>>, vector<32x16xf32>,
    %33 = arith.truncf %25 : vector<16x32xf32> to vector<16x32xbf16>
    %c0_29 = arith.constant 0 : index
    %c0_30 = arith.constant 0 : index
    %34 = vector.load %arg8[%c0_29, %c0_30] : memref<32x16xbf16, #tpu.memory_space<vmem>>, vector<32x16xbf16>
    %cst_31 = arith.constant dense<0.000000e+00> : vector<16x16xf32>
    %35 = tpu.matmul %33, %34, %cst_31 {dimension_numbers = #tpu.dot_dimension_numbers<[1], [0], [0], [1], [0, 0, 1, 1], [], []>} : vector<16x32xbf16>, vector<32x16xbf16>, vector<16x16xf32> -> vector<16x16xf32>
    %c0_32 = arith.constant 0 : index
    %c0_33 = arith.constant 0 : index
    %36 = vector.load %arg9[%c0_32, %c0_33] : memref<1x16xf32, #tpu.memory_space<vmem>>, vector<1x16xf32>
    %37 = vector.broadcast %36 : vector<1x16xf32> to vector<16x16xf32>
    %38 = arith.addf %35, %37 : vector<16x16xf32>
    %c0_34 = arith.constant 0 : index
    %c0_35 = arith.constant 0 : index
    %39 = vector.load %arg11[%c0_34, %c0_35] : memref<16x16xf32, #tpu.memory_space<vmem>>, vector<16x16xf32>
    tpu.vector_store %arg11[%c0_34, %c0_35], %38 {strides = array<i32>} : memref<16x16xf32, #tpu.memory_space<vmem>>, vector<16x16xf32>,
    return
  }
}

</mosaic_0001>

<llo_original>
// kernel: sa3_fwd.8
$region0: #{sa3_fwd.8}
  #allocation0 [shape = 'u32[]', space=smem, size = 0x4, offset = 0x4, fixed_abs, tag = 'smem constant byte address 0x4 - core index']
  #allocation1 [shape = 'u32[72,128]{1,0:T(1,128)}', space=vmem, size = 0x9000, scoped, tag = 'internal scratch']
  %s0 = inlined_call_operand.vmem [shape: f32[2,16,128], index: 0, kind: input, shape index: {}]
  %s1 = inlined_call_operand.vmem [shape: bf16[4,128,32], index: 1, kind: input, shape index: {}]
  %s2 = inlined_call_operand.vmem [shape: f32[4,1,32], index: 2, kind: input, shape index: {}]
  %s3 = inlined_call_operand.vmem [shape: bf16[4,128,32], index: 3, kind: input, shape index: {}]
  %s4 = inlined_call_operand.vmem [shape: f32[4,1,32], index: 4, kind: input, shape index: {}]
  %s5 = inlined_call_operand.vmem [shape: bf16[4,128,32], index: 5, kind: input, shape index: {}]
  %s6 = inlined_call_operand.vmem [shape: f32[4,1,32], index: 6, kind: input, shape index: {}]
  %s7 = inlined_call_operand.vmem [shape: bf16[4,32,128], index: 7, kind: input, shape index: {}]
  %s8 = inlined_call_operand.vmem [shape: f32[1,128], index: 8, kind: input, shape index: {}]
  %s9 = inlined_call_operand.vmem [shape: f32[1,128], index: 9, kind: input, shape index: {}]
  %s10 = inlined_call_operand.vmem [shape: f32[1,128], index: 10, kind: input, shape index: {}]
  %s11 = inlined_call_operand.vmem [shape: f32[2,16,128], index: 11, kind: output, shape index: {}]
  %s12 = sld [smem:[#allocation0]]
  $region89: #{sa3_fwd.8} parent=0
    _
  %s14 = ssub.s32 1, %s12
  %s15 = scalar_select 0, %s14, %s12
  loop: start=0, step=1, limit=10
  $region2: #{sa3_fwd.8} parent=0 // loop_pre_header
    _
  $region3: #{sa3_fwd.8} parent=0 // loop_header
    %s17 = sphi 0, %s21
    %p18 = scmp.ge.s32.totalorder %s17, 10
    %s24 = sphi 0, %s36
    %s25 = sphi 0, %s32
    %s26 = sphi 0, %s24
    %s27 = sphi 0, %s25
    %s28 = sphi 0, %s26
    %s29 = sphi 0, %s27
    %s39 = sphi 0, %s41
    %s42 = sphi 0, %s39
    %s43 = sphi 0, %s42
    %s59 = sphi 0, %s43
    %s65 = sphi 0, %s67
    %s68 = sphi 0, %s65
    %s69 = sphi 0, %s68
    %s85 = sphi 0, %s69
    %s91 = sphi 0, %s93
    %s94 = sphi 0, %s91
    %s95 = sphi 0, %s94
    %s111 = sphi 0, %s95
    %s117 = sphi 0, %s119
    %s120 = sphi 0, %s117
    %s121 = sphi 0, %s120
    %s137 = sphi 0, %s121
    %s143 = sphi 0, %s145
    %s146 = sphi 0, %s143
    %s147 = sphi 0, %s146
    %s163 = sphi 0, %s147
    %s169 = sphi 0, %s171
    %s172 = sphi 0, %s169
    %s173 = sphi 0, %s172
    %s189 = sphi 0, %s173
    %s195 = sphi 0, %s197
    %s198 = sphi 0, %s195
    %s199 = sphi 0, %s198
    %s215 = sphi 0, %s199
    %s221 = sphi 0, %s223
    %s224 = sphi 0, %s221
    %s225 = sphi 0, %s224
    %s241 = sphi 0, %s225
    %s245 = sphi 0, %s245
    %s247 = sphi 0, %s245
    %s248 = sphi 0, %s247
    %s262 = sphi 0, %s248
    %s266 = sphi 0, %s266
    %s268 = sphi 0, %s266
    %s269 = sphi 0, %s268
    %s283 = sphi 0, %s269
    %s287 = sphi 0, %s287
    %s289 = sphi 0, %s287
    %s290 = sphi 0, %s289
    %s304 = sphi 0, %s290
    %s310 = sphi 0, %s312
    %s313 = sphi 0, %s310
    %s314 = sphi 0, %s313
    %s330 = sphi 0, %s314
  $region4: #{sa3_fwd.8} parent=0 // loop_header_branch
    %20 = sbr.rel (%p18) target = $region8
  $region5: #{sa3_fwd.8} parent=0 // loop_body
    %s22 = ssub.s32 %s17, 1
    %s23 = ssub.s32 %s17, 2
    %s30 = sadd.s32 1, %s25
    %p31 = scmp.ge.s32.totalorder %s30, 4
    %s32 = scalar_select %p31, 0, %s30
    %s33 = sadd.s32 1, %s24
    %s34 = scalar_select %p31, %s33, %s24
    %p35 = scmp.ge.s32.totalorder %s34, 2
    %s36 = scalar_select %p35, 0, %s34
    %s37 = ssub.s32 %s24, %s36
    %p38 = scmp.eq.s32.totalorder %s37, 0
    %s40 = sadd.s32 %s39, 1
    %s41 = scalar_select %p38, %s39, %s40
    %p44 = pneg %p38
    %p45 = scmp.eq.s32.totalorder %s17, 7
    %p46 = por %p44, %p45
    %p47 = scmp.ne.s32.totalorder %s39, %s42
    %p48 = scmp.eq.s32.totalorder %s17, 0
    %p49 = por %p47, %p48
    %p50 = scmp.ne.s32.totalorder %s39, %s42
    %p51 = scmp.eq.s32.totalorder %s22, 7
    %p52 = por %p50, %p51
    %p53 = scmp.ne.s32.totalorder %s42, %s43
    %p54 = scmp.eq.s32.totalorder %s22, 0
    %p55 = por %p53, %p54
    %p56 = scmp.ne.s32.totalorder %s42, %s43
    %p57 = scmp.eq.s32.totalorder %s23, 7
    %p58 = por %p56, %p57
    %p60 = scmp.ne.s32.totalorder %s43, %s59
    %p61 = scmp.eq.s32.totalorder %s23, 0
    %p62 = por %p60, %p61
    %s63 = ssub.s32 %s25, %s32
    %p64 = scmp.eq.s32.totalorder %s63, 0
    %s66 = sadd.s32 %s65, 1
    %s67 = scalar_select %p64, %s65, %s66
    %p70 = pneg %p64
    %p71 = scmp.eq.s32.totalorder %s17, 7
    %p72 = por %p70, %p71
    %p73 = scmp.ne.s32.totalorder %s65, %s68
    %p74 = scmp.eq.s32.totalorder %s17, 0
    %p75 = por %p73, %p74
    %p76 = scmp.ne.s32.totalorder %s65, %s68
    %p77 = scmp.eq.s32.totalorder %s22, 7
    %p78 = por %p76, %p77
    %p79 = scmp.ne.s32.totalorder %s68, %s69
    %p80 = scmp.eq.s32.totalorder %s22, 0
    %p81 = por %p79, %p80
    %p82 = scmp.ne.s32.totalorder %s68, %s69
    %p83 = scmp.eq.s32.totalorder %s23, 7
    %p84 = por %p82, %p83
    %p86 = scmp.ne.s32.totalorder %s69, %s85
    %p87 = scmp.eq.s32.totalorder %s23, 0
    %p88 = por %p86, %p87
    %s89 = ssub.s32 %s25, %s32
    %p90 = scmp.eq.s32.totalorder %s89, 0
    %s92 = sadd.s32 %s91, 1
    %s93 = scalar_select %p90, %s91, %s92
    %p96 = pneg %p90
    %p97 = scmp.eq.s32.totalorder %s17, 7
    %p98 = por %p96, %p97
    %p99 = scmp.ne.s32.totalorder %s91, %s94
    %p100 = scmp.eq.s32.totalorder %s17, 0
    %p101 = por %p99, %p100
    %p102 = scmp.ne.s32.totalorder %s91, %s94
    %p103 = scmp.eq.s32.totalorder %s22, 7
    %p104 = por %p102, %p103
    %p105 = scmp.ne.s32.totalorder %s94, %s95
    %p106 = scmp.eq.s32.totalorder %s22, 0
    %p107 = por %p105, %p106
    %p108 = scmp.ne.s32.totalorder %s94, %s95
    %p109 = scmp.eq.s32.totalorder %s23, 7
    %p110 = por %p108, %p109
    %p112 = scmp.ne.s32.totalorder %s95, %s111
    %p113 = scmp.eq.s32.totalorder %s23, 0
    %p114 = por %p112, %p113
    %s115 = ssub.s32 %s25, %s32
    %p116 = scmp.eq.s32.totalorder %s115, 0
    %s118 = sadd.s32 %s117, 1
    %s119 = scalar_select %p116, %s117, %s118
    %p122 = pneg %p116
    %p123 = scmp.eq.s32.totalorder %s17, 7
    %p124 = por %p122, %p123
    %p125 = scmp.ne.s32.totalorder %s117, %s120
    %p126 = scmp.eq.s32.totalorder %s17, 0
    %p127 = por %p125, %p126
    %p128 = scmp.ne.s32.totalorder %s117, %s120
    %p129 = scmp.eq.s32.totalorder %s22, 7
    %p130 = por %p128, %p129
    %p131 = scmp.ne.s32.totalorder %s120, %s121
    %p132 = scmp.eq.s32.totalorder %s22, 0
    %p133 = por %p131, %p132
    %p134 = scmp.ne.s32.totalorder %s120, %s121
    %p135 = scmp.eq.s32.totalorder %s23, 7
    %p136 = por %p134, %p135
    %p138 = scmp.ne.s32.totalorder %s121, %s137
    %p139 = scmp.eq.s32.totalorder %s23, 0
    %p140 = por %p138, %p139
    %s141 = ssub.s32 %s25, %s32
    %p142 = scmp.eq.s32.totalorder %s141, 0
    %s144 = sadd.s32 %s143, 1
    %s145 = scalar_select %p142, %s143, %s144
    %p148 = pneg %p142
    %p149 = scmp.eq.s32.totalorder %s17, 7
    %p150 = por %p148, %p149
    %p151 = scmp.ne.s32.totalorder %s143, %s146
    %p152 = scmp.eq.s32.totalorder %s17, 0
    %p153 = por %p151, %p152
    %p154 = scmp.ne.s32.totalorder %s143, %s146
    %p155 = scmp.eq.s32.totalorder %s22, 7
    %p156 = por %p154, %p155
    %p157 = scmp.ne.s32.totalorder %s146, %s147
    %p158 = scmp.eq.s32.totalorder %s22, 0
    %p159 = por %p157, %p158
    %p160 = scmp.ne.s32.totalorder %s146, %s147
    %p161 = scmp.eq.s32.totalorder %s23, 7
    %p162 = por %p160, %p161
    %p164 = scmp.ne.s32.totalorder %s147, %s163
    %p165 = scmp.eq.s32.totalorder %s23, 0
    %p166 = por %p164, %p165
    %s167 = ssub.s32 %s25, %s32
    %p168 = scmp.eq.s32.totalorder %s167, 0
    %s170 = sadd.s32 %s169, 1
    %s171 = scalar_select %p168, %s169, %s170
    %p174 = pneg %p168
    %p175 = scmp.eq.s32.totalorder %s17, 7
    %p176 = por %p174, %p175
    %p177 = scmp.ne.s32.totalorder %s169, %s172
    %p178 = scmp.eq.s32.totalorder %s17, 0
    %p179 = por %p177, %p178
    %p180 = scmp.ne.s32.totalorder %s169, %s172
    %p181 = scmp.eq.s32.totalorder %s22, 7
    %p182 = por %p180, %p181
    %p183 = scmp.ne.s32.totalorder %s172, %s173
    %p184 = scmp.eq.s32.totalorder %s22, 0
    %p185 = por %p183, %p184
    %p186 = scmp.ne.s32.totalorder %s172, %s173
    %p187 = scmp.eq.s32.totalorder %s23, 7
    %p188 = por %p186, %p187
    %p190 = scmp.ne.s32.totalorder %s173, %s189
    %p191 = scmp.eq.s32.totalorder %s23, 0
    %p192 = por %p190, %p191
    %s193 = ssub.s32 %s25, %s32
    %p194 = scmp.eq.s32.totalorder %s193, 0
    %s196 = sadd.s32 %s195, 1
    %s197 = scalar_select %p194, %s195, %s196
    %p200 = pneg %p194
    %p201 = scmp.eq.s32.totalorder %s17, 7
    %p202 = por %p200, %p201
    %p203 = scmp.ne.s32.totalorder %s195, %s198
    %p204 = scmp.eq.s32.totalorder %s17, 0
    %p205 = por %p203, %p204
    %p206 = scmp.ne.s32.totalorder %s195, %s198
    %p207 = scmp.eq.s32.totalorder %s22, 7
    %p208 = por %p206, %p207
    %p209 = scmp.ne.s32.totalorder %s198, %s199
    %p210 = scmp.eq.s32.totalorder %s22, 0
    %p211 = por %p209, %p210
    %p212 = scmp.ne.s32.totalorder %s198, %s199
    %p213 = scmp.eq.s32.totalorder %s23, 7
    %p214 = por %p212, %p213
    %p216 = scmp.ne.s32.totalorder %s199, %s215
    %p217 = scmp.eq.s32.totalorder %s23, 0
    %p218 = por %p216, %p217
    %s219 = ssub.s32 %s25, %s32
    %p220 = scmp.eq.s32.totalorder %s219, 0
    %s222 = sadd.s32 %s221, 1
    %s223 = scalar_select %p220, %s221, %s222
    %p226 = pneg %p220
    %p227 = scmp.eq.s32.totalorder %s17, 7
    %p228 = por %p226, %p227
    %p229 = scmp.ne.s32.totalorder %s221, %s224
    %p230 = scmp.eq.s32.totalorder %s17, 0
    %p231 = por %p229, %p230
    %p232 = scmp.ne.s32.totalorder %s221, %s224
    %p233 = scmp.eq.s32.totalorder %s22, 7
    %p234 = por %p232, %p233
    %p235 = scmp.ne.s32.totalorder %s224, %s225
    %p236 = scmp.eq.s32.totalorder %s22, 0
    %p237 = por %p235, %p236
    %p238 = scmp.ne.s32.totalorder %s224, %s225
    %p239 = scmp.eq.s32.totalorder %s23, 7
    %p240 = por %p238, %p239
    %p242 = scmp.ne.s32.totalorder %s225, %s241
    %p243 = scmp.eq.s32.totalorder %s23, 0
    %p244 = por %p242, %p243
    %s246 = sadd.s32 %s245, 1
    %p249 = scmp.eq.s32.totalorder %s17, 7
    %p250 = scmp.ne.s32.totalorder %s245, %s247
    %p251 = scmp.eq.s32.totalorder %s17, 0
    %p252 = por %p250, %p251
    %p253 = scmp.ne.s32.totalorder %s245, %s247
    %p254 = scmp.eq.s32.totalorder %s22, 7
    %p255 = por %p253, %p254
    %p256 = scmp.ne.s32.totalorder %s247, %s248
    %p257 = scmp.eq.s32.totalorder %s22, 0
    %p258 = por %p256, %p257
    %p259 = scmp.ne.s32.totalorder %s247, %s248
    %p260 = scmp.eq.s32.totalorder %s23, 7
    %p261 = por %p259, %p260
    %p263 = scmp.ne.s32.totalorder %s248, %s262
    %p264 = scmp.eq.s32.totalorder %s23, 0
    %p265 = por %p263, %p264
    %s267 = sadd.s32 %s266, 1
    %p270 = scmp.eq.s32.totalorder %s17, 7
    %p271 = scmp.ne.s32.totalorder %s266, %s268
    %p272 = scmp.eq.s32.totalorder %s17, 0
    %p273 = por %p271, %p272
    %p274 = scmp.ne.s32.totalorder %s266, %s268
    %p275 = scmp.eq.s32.totalorder %s22, 7
    %p276 = por %p274, %p275
    %p277 = scmp.ne.s32.totalorder %s268, %s269
    %p278 = scmp.eq.s32.totalorder %s22, 0
    %p279 = por %p277, %p278
    %p280 = scmp.ne.s32.totalorder %s268, %s269
    %p281 = scmp.eq.s32.totalorder %s23, 7
    %p282 = por %p280, %p281
    %p284 = scmp.ne.s32.totalorder %s269, %s283
    %p285 = scmp.eq.s32.totalorder %s23, 0
    %p286 = por %p284, %p285
    %s288 = sadd.s32 %s287, 1
    %p291 = scmp.eq.s32.totalorder %s17, 7
    %p292 = scmp.ne.s32.totalorder %s287, %s289
    %p293 = scmp.eq.s32.totalorder %s17, 0
    %p294 = por %p292, %p293
    %p295 = scmp.ne.s32.totalorder %s287, %s289
    %p296 = scmp.eq.s32.totalorder %s22, 7
    %p297 = por %p295, %p296
    %p298 = scmp.ne.s32.totalorder %s289, %s290
    %p299 = scmp.eq.s32.totalorder %s22, 0
    %p300 = por %p298, %p299
    %p301 = scmp.ne.s32.totalorder %s289, %s290
    %p302 = scmp.eq.s32.totalorder %s23, 7
    %p303 = por %p301, %p302
    %p305 = scmp.ne.s32.totalorder %s290, %s304
    %p306 = scmp.eq.s32.totalorder %s23, 0
    %p307 = por %p305, %p306
    %s308 = ssub.s32 %s24, %s36
    %p309 = scmp.eq.s32.totalorder %s308, 0
    %s311 = sadd.s32 %s310, 1
    %s312 = scalar_select %p309, %s310, %s311
    %p315 = pneg %p309
    %p316 = scmp.eq.s32.totalorder %s17, 7
    %p317 = por %p315, %p316
    %p318 = scmp.ne.s32.totalorder %s310, %s313
    %p319 = scmp.eq.s32.totalorder %s17, 0
    %p320 = por %p318, %p319
    %p321 = scmp.ne.s32.totalorder %s310, %s313
    %p322 = scmp.eq.s32.totalorder %s22, 7
    %p323 = por %p321, %p322
    %p324 = scmp.ne.s32.totalorder %s313, %s314
    %p325 = scmp.eq.s32.totalorder %s22, 0
    %p326 = por %p324, %p325
    %p327 = scmp.ne.s32.totalorder %s313, %s314
    %p328 = scmp.eq.s32.totalorder %s23, 7
    %p329 = por %p327, %p328
    %p331 = scmp.ne.s32.totalorder %s314, %s330
    %p332 = scmp.eq.s32.totalorder %s23, 0
    %p333 = por %p331, %p332
    %p334 = scmp.le.s32.totalorder 1, %s17
    %p335 = scmp.lt.s32.totalorder %s17, 9
    %p336 = pnand %p334, %p335
    %p337 = pneg %p336
    // Predicated region
    $region9: #{sa3_fwd.8} parent=5 // pred_check
      _
    $region10: #{sa3_fwd.8} parent=5 // pred_check_branch
      %339 = sbr.rel (%p336) target = $region12
    $region11: #{sa3_fwd.8} parent=5 // pred_region
      %s340 = ssub.s32 %s17, 1
      // Predicated region
      $region13: #{sa3_fwd.8} parent=11 // pred_check
        %p341 = pneg %p258
      $region14: #{sa3_fwd.8} parent=11 // pred_check_branch
        %343 = sbr.rel (%p341) target = $region16
      $region15: #{sa3_fwd.8} parent=11 // pred_region
        _
      $region16: #{sa3_fwd.8} parent=11 // pred_fallthru
        _
      // Predicated region
      $region17: #{sa3_fwd.8} parent=11 // pred_check
        %p344 = pneg %p279
      $region18: #{sa3_fwd.8} parent=11 // pred_check_branch
        %346 = sbr.rel (%p344) target = $region20
      $region19: #{sa3_fwd.8} parent=11 // pred_region
        _
      $region20: #{sa3_fwd.8} parent=11 // pred_fallthru
        _
      // Predicated region
      $region21: #{sa3_fwd.8} parent=11 // pred_check
        %p347 = pneg %p300
      $region22: #{sa3_fwd.8} parent=11 // pred_check_branch
        %349 = sbr.rel (%p347) target = $region24
      $region23: #{sa3_fwd.8} parent=11 // pred_region
        _
      $region24: #{sa3_fwd.8} parent=11 // pred_fallthru
        _
    $region12: #{sa3_fwd.8} parent=5 // pred_fallthru
      _
    %p350 = scmp.lt.s32.totalorder %s17, 8
    // Predicated region
    $region25: #{sa3_fwd.8} parent=5 // pred_check
      %p351 = pneg %p350
    $region26: #{sa3_fwd.8} parent=5 // pred_check_branch
      %353 = sbr.rel (%p351) target = $region28
    $region27: #{sa3_fwd.8} parent=5 // pred_region
      // Predicated region
      $region29: #{sa3_fwd.8} parent=27 // pred_check
        %p354 = pneg %p49
      $region30: #{sa3_fwd.8} parent=27 // pred_check_branch
        %356 = sbr.rel (%p354) target = $region32
      $region31: #{sa3_fwd.8} parent=27 // pred_region
        %p357 = scmp.lt.s32.totalorder %s24, 1
        %s358 = scalar_select %p357, %s24, 1
        %s359 = smul.addr %s358, 2
        %s360 = smul.addr %s359, 8
        %s361 = scalar_lea.vmem %s0, %s360
      $region32: #{sa3_fwd.8} parent=27 // pred_fallthru
        _
      // Predicated region
      $region33: #{sa3_fwd.8} parent=27 // pred_check
        %p362 = pneg %p75
      $region34: #{sa3_fwd.8} parent=27 // pred_check_branch
        %364 = sbr.rel (%p362) target = $region36
      $region35: #{sa3_fwd.8} parent=27 // pred_region
        %p365 = scmp.lt.s32.totalorder %s25, 3
        %s366 = scalar_select %p365, %s25, 3
        %s367 = smul.addr %s366, 16
        %s368 = smul.addr %s367, 4
        %s369 = scalar_lea.vmem %s1, %s368
      $region36: #{sa3_fwd.8} parent=27 // pred_fallthru
        _
      // Predicated region
      $region37: #{sa3_fwd.8} parent=27 // pred_check
        %p370 = pneg %p101
      $region38: #{sa3_fwd.8} parent=27 // pred_check_branch
        %372 = sbr.rel (%p370) target = $region40
      $region39: #{sa3_fwd.8} parent=27 // pred_region
        %p373 = scmp.lt.s32.totalorder %s25, 3
        %s374 = scalar_select %p373, %s25, 3
        %s375 = scalar_lea.vmem %s2, %s374
      $region40: #{sa3_fwd.8} parent=27 // pred_fallthru
        _
      // Predicated region
      $region41: #{sa3_fwd.8} parent=27 // pred_check
        %p376 = pneg %p127
      $region42: #{sa3_fwd.8} parent=27 // pred_check_branch
        %378 = sbr.rel (%p376) target = $region44
      $region43: #{sa3_fwd.8} parent=27 // pred_region
        %p379 = scmp.lt.s32.totalorder %s25, 3
        %s380 = scalar_select %p379, %s25, 3
        %s381 = smul.addr %s380, 16
        %s382 = smul.addr %s381, 4
        %s383 = scalar_lea.vmem %s3, %s382
      $region44: #{sa3_fwd.8} parent=27 // pred_fallthru
        _
      // Predicated region
      $region45: #{sa3_fwd.8} parent=27 // pred_check
        %p384 = pneg %p153
      $region46: #{sa3_fwd.8} parent=27 // pred_check_branch
        %386 = sbr.rel (%p384) target = $region48
      $region47: #{sa3_fwd.8} parent=27 // pred_region
        %p387 = scmp.lt.s32.totalorder %s25, 3
        %s388 = scalar_select %p387, %s25, 3
        %s389 = scalar_lea.vmem %s4, %s388
      $region48: #{sa3_fwd.8} parent=27 // pred_fallthru
        _
      // Predicated region
      $region49: #{sa3_fwd.8} parent=27 // pred_check
        %p390 = pneg %p179
      $region50: #{sa3_fwd.8} parent=27 // pred_check_branch
        %392 = sbr.rel (%p390) target = $region52
      $region51: #{sa3_fwd.8} parent=27 // pred_region
        %p393 = scmp.lt.s32.totalorder %s25, 3
        %s394 = scalar_select %p393, %s25, 3
        %s395 = smul.addr %s394, 16
        %s396 = smul.addr %s395, 4
        %s397 = scalar_lea.vmem %s5, %s396
      $region52: #{sa3_fwd.8} parent=27 // pred_fallthru
        _
      // Predicated region
      $region53: #{sa3_fwd.8} parent=27 // pred_check
        %p398 = pneg %p205
      $region54: #{sa3_fwd.8} parent=27 // pred_check_branch
        %400 = sbr.rel (%p398) target = $region56
      $region55: #{sa3_fwd.8} parent=27 // pred_region
        %p401 = scmp.lt.s32.totalorder %s25, 3
        %s402 = scalar_select %p401, %s25, 3
        %s403 = scalar_lea.vmem %s6, %s402
      $region56: #{sa3_fwd.8} parent=27 // pred_fallthru
        _
      // Predicated region
      $region57: #{sa3_fwd.8} parent=27 // pred_check
        %p404 = pneg %p231
      $region58: #{sa3_fwd.8} parent=27 // pred_check_branch
        %406 = sbr.rel (%p404) target = $region60
      $region59: #{sa3_fwd.8} parent=27 // pred_region
        %p407 = scmp.lt.s32.totalorder %s25, 3
        %s408 = scalar_select %p407, %s25, 3
        %s409 = smul.addr %s408, 4
        %s410 = smul.addr %s409, 4
        %s411 = scalar_lea.vmem %s7, %s410
      $region60: #{sa3_fwd.8} parent=27 // pred_fallthru
        _
    $region28: #{sa3_fwd.8} parent=5 // pred_fallthru
      _
    %p412 = scmp.le.s32.totalorder 1, %s17
    %p413 = scmp.lt.s32.totalorder %s17, 9
    %p414 = pnand %p412, %p413
    %p415 = pneg %p414
    // Predicated region
    $region61: #{sa3_fwd.8} parent=5 // pred_check
      _
    $region62: #{sa3_fwd.8} parent=5 // pred_check_branch
      %417 = sbr.rel (%p414) target = $region64
    $region63: #{sa3_fwd.8} parent=5 // pred_region
      %s418 = ssub.s32 %s17, 1
      %p419 = scmp.lt.s32.totalorder %s26, 1
      %s420 = scalar_select %p419, %s26, 1
      %s421 = smul.addr %s420, 2
      %s422 = smul.addr %s421, 8
      %s423 = scalar_lea.vmem %s0, %s422
      %p424 = pneg %p55
      %p425 = pneg %p52
      %p426 = scmp.lt.s32.totalorder %s27, 3
      %s427 = scalar_select %p426, %s27, 3
      %s428 = smul.addr %s427, 16
      %s429 = smul.addr %s428, 4
      %s430 = scalar_lea.vmem %s1, %s429
      %p431 = pneg %p81
      %p432 = pneg %p78
      %p433 = scmp.lt.s32.totalorder %s27, 3
      %s434 = scalar_select %p433, %s27, 3
      %s435 = scalar_lea.vmem %s2, %s434
      %p436 = pneg %p107
      %p437 = pneg %p104
      %p438 = scmp.lt.s32.totalorder %s27, 3
      %s439 = scalar_select %p438, %s27, 3
      %s440 = smul.addr %s439, 16
      %s441 = smul.addr %s440, 4
      %s442 = scalar_lea.vmem %s3, %s441
      %p443 = pneg %p133
      %p444 = pneg %p130
      %p445 = scmp.lt.s32.totalorder %s27, 3
      %s446 = scalar_select %p445, %s27, 3
      %s447 = scalar_lea.vmem %s4, %s446
      %p448 = pneg %p159
      %p449 = pneg %p156
      %p450 = scmp.lt.s32.totalorder %s27, 3
      %s451 = scalar_select %p450, %s27, 3
      %s452 = smul.addr %s451, 16
      %s453 = smul.addr %s452, 4
      %s454 = scalar_lea.vmem %s5, %s453
      %p455 = pneg %p185
      %p456 = pneg %p182
      %p457 = scmp.lt.s32.totalorder %s27, 3
      %s458 = scalar_select %p457, %s27, 3
      %s459 = scalar_lea.vmem %s6, %s458
      %p460 = pneg %p211
      %p461 = pneg %p208
      %p462 = scmp.lt.s32.totalorder %s27, 3
      %s463 = scalar_select %p462, %s27, 3
      %s464 = smul.addr %s463, 4
      %s465 = smul.addr %s464, 4
      %s466 = scalar_lea.vmem %s7, %s465
      %p467 = pneg %p237
      %p468 = pneg %p234
      %p469 = pneg %p258
      %p470 = pneg %p255
      %p471 = pneg %p279
      %p472 = pneg %p276
      %p473 = pneg %p300
      %p474 = pneg %p297
      %p475 = pneg %p326
      %p476 = pneg %p323
      %p477 = scmp.lt.s32.totalorder %s26, 1
      %s478 = scalar_select %p477, %s26, 1
      %s479 = smul.addr %s478, 2
      %s480 = smul.addr %s479, 8
      %s481 = scalar_lea.vmem %s11, %s480
      %p482 = scmp.lt.s32.totalorder %s26, 1
      %s483 = scalar_select %p482, %s26, 1
      %s484 = smul.addr %s483, 2
      %s485 = smul.addr %s484, 8
      %s486 = scalar_lea.vmem %s0, %s485
      %p487 = scmp.lt.s32.totalorder %s27, 3
      %s488 = scalar_select %p487, %s27, 3
      %s489 = smul.addr %s488, 16
      %s490 = smul.addr %s489, 4
      %s491 = scalar_lea.vmem %s1, %s490
      %p492 = scmp.lt.s32.totalorder %s27, 3
      %s493 = scalar_select %p492, %s27, 3
      %s494 = scalar_lea.vmem %s2, %s493
      %p495 = scmp.lt.s32.totalorder %s27, 3
      %s496 = scalar_select %p495, %s27, 3
      %s497 = smul.addr %s496, 16
      %s498 = smul.addr %s497, 4
      %s499 = scalar_lea.vmem %s3, %s498
      %p500 = scmp.lt.s32.totalorder %s27, 3
      %s501 = scalar_select %p500, %s27, 3
      %s502 = scalar_lea.vmem %s4, %s501
      %p503 = scmp.lt.s32.totalorder %s27, 3
      %s504 = scalar_select %p503, %s27, 3
      %s505 = smul.addr %s504, 16
      %s506 = smul.addr %s505, 4
      %s507 = scalar_lea.vmem %s5, %s506
      %p508 = scmp.lt.s32.totalorder %s27, 3
      %s509 = scalar_select %p508, %s27, 3
      %s510 = scalar_lea.vmem %s6, %s509
      %p511 = scmp.lt.s32.totalorder %s27, 3
      %s512 = scalar_select %p511, %s27, 3
      %s513 = smul.addr %s512, 4
      %s514 = smul.addr %s513, 4
      %s515 = scalar_lea.vmem %s7, %s514
      %p516 = scmp.lt.s32.totalorder %s26, 1
      %s517 = scalar_select %p516, %s26, 1
      %s518 = smul.addr %s517, 2
      %s519 = smul.addr %s518, 8
      %s520 = scalar_lea.vmem %s11, %s519
      %v522 = vld [vmem:[%s486] sm:$0xff]
      %v523 = vld [vmem:[%s486 + $0x8] sm:$0xff]
      %v524 = vpack.c.bf16 %v523, %v522
      %v525 = vld [vmem:[%s491] sm:$0xf]
      %v526 = vld [vmem:[%s491 + $0x4] sm:$0xf]
      %v527 = vld [vmem:[%s491 + $0x8] sm:$0xf]
      %v528 = vld [vmem:[%s491 + $0xc] sm:$0xf]
      %v529 = vld [vmem:[%s491 + $0x10] sm:$0xf]
      %v530 = vld [vmem:[%s491 + $0x14] sm:$0xf]
      %v531 = vld [vmem:[%s491 + $0x18] sm:$0xf]
      %v532 = vld [vmem:[%s491 + $0x1c] sm:$0xf]
      %v533 = vld [vmem:[%s491 + $0x20] sm:$0xf]
      %v534 = vld [vmem:[%s491 + $0x24] sm:$0xf]
      %v535 = vld [vmem:[%s491 + $0x28] sm:$0xf]
      %v536 = vld [vmem:[%s491 + $0x2c] sm:$0xf]
      %v537 = vld [vmem:[%s491 + $0x30] sm:$0xf]
      %v538 = vld [vmem:[%s491 + $0x34] sm:$0xf]
      %v539 = vld [vmem:[%s491 + $0x38] sm:$0xf]
      %v540 = vld [vmem:[%s491 + $0x3c] sm:$0xf]
      %v541 = vld [vmem:[%s494] sm:$0x1]
      %v543 = vperm.slane %v541, 0
      %v561 = vunpack.c.l.b16 %v525
      %v562 = vunpack.c.l.b16 %v526
      %v563 = vunpack.c.l.b16 %v527
      %v564 = vunpack.c.l.b16 %v528
      %v565 = vunpack.c.l.b16 %v529
      %v566 = vunpack.c.l.b16 %v530
      %v567 = vunpack.c.l.b16 %v531
      %v568 = vunpack.c.l.b16 %v532
      %v569 = vunpack.c.l.b16 %v533
      %v570 = vunpack.c.l.b16 %v534
      %v571 = vunpack.c.l.b16 %v535
      %v572 = vunpack.c.l.b16 %v536
      %v573 = vunpack.c.l.b16 %v537
      %v574 = vunpack.c.l.b16 %v538
      %v575 = vunpack.c.l.b16 %v539
      %v576 = vunpack.c.l.b16 %v540
      %v577 = vpack.c.b16 %v562, %v561
      %v578 = vpack.c.b16 %v564, %v563
      %v579 = vpack.c.b16 %v566, %v565
      %v580 = vpack.c.b16 %v568, %v567
      %v581 = vpack.c.b16 %v570, %v569
      %v582 = vpack.c.b16 %v572, %v571
      %v583 = vpack.c.b16 %v574, %v573
      %v584 = vpack.c.b16 %v576, %v575
      %593 = vmatpush.bf16.msra.mxu0 %v584
      %594 = vmatpush.bf16.msra.mxu0 %v583
      %595 = vmatpush.bf16.msra.mxu0 %v582
      %596 = vmatpush.bf16.msra.mxu0 %v581
      %597 = vmatpush.bf16.msra.mxu0 %v580
      %598 = vmatpush.bf16.msra.mxu0 %v579
      %599 = vmatpush.bf16.msra.mxu0 %v578
      %600 = vmatpush.bf16.msra.mxu0 %v577
      %601 = vmatmul.bf16.gmra.mxu0 %v524
      %v602 = vpop.f32.mrf.mxu0
      %v603 = vadd.f32 %v543, %v602
      %v604 = vpop.f32.mrf.mxu0
      %v605 = vadd.f32 %v543, %v604
      %606 = vdwg.mxu0
      %v607 = vld [vmem:[%s499] sm:$0xf]
      %v608 = vld [vmem:[%s499 + $0x4] sm:$0xf]
      %v609 = vld [vmem:[%s499 + $0x8] sm:$0xf]
      %v610 = vld [vmem:[%s499 + $0xc] sm:$0xf]
      %v611 = vld [vmem:[%s499 + $0x10] sm:$0xf]
      %v612 = vld [vmem:[%s499 + $0x14] sm:$0xf]
      %v613 = vld [vmem:[%s499 + $0x18] sm:$0xf]
      %v614 = vld [vmem:[%s499 + $0x1c] sm:$0xf]
      %v615 = vld [vmem:[%s499 + $0x20] sm:$0xf]
      %v616 = vld [vmem:[%s499 + $0x24] sm:$0xf]
      %v617 = vld [vmem:[%s499 + $0x28] sm:$0xf]
      %v618 = vld [vmem:[%s499 + $0x2c] sm:$0xf]
      %v619 = vld [vmem:[%s499 + $0x30] sm:$0xf]
      %v620 = vld [vmem:[%s499 + $0x34] sm:$0xf]
      %v621 = vld [vmem:[%s499 + $0x38] sm:$0xf]
      %v622 = vld [vmem:[%s499 + $0x3c] sm:$0xf]
      %v623 = vld [vmem:[%s502] sm:$0x1]
      %v625 = vperm.slane %v623, 0
      %v643 = vunpack.c.l.b16 %v607
      %v644 = vunpack.c.l.b16 %v608
      %v645 = vunpack.c.l.b16 %v609
      %v646 = vunpack.c.l.b16 %v610
      %v647 = vunpack.c.l.b16 %v611
      %v648 = vunpack.c.l.b16 %v612
      %v649 = vunpack.c.l.b16 %v613
      %v650 = vunpack.c.l.b16 %v614
      %v651 = vunpack.c.l.b16 %v615
      %v652 = vunpack.c.l.b16 %v616
      %v653 = vunpack.c.l.b16 %v617
      %v654 = vunpack.c.l.b16 %v618
      %v655 = vunpack.c.l.b16 %v619
      %v656 = vunpack.c.l.b16 %v620
      %v657 = vunpack.c.l.b16 %v621
      %v658 = vunpack.c.l.b16 %v622
      %v659 = vpack.c.b16 %v644, %v643
      %v660 = vpack.c.b16 %v646, %v645
      %v661 = vpack.c.b16 %v648, %v647
      %v662 = vpack.c.b16 %v650, %v649
      %v663 = vpack.c.b16 %v652, %v651
      %v664 = vpack.c.b16 %v654, %v653
      %v665 = vpack.c.b16 %v656, %v655
      %v666 = vpack.c.b16 %v658, %v657
      %675 = vmatpush.bf16.msra.mxu0 %v666
      %676 = vmatpush.bf16.msra.mxu0 %v665
      %677 = vmatpush.bf16.msra.mxu0 %v664
      %678 = vmatpush.bf16.msra.mxu0 %v663
      %679 = vmatpush.bf16.msra.mxu0 %v662
      %680 = vmatpush.bf16.msra.mxu0 %v661
      %681 = vmatpush.bf16.msra.mxu0 %v660
      %682 = vmatpush.bf16.msra.mxu0 %v659
      %683 = vmatmul.bf16.gmra.mxu0 %v524
      %v684 = vpop.f32.mrf.mxu0
      %v685 = vadd.f32 %v625, %v684
      %v686 = vpop.f32.mrf.mxu0
      %v687 = vadd.f32 %v625, %v686
      %688 = vdwg.mxu0
      %v689 = vld [vmem:[%s507] sm:$0xf]
      %v690 = vld [vmem:[%s507 + $0x4] sm:$0xf]
      %v691 = vld [vmem:[%s507 + $0x8] sm:$0xf]
      %v692 = vld [vmem:[%s507 + $0xc] sm:$0xf]
      %v693 = vld [vmem:[%s507 + $0x10] sm:$0xf]
      %v694 = vld [vmem:[%s507 + $0x14] sm:$0xf]
      %v695 = vld [vmem:[%s507 + $0x18] sm:$0xf]
      %v696 = vld [vmem:[%s507 + $0x1c] sm:$0xf]
      %v697 = vld [vmem:[%s507 + $0x20] sm:$0xf]
      %v698 = vld [vmem:[%s507 + $0x24] sm:$0xf]
      %v699 = vld [vmem:[%s507 + $0x28] sm:$0xf]
      %v700 = vld [vmem:[%s507 + $0x2c] sm:$0xf]
      %v701 = vld [vmem:[%s507 + $0x30] sm:$0xf]
      %v702 = vld [vmem:[%s507 + $0x34] sm:$0xf]
      %v703 = vld [vmem:[%s507 + $0x38] sm:$0xf]
      %v704 = vld [vmem:[%s507 + $0x3c] sm:$0xf]
      %v705 = vld [vmem:[%s510] sm:$0x1]
      %v707 = vperm.slane %v705, 0
      %v725 = vunpack.c.l.b16 %v689
      %v726 = vunpack.c.l.b16 %v690
      %v727 = vunpack.c.l.b16 %v691
      %v728 = vunpack.c.l.b16 %v692
      %v729 = vunpack.c.l.b16 %v693
      %v730 = vunpack.c.l.b16 %v694
      %v731 = vunpack.c.l.b16 %v695
      %v732 = vunpack.c.l.b16 %v696
      %v733 = vunpack.c.l.b16 %v697
      %v734 = vunpack.c.l.b16 %v698
      %v735 = vunpack.c.l.b16 %v699
      %v736 = vunpack.c.l.b16 %v700
      %v737 = vunpack.c.l.b16 %v701
      %v738 = vunpack.c.l.b16 %v702
      %v739 = vunpack.c.l.b16 %v703
      %v740 = vunpack.c.l.b16 %v704
      %v741 = vpack.c.b16 %v726, %v725
      %v742 = vpack.c.b16 %v728, %v727
      %v743 = vpack.c.b16 %v730, %v729
      %v744 = vpack.c.b16 %v732, %v731
      %v745 = vpack.c.b16 %v734, %v733
      %v746 = vpack.c.b16 %v736, %v735
      %v747 = vpack.c.b16 %v738, %v737
      %v748 = vpack.c.b16 %v740, %v739
      %757 = vmatpush.bf16.msra.mxu0 %v748
      %758 = vmatpush.bf16.msra.mxu0 %v747
      %759 = vmatpush.bf16.msra.mxu0 %v746
      %760 = vmatpush.bf16.msra.mxu0 %v745
      %761 = vmatpush.bf16.msra.mxu0 %v744
      %762 = vmatpush.bf16.msra.mxu0 %v743
      %763 = vmatpush.bf16.msra.mxu0 %v742
      %764 = vmatpush.bf16.msra.mxu0 %v741
      %765 = vmatmul.bf16.gmra.mxu0 %v524
      %v766 = vpop.f32.mrf.mxu0
      %v767 = vadd.f32 %v707, %v766
      %v768 = vpop.f32.mrf.mxu0
      %v769 = vadd.f32 %v707, %v768
      %770 = vdwg.mxu0
      %v771 = vmul.f32 %v603, 0.17677669
      %v772 = vmul.f32 %v605, 0.17677669
      %v773 = vpack.c.bf16 %v772, %v771
      %v774 = vpack.c.bf16 %v687, %v685
      %vm775 = vcmask 261120
      %v777 = vsel %vm775, %v773, 0
      %v780 = vsel %vm775, %v774, 0
      %782 = vmatpush.bf16.xpose.msra.mxu0 0
      %783 = vmatpush.bf16.xpose.msra.mxu0 0
      %784 = vmatpush.bf16.xpose.msra.mxu0 0
      %785 = vmatpush.bf16.xpose.msra.mxu0 0
      %786 = vmatpush.bf16.xpose.msra.mxu0 0
      %787 = vmatpush.bf16.xpose.msra.mxu0 0
      %788 = vmatpush.bf16.xpose.msra.mxu0 0
      %789 = vmatpush.bf16.xpose.msra.mxu0 %v780
      %790 = vmatmul.bf16.gmra.mxu0 %v777
      %v791 = vpop.f32.mrf.mxu0
      %v792 = vadd.f32 0.0, %v791
      %v793 = vpop.f32.mrf.mxu0
      %v794 = vadd.f32 0.0, %v793
      %795 = vdwg.mxu0
      %vm796 = vcmask 130048
      %v797 = vsel %vm796, %v792, -inf
      %798 = vmax.xlane.f32.xlu0 %v797
      %v799 = vpop.xlane.xlu0 %798
      %v800 = vsel %vm796, %v794, -inf
      %801 = vmax.xlane.f32.xlu0 %v800
      %v802 = vpop.xlane.xlu0 %801
      %v803 = vsub.f32 %v792, %v799
      %v804 = vsub.f32 %v794, %v802
      %v805 = vmul.f32 %v803, 1.442695
      %v806 = vpow.pop %v805
      %v807 = vmul.f32 %v804, 1.442695
      %v808 = vpow.pop %v807
      %v809 = vsel %vm796, %v806, 0.0
      %810 = vadd.xlane.f32.xlu0 %v809
      %v811 = vpop.xlane.xlu0 %810
      %v812 = vsel %vm796, %v808, 0.0
      %813 = vadd.xlane.f32.xlu0 %v812
      %v814 = vpop.xlane.xlu0 %813
      %v815 = vrcp.pop %v811
      %v816 = vrcp.pop %v814
      %v817 = vmul.f32 %v806, %v815
      %v818 = vmul.f32 %v808, %v816
      %v819 = vpack.c.bf16 %v818, %v817
      %v820 = vpack.c.bf16 %v769, %v767
      %v822 = vsel %vm796, %v819, 0
      %824 = vmatpush.bf16.msra.mxu0 0
      %825 = vmatpush.bf16.msra.mxu0 0
      %826 = vmatpush.bf16.msra.mxu0 0
      %827 = vmatpush.bf16.msra.mxu0 0
      %828 = vmatpush.bf16.msra.mxu0 0
      %829 = vmatpush.bf16.msra.mxu0 0
      %830 = vmatpush.bf16.msra.mxu0 0
      %831 = vmatpush.bf16.msra.mxu0 %v820
      %832 = vmatmul.bf16.gmra.mxu0 %v822
      %v833 = vpop.f32.mrf.mxu0
      %v834 = vadd.f32 0.0, %v833
      %v835 = vpop.f32.mrf.mxu0
      %v836 = vadd.f32 0.0, %v835
      %837 = vdwg.mxu0
      %v838 = vpack.c.bf16 %v836, %v834
      %v839 = vld [vmem:[%s515] sm:$0xf]
      %v840 = vld [vmem:[%s515 + $0x4] sm:$0xf]
      %v841 = vld [vmem:[%s515 + $0x8] sm:$0xf]
      %v842 = vld [vmem:[%s515 + $0xc] sm:$0xf]
      %v847 = vunpack.c.l.b16 %v839
      %v848 = vunpack.c.l.b16 %v840
      %v849 = vunpack.c.l.b16 %v841
      %v850 = vunpack.c.l.b16 %v842
      %v851 = vpack.c.b16 %v848, %v847
      %v852 = vpack.c.b16 %v850, %v849
      %v856 = vsel %vm775, %v838, 0
      %858 = vmatpush.bf16.msra.mxu0 0
      %859 = vmatpush.bf16.msra.mxu0 0
      %860 = vmatpush.bf16.msra.mxu0 0
      %861 = vmatpush.bf16.msra.mxu0 0
      %862 = vmatpush.bf16.msra.mxu0 0
      %863 = vmatpush.bf16.msra.mxu0 0
      %864 = vmatpush.bf16.msra.mxu0 %v852
      %865 = vmatpush.bf16.msra.mxu0 %v851
      %866 = vmatmul.bf16.gmra.mxu0 %v856
      %v867 = vpop.f32.mrf.mxu0
      %v868 = vadd.f32 0.0, %v867
      %v869 = vpop.f32.mrf.mxu0
      %v870 = vadd.f32 0.0, %v869
      %871 = vdwg.mxu0
      %p872 = scmp.eq.s32.totalorder %s27, 0
      // Predicated region
      $region65: #{sa3_fwd.8} parent=63 // pred_check
        %p873 = pneg %p872
      $region66: #{sa3_fwd.8} parent=63 // pred_check_branch
        %875 = sbr.rel (%p873) target = $region68
      $region67: #{sa3_fwd.8} parent=63 // pred_region
        %876 = vst [vmem:[%s520] sm:$0xff] %v868
        %877 = vst [vmem:[%s520 + $0x8] sm:$0xff] %v870
      $region68: #{sa3_fwd.8} parent=63 // pred_fallthru
        _
      %p878 = scmp.ne.s32.totalorder %s27, 0
      // Predicated region
      $region69: #{sa3_fwd.8} parent=63 // pred_check
        %p879 = pneg %p878
      $region70: #{sa3_fwd.8} parent=63 // pred_check_branch
        %881 = sbr.rel (%p879) target = $region72
      $region71: #{sa3_fwd.8} parent=63 // pred_region
        %v882 = vld [vmem:[%s520] sm:$0xff]
        %v883 = vld [vmem:[%s520 + $0x8] sm:$0xff]
        %v884 = vadd.f32 %v882, %v868
        %v885 = vadd.f32 %v883, %v870
        %886 = vst [vmem:[%s520] sm:$0xff] %v884
        %887 = vst [vmem:[%s520 + $0x8] sm:$0xff] %v885
      $region72: #{sa3_fwd.8} parent=63 // pred_fallthru
        _
      %p888 = scmp.eq.s32.totalorder %s27, 3
      // Predicated region
      $region73: #{sa3_fwd.8} parent=63 // pred_check
        %p889 = pneg %p888
      $region74: #{sa3_fwd.8} parent=63 // pred_check_branch
        %891 = sbr.rel (%p889) target = $region76
      $region75: #{sa3_fwd.8} parent=63 // pred_region
        %v892 = vld [vmem:[%s520] sm:$0xff]
        %v893 = vld [vmem:[%s520 + $0x8] sm:$0xff]
        %v894 = vadd.f32 %v522, %v892
        %v895 = vadd.f32 %v523, %v893
        %v896 = vld [vmem:[%s8] sm:$0x1]
        %v898 = vperm.slane %v896, 0
        %v900 = vadd.f32 %v894, %v898
        %v901 = vadd.f32 %v895, %v898
        %v902 = vld [vmem:[%s9] sm:$0x1]
        %v903 = vld [vmem:[%s10] sm:$0x1]
        %904 = vadd.xlane.f32.xlu0 %v900
        %v905 = vpop.xlane.xlu0 %904
        %906 = vadd.xlane.f32.xlu0 %v901
        %v907 = vpop.xlane.xlu0 %906
        %v908 = vrcp.pop 128.0
        %v909 = vmul.f32 128.0, %v908
        %v910 = vsub.f32 1.0, %v909
        %v911 = vmul.f32 %v908, %v910
        %v912 = vadd.f32 %v908, %v911
        %vm913 = vweird.f32 %v908
        %v914 = vsel %vm913, %v908, %v912
        %v915 = vmul.f32 %v905, %v914
        %v916 = vmul.f32 %v907, %v914
        %v917 = vsub.f32 %v900, %v915
        %v918 = vsub.f32 %v901, %v916
        %v919 = vmul.f32 %v917, %v917
        %v920 = vmul.f32 %v918, %v918
        %921 = vadd.xlane.f32.xlu0 %v919
        %v922 = vpop.xlane.xlu0 %921
        %923 = vadd.xlane.f32.xlu0 %v920
        %v924 = vpop.xlane.xlu0 %923
        %v925 = vmul.f32 %v922, 0.007874016
        %v926 = vmul.f32 %v924, 0.007874016
        %v927 = vrsqrt.pop %v925
        %v928 = vmul.f32 %v927, %v925
        %v929 = vmul.f32 %v928, %v927
        %v930 = vmul.f32 0.5, %v929
        %v931 = vsub.f32 1.5, %v930
        %v932 = vmul.f32 %v927, %v931
        %v933 = vmul.f32 %v925, %v932
        %vm934 = vcmp.eq.f32.partialorder %v925, inf
        %v935 = vsel %vm934, %v925, %v933
        %vm936 = vcmp.eq.f32.partialorder %v925, 0.0
        %v937 = vand.u32 %v925, 2147483648
        %v938 = vsel %vm936, %v937, %v935
        %v939 = vrsqrt.pop %v926
        %v940 = vmul.f32 %v939, %v926
        %v941 = vmul.f32 %v940, %v939
        %v942 = vmul.f32 0.5, %v941
        %v943 = vsub.f32 1.5, %v942
        %v944 = vmul.f32 %v939, %v943
        %v945 = vmul.f32 %v926, %v944
        %vm946 = vcmp.eq.f32.partialorder %v926, inf
        %v947 = vsel %vm946, %v926, %v945
        %vm948 = vcmp.eq.f32.partialorder %v926, 0.0
        %v949 = vand.u32 %v926, 2147483648
        %v950 = vsel %vm948, %v949, %v947
        %v952 = vperm.slane %v902, 0
        %v954 = vmul.f32 %v952, %v917
        %v955 = vmul.f32 %v952, %v918
        %v956 = vadd.f32 %v938, 1e-06
        %v957 = vadd.f32 %v950, 1e-06
        %v958 = vrcp.pop %v956
        %v959 = vrcp.pop %v957
        %v960 = vmul.f32 %v954, %v958
        %v961 = vmul.f32 %v955, %v959
        %v963 = vperm.slane %v903, 0
        %v965 = vadd.f32 %v960, %v963
        %v966 = vadd.f32 %v961, %v963
        %967 = vst [vmem:[%s520] sm:$0xff] %v965
        %968 = vst [vmem:[%s520 + $0x8] sm:$0xff] %v966
      $region76: #{sa3_fwd.8} parent=63 // pred_fallthru
        _
      %p969 = scmp.lt.s32.totalorder %s26, 1
      %s970 = scalar_select %p969, %s26, 1
      %s971 = smul.addr %s970, 2
      %s972 = smul.addr %s971, 8
      %s973 = scalar_lea.vmem %s11, %s972
      // Predicated region
      $region77: #{sa3_fwd.8} parent=63 // pred_check
        %p974 = pneg %p323
      $region78: #{sa3_fwd.8} parent=63 // pred_check_branch
        %976 = sbr.rel (%p974) target = $region80
      $region79: #{sa3_fwd.8} parent=63 // pred_region
        _
      $region80: #{sa3_fwd.8} parent=63 // pred_fallthru
        _
    $region64: #{sa3_fwd.8} parent=5 // pred_fallthru
      _
    %p977 = scmp.le.s32.totalorder 2, %s17
    // Predicated region
    $region81: #{sa3_fwd.8} parent=5 // pred_check
      %p978 = pneg %p977
    $region82: #{sa3_fwd.8} parent=5 // pred_check_branch
      %980 = sbr.rel (%p978) target = $region84
    $region83: #{sa3_fwd.8} parent=5 // pred_region
      %s981 = ssub.s32 %s17, 2
      // Predicated region
      $region85: #{sa3_fwd.8} parent=83 // pred_check
        %p982 = pneg %p329
      $region86: #{sa3_fwd.8} parent=83 // pred_check_branch
        %984 = sbr.rel (%p982) target = $region88
      $region87: #{sa3_fwd.8} parent=83 // pred_region
        %p985 = scmp.lt.s32.totalorder %s28, 1
        %s986 = scalar_select %p985, %s28, 1
        %s987 = smul.addr %s986, 2
        %s988 = smul.addr %s987, 8
        %s989 = scalar_lea.vmem %s11, %s988
      $region88: #{sa3_fwd.8} parent=83 // pred_fallthru
        _
    $region84: #{sa3_fwd.8} parent=5 // pred_fallthru
      _
  $region6: #{sa3_fwd.8} parent=0 // loop_footer
    %s21 = sadd.s32 1, %s17
  $region7: #{sa3_fwd.8} parent=0 // loop_footer_branch
    %16 = sbr.rel target = $region3
  $region8: #{sa3_fwd.8} parent=0 // loop_exit
    _

// kernel: sa3_fwd.7
$region0: #{sa3_fwd.7}
  #allocation0 [shape = 'u32[]', space=smem, size = 0x4, offset = 0x4, fixed_abs, tag = 'smem constant byte address 0x4 - core index']
  #allocation1 [shape = 'u32[72,128]{1,0:T(1,128)}', space=vmem, size = 0x9000, scoped, tag = 'internal scratch']
  %s0 = inlined_call_operand.vmem [shape: f32[16,64], index: 0, kind: input, shape index: {}]
  %s1 = inlined_call_operand.vmem [shape: bf16[64,32], index: 1, kind: input, shape index: {}]
  %s2 = inlined_call_operand.vmem [shape: f32[1,32], index: 2, kind: input, shape index: {}]
  %s3 = inlined_call_operand.vmem [shape: bf16[32,64], index: 3, kind: input, shape index: {}]
  %s4 = inlined_call_operand.vmem [shape: f32[1,64], index: 4, kind: input, shape index: {}]
  %s5 = inlined_call_operand.vmem [shape: f32[1,64], index: 5, kind: input, shape index: {}]
  %s6 = inlined_call_operand.vmem [shape: f32[1,64], index: 6, kind: input, shape index: {}]
  %s7 = inlined_call_operand.vmem [shape: f32[16,64], index: 7, kind: output, shape index: {}]
  %s8 = sld [smem:[#allocation0]]
  $region38: #{sa3_fwd.7} parent=0
    _
  %s10 = ssub.s32 1, %s8
  %s11 = scalar_select 0, %s10, %s8
  // Predicated region
  $region2: #{sa3_fwd.7} parent=0 // pred_check
    _
  $region3: #{sa3_fwd.7} parent=0 // pred_check_branch
    %13 = sbr.rel (0) target = $region5
  $region4: #{sa3_fwd.7} parent=0 // pred_region
    _
  $region5: #{sa3_fwd.7} parent=0 // pred_fallthru
    _
  // Predicated region
  $region6: #{sa3_fwd.7} parent=0 // pred_check
    _
  $region7: #{sa3_fwd.7} parent=0 // pred_check_branch
    %15 = sbr.rel (0) target = $region9
  $region8: #{sa3_fwd.7} parent=0 // pred_region
    _
  $region9: #{sa3_fwd.7} parent=0 // pred_fallthru
    _
  // Predicated region
  $region10: #{sa3_fwd.7} parent=0 // pred_check
    _
  $region11: #{sa3_fwd.7} parent=0 // pred_check_branch
    %17 = sbr.rel (0) target = $region13
  $region12: #{sa3_fwd.7} parent=0 // pred_region
    _
  $region13: #{sa3_fwd.7} parent=0 // pred_fallthru
    _
  // Predicated region
  $region14: #{sa3_fwd.7} parent=0 // pred_check
    _
  $region15: #{sa3_fwd.7} parent=0 // pred_check_branch
    %19 = sbr.rel (0) target = $region17
  $region16: #{sa3_fwd.7} parent=0 // pred_region
    _
  $region17: #{sa3_fwd.7} parent=0 // pred_fallthru
    _
  // Predicated region
  $region18: #{sa3_fwd.7} parent=0 // pred_check
    _
  $region19: #{sa3_fwd.7} parent=0 // pred_check_branch
    %21 = sbr.rel (0) target = $region21
  $region20: #{sa3_fwd.7} parent=0 // pred_region
    _
  $region21: #{sa3_fwd.7} parent=0 // pred_fallthru
    _
  // Predicated region
  $region22: #{sa3_fwd.7} parent=0 // pred_check
    _
  $region23: #{sa3_fwd.7} parent=0 // pred_check_branch
    %23 = sbr.rel (0) target = $region25
  $region24: #{sa3_fwd.7} parent=0 // pred_region
    _
  $region25: #{sa3_fwd.7} parent=0 // pred_fallthru
    _
  // Predicated region
  $region26: #{sa3_fwd.7} parent=0 // pred_check
    _
  $region27: #{sa3_fwd.7} parent=0 // pred_check_branch
    %25 = sbr.rel (0) target = $region29
  $region28: #{sa3_fwd.7} parent=0 // pred_region
    _
  $region29: #{sa3_fwd.7} parent=0 // pred_fallthru
    _
  %v27 = vld [vmem:[%s0] sm:$0xff]
  %v28 = vld [vmem:[%s0 + $0x8] sm:$0xff]
  %v29 = vpack.c.bf16 %v28, %v27
  %v30 = vld [vmem:[%s1] sm:$0xf]
  %v31 = vld [vmem:[%s1 + $0x4] sm:$0xf]
  %v32 = vld [vmem:[%s1 + $0x8] sm:$0xf]
  %v33 = vld [vmem:[%s1 + $0xc] sm:$0xf]
  %v34 = vld [vmem:[%s1 + $0x10] sm:$0xf]
  %v35 = vld [vmem:[%s1 + $0x14] sm:$0xf]
  %v36 = vld [vmem:[%s1 + $0x18] sm:$0xf]
  %v37 = vld [vmem:[%s1 + $0x1c] sm:$0xf]
  %v38 = vld [vmem:[%s2] sm:$0x1]
  %v40 = vperm.slane %v38, 0
  %v50 = vunpack.c.l.b16 %v30
  %v51 = vunpack.c.l.b16 %v31
  %v52 = vunpack.c.l.b16 %v32
  %v53 = vunpack.c.l.b16 %v33
  %v54 = vunpack.c.l.b16 %v34
  %v55 = vunpack.c.l.b16 %v35
  %v56 = vunpack.c.l.b16 %v36
  %v57 = vunpack.c.l.b16 %v37
  %v58 = vpack.c.b16 %v51, %v50
  %v59 = vpack.c.b16 %v53, %v52
  %v60 = vpack.c.b16 %v55, %v54
  %v61 = vpack.c.b16 %v57, %v56
  %vm66 = vcmask 523264
  %v68 = vsel %vm66, %v29, 0
  %70 = vmatpush.bf16.msra.mxu0 0
  %71 = vmatpush.bf16.msra.mxu0 0
  %72 = vmatpush.bf16.msra.mxu0 0
  %73 = vmatpush.bf16.msra.mxu0 0
  %74 = vmatpush.bf16.msra.mxu0 %v61
  %75 = vmatpush.bf16.msra.mxu0 %v60
  %76 = vmatpush.bf16.msra.mxu0 %v59
  %77 = vmatpush.bf16.msra.mxu0 %v58
  %78 = vmatmul.bf16.gmra.mxu0 %v68
  %v79 = vpop.f32.mrf.mxu0
  %v80 = vadd.f32 %v40, %v79
  %v81 = vpop.f32.mrf.mxu0
  %v82 = vadd.f32 %v40, %v81
  %83 = vdwg.mxu0
  %v84 = vmax.f32 %v80, 0.0
  %v85 = vmax.f32 %v82, 0.0
  %v86 = vpack.c.bf16 %v85, %v84
  %v87 = vld [vmem:[%s3] sm:$0xf]
  %v88 = vld [vmem:[%s3 + $0x4] sm:$0xf]
  %v89 = vld [vmem:[%s3 + $0x8] sm:$0xf]
  %v90 = vld [vmem:[%s3 + $0xc] sm:$0xf]
  %v95 = vunpack.c.l.b16 %v87
  %v96 = vunpack.c.l.b16 %v88
  %v97 = vunpack.c.l.b16 %v89
  %v98 = vunpack.c.l.b16 %v90
  %v99 = vpack.c.b16 %v96, %v95
  %v100 = vpack.c.b16 %v98, %v97
  %vm103 = vcmask 261120
  %v105 = vsel %vm103, %v86, 0
  %107 = vmatpush.bf16.msra.mxu0 0
  %108 = vmatpush.bf16.msra.mxu0 0
  %109 = vmatpush.bf16.msra.mxu0 0
  %110 = vmatpush.bf16.msra.mxu0 0
  %111 = vmatpush.bf16.msra.mxu0 0
  %112 = vmatpush.bf16.msra.mxu0 0
  %113 = vmatpush.bf16.msra.mxu0 %v100
  %114 = vmatpush.bf16.msra.mxu0 %v99
  %115 = vmatmul.bf16.gmra.mxu0 %v105
  %v116 = vpop.f32.mrf.mxu0
  %v117 = vadd.f32 0.0, %v116
  %v118 = vpop.f32.mrf.mxu0
  %v119 = vadd.f32 0.0, %v118
  %120 = vdwg.mxu0
  %v121 = vadd.f32 %v27, %v117
  %v122 = vadd.f32 %v28, %v119
  %v123 = vld [vmem:[%s4] sm:$0x1]
  %v125 = vperm.slane %v123, 0
  %v127 = vadd.f32 %v121, %v125
  %v128 = vadd.f32 %v122, %v125
  %v129 = vld [vmem:[%s5] sm:$0x1]
  %v130 = vld [vmem:[%s6] sm:$0x1]
  %v131 = vsel %vm66, %v127, 0.0
  %132 = vadd.xlane.f32.xlu0 %v131
  %v133 = vpop.xlane.xlu0 %132
  %v134 = vsel %vm66, %v128, 0.0
  %135 = vadd.xlane.f32.xlu0 %v134
  %v136 = vpop.xlane.xlu0 %135
  %v137 = vrcp.pop 64.0
  %v138 = vmul.f32 64.0, %v137
  %v139 = vsub.f32 1.0, %v138
  %v140 = vmul.f32 %v137, %v139
  %v141 = vadd.f32 %v137, %v140
  %vm142 = vweird.f32 %v137
  %v143 = vsel %vm142, %v137, %v141
  %v144 = vmul.f32 %v133, %v143
  %v145 = vmul.f32 %v136, %v143
  %v146 = vsub.f32 %v127, %v144
  %v147 = vsub.f32 %v128, %v145
  %v148 = vmul.f32 %v146, %v146
  %v149 = vmul.f32 %v147, %v147
  %v150 = vsel %vm66, %v148, 0.0
  %151 = vadd.xlane.f32.xlu0 %v150
  %v152 = vpop.xlane.xlu0 %151
  %v153 = vsel %vm66, %v149, 0.0
  %154 = vadd.xlane.f32.xlu0 %v153
  %v155 = vpop.xlane.xlu0 %154
  %v156 = vmul.f32 %v152, 0.015873017
  %v157 = vmul.f32 %v155, 0.015873017
  %v158 = vrsqrt.pop %v156
  %v159 = vmul.f32 %v158, %v156
  %v160 = vmul.f32 %v159, %v158
  %v161 = vmul.f32 0.5, %v160
  %v162 = vsub.f32 1.5, %v161
  %v163 = vmul.f32 %v158, %v162
  %v164 = vmul.f32 %v156, %v163
  %vm165 = vcmp.eq.f32.partialorder %v156, inf
  %v166 = vsel %vm165, %v156, %v164
  %vm167 = vcmp.eq.f32.partialorder %v156, 0.0
  %v168 = vand.u32 %v156, 2147483648
  %v169 = vsel %vm167, %v168, %v166
  %v170 = vrsqrt.pop %v157
  %v171 = vmul.f32 %v170, %v157
  %v172 = vmul.f32 %v171, %v170
  %v173 = vmul.f32 0.5, %v172
  %v174 = vsub.f32 1.5, %v173
  %v175 = vmul.f32 %v170, %v174
  %v176 = vmul.f32 %v157, %v175
  %vm177 = vcmp.eq.f32.partialorder %v157, inf
  %v178 = vsel %vm177, %v157, %v176
  %vm179 = vcmp.eq.f32.partialorder %v157, 0.0
  %v180 = vand.u32 %v157, 2147483648
  %v181 = vsel %vm179, %v180, %v178
  %v183 = vperm.slane %v129, 0
  %v185 = vmul.f32 %v183, %v146
  %v186 = vmul.f32 %v183, %v147
  %v187 = vadd.f32 %v169, 1e-06
  %v188 = vadd.f32 %v181, 1e-06
  %v189 = vrcp.pop %v187
  %v190 = vrcp.pop %v188
  %v191 = vmul.f32 %v185, %v189
  %v192 = vmul.f32 %v186, %v190
  %v194 = vperm.slane %v130, 0
  %v196 = vadd.f32 %v191, %v194
  %v197 = vadd.f32 %v192, %v194
  %198 = vst.msk [vmem:[%s7] sm:$0xff] %vm66, %v196
  %199 = vst.msk [vmem:[%s7 + $0x8] sm:$0xff] %vm66, %v197
  // Predicated region
  $region30: #{sa3_fwd.7} parent=0 // pred_check
    _
  $region31: #{sa3_fwd.7} parent=0 // pred_check_branch
    %201 = sbr.rel (0) target = $region33
  $region32: #{sa3_fwd.7} parent=0 // pred_region
    _
  $region33: #{sa3_fwd.7} parent=0 // pred_fallthru
    _
  // Predicated region
  $region34: #{sa3_fwd.7} parent=0 // pred_check
    _
  $region35: #{sa3_fwd.7} parent=0 // pred_check_branch
    %203 = sbr.rel (0) target = $region37
  $region36: #{sa3_fwd.7} parent=0 // pred_region
    _
  $region37: #{sa3_fwd.7} parent=0 // pred_fallthru
    _

// kernel: sa3_fwd.9
$region0: #{sa3_fwd.9}
  #allocation0 [shape = 'u32[]', space=smem, size = 0x4, offset = 0x4, fixed_abs, tag = 'smem constant byte address 0x4 - core index']
  #allocation1 [shape = 'u32[72,128]{1,0:T(1,128)}', space=vmem, size = 0x9000, scoped, tag = 'internal scratch']
  %s0 = inlined_call_operand.vmem [shape: f32[32,128], index: 0, kind: input, shape index: {}]
  %s1 = inlined_call_operand.vmem [shape: bf16[128,32], index: 1, kind: input, shape index: {}]
  %s2 = inlined_call_operand.vmem [shape: f32[1,32], index: 2, kind: input, shape index: {}]
  %s3 = inlined_call_operand.vmem [shape: bf16[32,128], index: 3, kind: input, shape index: {}]
  %s4 = inlined_call_operand.vmem [shape: f32[1,128], index: 4, kind: input, shape index: {}]
  %s5 = inlined_call_operand.vmem [shape: f32[1,128], index: 5, kind: input, shape index: {}]
  %s6 = inlined_call_operand.vmem [shape: f32[1,128], index: 6, kind: input, shape index: {}]
  %s7 = inlined_call_operand.vmem [shape: f32[32,128], index: 7, kind: output, shape index: {}]
  %s8 = sld [smem:[#allocation0]]
  $region38: #{sa3_fwd.9} parent=0
    _
  %s10 = ssub.s32 1, %s8
  %s11 = scalar_select 0, %s10, %s8
  // Predicated region
  $region2: #{sa3_fwd.9} parent=0 // pred_check
    _
  $region3: #{sa3_fwd.9} parent=0 // pred_check_branch
    %13 = sbr.rel (0) target = $region5
  $region4: #{sa3_fwd.9} parent=0 // pred_region
    _
  $region5: #{sa3_fwd.9} parent=0 // pred_fallthru
    _
  // Predicated region
  $region6: #{sa3_fwd.9} parent=0 // pred_check
    _
  $region7: #{sa3_fwd.9} parent=0 // pred_check_branch
    %15 = sbr.rel (0) target = $region9
  $region8: #{sa3_fwd.9} parent=0 // pred_region
    _
  $region9: #{sa3_fwd.9} parent=0 // pred_fallthru
    _
  // Predicated region
  $region10: #{sa3_fwd.9} parent=0 // pred_check
    _
  $region11: #{sa3_fwd.9} parent=0 // pred_check_branch
    %17 = sbr.rel (0) target = $region13
  $region12: #{sa3_fwd.9} parent=0 // pred_region
    _
  $region13: #{sa3_fwd.9} parent=0 // pred_fallthru
    _
  // Predicated region
  $region14: #{sa3_fwd.9} parent=0 // pred_check
    _
  $region15: #{sa3_fwd.9} parent=0 // pred_check_branch
    %19 = sbr.rel (0) target = $region17
  $region16: #{sa3_fwd.9} parent=0 // pred_region
    _
  $region17: #{sa3_fwd.9} parent=0 // pred_fallthru
    _
  // Predicated region
  $region18: #{sa3_fwd.9} parent=0 // pred_check
    _
  $region19: #{sa3_fwd.9} parent=0 // pred_check_branch
    %21 = sbr.rel (0) target = $region21
  $region20: #{sa3_fwd.9} parent=0 // pred_region
    _
  $region21: #{sa3_fwd.9} parent=0 // pred_fallthru
    _
  // Predicated region
  $region22: #{sa3_fwd.9} parent=0 // pred_check
    _
  $region23: #{sa3_fwd.9} parent=0 // pred_check_branch
    %23 = sbr.rel (0) target = $region25
  $region24: #{sa3_fwd.9} parent=0 // pred_region
    _
  $region25: #{sa3_fwd.9} parent=0 // pred_fallthru
    _
  // Predicated region
  $region26: #{sa3_fwd.9} parent=0 // pred_check
    _
  $region27: #{sa3_fwd.9} parent=0 // pred_check_branch
    %25 = sbr.rel (0) target = $region29
  $region28: #{sa3_fwd.9} parent=0 // pred_region
    _
  $region29: #{sa3_fwd.9} parent=0 // pred_fallthru
    _
  %v27 = vld [vmem:[%s0] sm:$0xff]
  %v28 = vld [vmem:[%s0 + $0x8] sm:$0xff]
  %v29 = vld [vmem:[%s0 + $0x10] sm:$0xff]
  %v30 = vld [vmem:[%s0 + $0x18] sm:$0xff]
  %v31 = vpack.c.bf16 %v28, %v27
  %v32 = vpack.c.bf16 %v30, %v29
  %v33 = vld [vmem:[%s1] sm:$0xf]
  %v34 = vld [vmem:[%s1 + $0x4] sm:$0xf]
  %v35 = vld [vmem:[%s1 + $0x8] sm:$0xf]
  %v36 = vld [vmem:[%s1 + $0xc] sm:$0xf]
  %v37 = vld [vmem:[%s1 + $0x10] sm:$0xf]
  %v38 = vld [vmem:[%s1 + $0x14] sm:$0xf]
  %v39 = vld [vmem:[%s1 + $0x18] sm:$0xf]
  %v40 = vld [vmem:[%s1 + $0x1c] sm:$0xf]
  %v41 = vld [vmem:[%s1 + $0x20] sm:$0xf]
  %v42 = vld [vmem:[%s1 + $0x24] sm:$0xf]
  %v43 = vld [vmem:[%s1 + $0x28] sm:$0xf]
  %v44 = vld [vmem:[%s1 + $0x2c] sm:$0xf]
  %v45 = vld [vmem:[%s1 + $0x30] sm:$0xf]
  %v46 = vld [vmem:[%s1 + $0x34] sm:$0xf]
  %v47 = vld [vmem:[%s1 + $0x38] sm:$0xf]
  %v48 = vld [vmem:[%s1 + $0x3c] sm:$0xf]
  %v49 = vld [vmem:[%s2] sm:$0x1]
  %v51 = vperm.slane %v49, 0
  %v69 = vunpack.c.l.b16 %v33
  %v70 = vunpack.c.l.b16 %v34
  %v71 = vunpack.c.l.b16 %v35
  %v72 = vunpack.c.l.b16 %v36
  %v73 = vunpack.c.l.b16 %v37
  %v74 = vunpack.c.l.b16 %v38
  %v75 = vunpack.c.l.b16 %v39
  %v76 = vunpack.c.l.b16 %v40
  %v77 = vunpack.c.l.b16 %v41
  %v78 = vunpack.c.l.b16 %v42
  %v79 = vunpack.c.l.b16 %v43
  %v80 = vunpack.c.l.b16 %v44
  %v81 = vunpack.c.l.b16 %v45
  %v82 = vunpack.c.l.b16 %v46
  %v83 = vunpack.c.l.b16 %v47
  %v84 = vunpack.c.l.b16 %v48
  %v85 = vpack.c.b16 %v70, %v69
  %v86 = vpack.c.b16 %v72, %v71
  %v87 = vpack.c.b16 %v74, %v73
  %v88 = vpack.c.b16 %v76, %v75
  %v89 = vpack.c.b16 %v78, %v77
  %v90 = vpack.c.b16 %v80, %v79
  %v91 = vpack.c.b16 %v82, %v81
  %v92 = vpack.c.b16 %v84, %v83
  %101 = vmatpush.bf16.msra.mxu0 %v92
  %102 = vmatpush.bf16.msra.mxu0 %v91
  %103 = vmatpush.bf16.msra.mxu0 %v90
  %104 = vmatpush.bf16.msra.mxu0 %v89
  %105 = vmatpush.bf16.msra.mxu0 %v88
  %106 = vmatpush.bf16.msra.mxu0 %v87
  %107 = vmatpush.bf16.msra.mxu0 %v86
  %108 = vmatpush.bf16.msra.mxu0 %v85
  %109 = vmatmul.bf16.gmra.mxu0 %v31
  %v110 = vpop.f32.mrf.mxu0
  %v111 = vadd.f32 %v51, %v110
  %v112 = vpop.f32.mrf.mxu0
  %v113 = vadd.f32 %v51, %v112
  %114 = vmatmul.bf16.gmra.mxu0 %v32
  %v115 = vpop.f32.mrf.mxu0
  %v116 = vadd.f32 %v51, %v115
  %v117 = vpop.f32.mrf.mxu0
  %v118 = vadd.f32 %v51, %v117
  %119 = vdwg.mxu0
  %v120 = vmax.f32 %v111, 0.0
  %v121 = vmax.f32 %v113, 0.0
  %v122 = vmax.f32 %v116, 0.0
  %v123 = vmax.f32 %v118, 0.0
  %v124 = vpack.c.bf16 %v121, %v120
  %v125 = vpack.c.bf16 %v123, %v122
  %v126 = vld [vmem:[%s3] sm:$0xf]
  %v127 = vld [vmem:[%s3 + $0x4] sm:$0xf]
  %v128 = vld [vmem:[%s3 + $0x8] sm:$0xf]
  %v129 = vld [vmem:[%s3 + $0xc] sm:$0xf]
  %v134 = vunpack.c.l.b16 %v126
  %v135 = vunpack.c.l.b16 %v127
  %v136 = vunpack.c.l.b16 %v128
  %v137 = vunpack.c.l.b16 %v129
  %v138 = vpack.c.b16 %v135, %v134
  %v139 = vpack.c.b16 %v137, %v136
  %vm142 = vcmask 261120
  %v144 = vsel %vm142, %v124, 0
  %v147 = vsel %vm142, %v125, 0
  %149 = vmatpush.bf16.msra.mxu0 0
  %150 = vmatpush.bf16.msra.mxu0 0
  %151 = vmatpush.bf16.msra.mxu0 0
  %152 = vmatpush.bf16.msra.mxu0 0
  %153 = vmatpush.bf16.msra.mxu0 0
  %154 = vmatpush.bf16.msra.mxu0 0
  %155 = vmatpush.bf16.msra.mxu0 %v139
  %156 = vmatpush.bf16.msra.mxu0 %v138
  %157 = vmatmul.bf16.gmra.mxu0 %v144
  %v158 = vpop.f32.mrf.mxu0
  %v159 = vadd.f32 0.0, %v158
  %v160 = vpop.f32.mrf.mxu0
  %v161 = vadd.f32 0.0, %v160
  %162 = vmatmul.bf16.gmra.mxu0 %v147
  %v163 = vpop.f32.mrf.mxu0
  %v164 = vadd.f32 0.0, %v163
  %v165 = vpop.f32.mrf.mxu0
  %v166 = vadd.f32 0.0, %v165
  %167 = vdwg.mxu0
  %v168 = vadd.f32 %v27, %v159
  %v169 = vadd.f32 %v28, %v161
  %v170 = vadd.f32 %v29, %v164
  %v171 = vadd.f32 %v30, %v166
  %v172 = vld [vmem:[%s4] sm:$0x1]
  %v174 = vperm.slane %v172, 0
  %v176 = vadd.f32 %v168, %v174
  %v177 = vadd.f32 %v169, %v174
  %v178 = vadd.f32 %v170, %v174
  %v179 = vadd.f32 %v171, %v174
  %v180 = vld [vmem:[%s5] sm:$0x1]
  %v181 = vld [vmem:[%s6] sm:$0x1]
  %182 = vadd.xlane.f32.xlu0 %v176
  %v183 = vpop.xlane.xlu0 %182
  %184 = vadd.xlane.f32.xlu0 %v177
  %v185 = vpop.xlane.xlu0 %184
  %186 = vadd.xlane.f32.xlu0 %v178
  %v187 = vpop.xlane.xlu0 %186
  %188 = vadd.xlane.f32.xlu0 %v179
  %v189 = vpop.xlane.xlu0 %188
  %v190 = vrcp.pop 128.0
  %v191 = vmul.f32 128.0, %v190
  %v192 = vsub.f32 1.0, %v191
  %v193 = vmul.f32 %v190, %v192
  %v194 = vadd.f32 %v190, %v193
  %vm195 = vweird.f32 %v190
  %v196 = vsel %vm195, %v190, %v194
  %v197 = vmul.f32 %v183, %v196
  %v198 = vmul.f32 %v185, %v196
  %v199 = vmul.f32 %v187, %v196
  %v200 = vmul.f32 %v189, %v196
  %v201 = vsub.f32 %v176, %v197
  %v202 = vsub.f32 %v177, %v198
  %v203 = vsub.f32 %v178, %v199
  %v204 = vsub.f32 %v179, %v200
  %v205 = vmul.f32 %v201, %v201
  %v206 = vmul.f32 %v202, %v202
  %v207 = vmul.f32 %v203, %v203
  %v208 = vmul.f32 %v204, %v204
  %209 = vadd.xlane.f32.xlu0 %v205
  %v210 = vpop.xlane.xlu0 %209
  %211 = vadd.xlane.f32.xlu0 %v206
  %v212 = vpop.xlane.xlu0 %211
  %213 = vadd.xlane.f32.xlu0 %v207
  %v214 = vpop.xlane.xlu0 %213
  %215 = vadd.xlane.f32.xlu0 %v208
  %v216 = vpop.xlane.xlu0 %215
  %v217 = vmul.f32 %v210, 0.007874016
  %v218 = vmul.f32 %v212, 0.007874016
  %v219 = vmul.f32 %v214, 0.007874016
  %v220 = vmul.f32 %v216, 0.007874016
  %v221 = vrsqrt.pop %v217
  %v222 = vmul.f32 %v221, %v217
  %v223 = vmul.f32 %v222, %v221
  %v224 = vmul.f32 0.5, %v223
  %v225 = vsub.f32 1.5, %v224
  %v226 = vmul.f32 %v221, %v225
  %v227 = vmul.f32 %v217, %v226
  %vm228 = vcmp.eq.f32.partialorder %v217, inf
  %v229 = vsel %vm228, %v217, %v227
  %vm230 = vcmp.eq.f32.partialorder %v217, 0.0
  %v231 = vand.u32 %v217, 2147483648
  %v232 = vsel %vm230, %v231, %v229
  %v233 = vrsqrt.pop %v218
  %v234 = vmul.f32 %v233, %v218
  %v235 = vmul.f32 %v234, %v233
  %v236 = vmul.f32 0.5, %v235
  %v237 = vsub.f32 1.5, %v236
  %v238 = vmul.f32 %v233, %v237
  %v239 = vmul.f32 %v218, %v238
  %vm240 = vcmp.eq.f32.partialorder %v218, inf
  %v241 = vsel %vm240, %v218, %v239
  %vm242 = vcmp.eq.f32.partialorder %v218, 0.0
  %v243 = vand.u32 %v218, 2147483648
  %v244 = vsel %vm242, %v243, %v241
  %v245 = vrsqrt.pop %v219
  %v246 = vmul.f32 %v245, %v219
  %v247 = vmul.f32 %v246, %v245
  %v248 = vmul.f32 0.5, %v247
  %v249 = vsub.f32 1.5, %v248
  %v250 = vmul.f32 %v245, %v249
  %v251 = vmul.f32 %v219, %v250
  %vm252 = vcmp.eq.f32.partialorder %v219, inf
  %v253 = vsel %vm252, %v219, %v251
  %vm254 = vcmp.eq.f32.partialorder %v219, 0.0
  %v255 = vand.u32 %v219, 2147483648
  %v256 = vsel %vm254, %v255, %v253
  %v257 = vrsqrt.pop %v220
  %v258 = vmul.f32 %v257, %v220
  %v259 = vmul.f32 %v258, %v257
  %v260 = vmul.f32 0.5, %v259
  %v261 = vsub.f32 1.5, %v260
  %v262 = vmul.f32 %v257, %v261
  %v263 = vmul.f32 %v220, %v262
  %vm264 = vcmp.eq.f32.partialorder %v220, inf
  %v265 = vsel %vm264, %v220, %v263
  %vm266 = vcmp.eq.f32.partialorder %v220, 0.0
  %v267 = vand.u32 %v220, 2147483648
  %v268 = vsel %vm266, %v267, %v265
  %v270 = vperm.slane %v180, 0
  %v272 = vmul.f32 %v270, %v201
  %v273 = vmul.f32 %v270, %v202
  %v274 = vmul.f32 %v270, %v203
  %v275 = vmul.f32 %v270, %v204
  %v276 = vadd.f32 %v232, 1e-06
  %v277 = vadd.f32 %v244, 1e-06
  %v278 = vadd.f32 %v256, 1e-06
  %v279 = vadd.f32 %v268, 1e-06
  %v280 = vrcp.pop %v276
  %v281 = vrcp.pop %v277
  %v282 = vrcp.pop %v278
  %v283 = vrcp.pop %v279
  %v284 = vmul.f32 %v272, %v280
  %v285 = vmul.f32 %v273, %v281
  %v286 = vmul.f32 %v274, %v282
  %v287 = vmul.f32 %v275, %v283
  %v289 = vperm.slane %v181, 0
  %v291 = vadd.f32 %v284, %v289
  %v292 = vadd.f32 %v285, %v289
  %v293 = vadd.f32 %v286, %v289
  %v294 = vadd.f32 %v287, %v289
  %295 = vst [vmem:[%s7] sm:$0xff] %v291
  %296 = vst [vmem:[%s7 + $0x8] sm:$0xff] %v292
  %297 = vst [vmem:[%s7 + $0x10] sm:$0xff] %v293
  %298 = vst [vmem:[%s7 + $0x18] sm:$0xff] %v294
  // Predicated region
  $region30: #{sa3_fwd.9} parent=0 // pred_check
    _
  $region31: #{sa3_fwd.9} parent=0 // pred_check_branch
    %300 = sbr.rel (0) target = $region33
  $region32: #{sa3_fwd.9} parent=0 // pred_region
    _
  $region33: #{sa3_fwd.9} parent=0 // pred_fallthru
    _
  // Predicated region
  $region34: #{sa3_fwd.9} parent=0 // pred_check
    _
  $region35: #{sa3_fwd.9} parent=0 // pred_check_branch
    %302 = sbr.rel (0) target = $region37
  $region36: #{sa3_fwd.9} parent=0 // pred_region
    _
  $region37: #{sa3_fwd.9} parent=0 // pred_fallthru
    _

// kernel: sa3_fwd.6
$region0: #{sa3_fwd.6}
  #allocation0 [shape = 'u32[]', space=smem, size = 0x4, offset = 0x4, fixed_abs, tag = 'smem constant byte address 0x4 - core index']
  #allocation1 [shape = 'u32[72,128]{1,0:T(1,128)}', space=vmem, size = 0x9000, scoped, tag = 'internal scratch']
  %s0 = inlined_call_operand.vmem [shape: f32[2,8,64], index: 0, kind: input, shape index: {}]
  %s1 = inlined_call_operand.vmem [shape: bf16[4,64,16], index: 1, kind: input, shape index: {}]
  %s2 = inlined_call_operand.vmem [shape: f32[4,1,16], index: 2, kind: input, shape index: {}]
  %s3 = inlined_call_operand.vmem [shape: bf16[4,64,16], index: 3, kind: input, shape index: {}]
  %s4 = inlined_call_operand.vmem [shape: f32[4,1,16], index: 4, kind: input, shape index: {}]
  %s5 = inlined_call_operand.vmem [shape: bf16[4,64,16], index: 5, kind: input, shape index: {}]
  %s6 = inlined_call_operand.vmem [shape: f32[4,1,16], index: 6, kind: input, shape index: {}]
  %s7 = inlined_call_operand.vmem [shape: bf16[4,16,64], index: 7, kind: input, shape index: {}]
  %s8 = inlined_call_operand.vmem [shape: f32[1,64], index: 8, kind: input, shape index: {}]
  %s9 = inlined_call_operand.vmem [shape: f32[1,64], index: 9, kind: input, shape index: {}]
  %s10 = inlined_call_operand.vmem [shape: f32[1,64], index: 10, kind: input, shape index: {}]
  %s11 = inlined_call_operand.vmem [shape: f32[2,8,64], index: 11, kind: output, shape index: {}]
  %s12 = sld [smem:[#allocation0]]
  $region89: #{sa3_fwd.6} parent=0
    _
  %s14 = ssub.s32 1, %s12
  %s15 = scalar_select 0, %s14, %s12
  loop: start=0, step=1, limit=10
  $region2: #{sa3_fwd.6} parent=0 // loop_pre_header
    _
  $region3: #{sa3_fwd.6} parent=0 // loop_header
    %s17 = sphi 0, %s21
    %p18 = scmp.ge.s32.totalorder %s17, 10
    %s24 = sphi 0, %s36
    %s25 = sphi 0, %s32
    %s26 = sphi 0, %s24
    %s27 = sphi 0, %s25
    %s28 = sphi 0, %s26
    %s29 = sphi 0, %s27
    %s39 = sphi 0, %s41
    %s42 = sphi 0, %s39
    %s43 = sphi 0, %s42
    %s59 = sphi 0, %s43
    %s65 = sphi 0, %s67
    %s68 = sphi 0, %s65
    %s69 = sphi 0, %s68
    %s85 = sphi 0, %s69
    %s91 = sphi 0, %s93
    %s94 = sphi 0, %s91
    %s95 = sphi 0, %s94
    %s111 = sphi 0, %s95
    %s117 = sphi 0, %s119
    %s120 = sphi 0, %s117
    %s121 = sphi 0, %s120
    %s137 = sphi 0, %s121
    %s143 = sphi 0, %s145
    %s146 = sphi 0, %s143
    %s147 = sphi 0, %s146
    %s163 = sphi 0, %s147
    %s169 = sphi 0, %s171
    %s172 = sphi 0, %s169
    %s173 = sphi 0, %s172
    %s189 = sphi 0, %s173
    %s195 = sphi 0, %s197
    %s198 = sphi 0, %s195
    %s199 = sphi 0, %s198
    %s215 = sphi 0, %s199
    %s221 = sphi 0, %s223
    %s224 = sphi 0, %s221
    %s225 = sphi 0, %s224
    %s241 = sphi 0, %s225
    %s245 = sphi 0, %s245
    %s247 = sphi 0, %s245
    %s248 = sphi 0, %s247
    %s262 = sphi 0, %s248
    %s266 = sphi 0, %s266
    %s268 = sphi 0, %s266
    %s269 = sphi 0, %s268
    %s283 = sphi 0, %s269
    %s287 = sphi 0, %s287
    %s289 = sphi 0, %s287
    %s290 = sphi 0, %s289
    %s304 = sphi 0, %s290
    %s310 = sphi 0, %s312
    %s313 = sphi 0, %s310
    %s314 = sphi 0, %s313
    %s330 = sphi 0, %s314
  $region4: #{sa3_fwd.6} parent=0 // loop_header_branch
    %20 = sbr.rel (%p18) target = $region8
  $region5: #{sa3_fwd.6} parent=0 // loop_body
    %s22 = ssub.s32 %s17, 1
    %s23 = ssub.s32 %s17, 2
    %s30 = sadd.s32 1, %s25
    %p31 = scmp.ge.s32.totalorder %s30, 4
    %s32 = scalar_select %p31, 0, %s30
    %s33 = sadd.s32 1, %s24
    %s34 = scalar_select %p31, %s33, %s24
    %p35 = scmp.ge.s32.totalorder %s34, 2
    %s36 = scalar_select %p35, 0, %s34
    %s37 = ssub.s32 %s24, %s36
    %p38 = scmp.eq.s32.totalorder %s37, 0
    %s40 = sadd.s32 %s39, 1
    %s41 = scalar_select %p38, %s39, %s40
    %p44 = pneg %p38
    %p45 = scmp.eq.s32.totalorder %s17, 7
    %p46 = por %p44, %p45
    %p47 = scmp.ne.s32.totalorder %s39, %s42
    %p48 = scmp.eq.s32.totalorder %s17, 0
    %p49 = por %p47, %p48
    %p50 = scmp.ne.s32.totalorder %s39, %s42
    %p51 = scmp.eq.s32.totalorder %s22, 7
    %p52 = por %p50, %p51
    %p53 = scmp.ne.s32.totalorder %s42, %s43
    %p54 = scmp.eq.s32.totalorder %s22, 0
    %p55 = por %p53, %p54
    %p56 = scmp.ne.s32.totalorder %s42, %s43
    %p57 = scmp.eq.s32.totalorder %s23, 7
    %p58 = por %p56, %p57
    %p60 = scmp.ne.s32.totalorder %s43, %s59
    %p61 = scmp.eq.s32.totalorder %s23, 0
    %p62 = por %p60, %p61
    %s63 = ssub.s32 %s25, %s32
    %p64 = scmp.eq.s32.totalorder %s63, 0
    %s66 = sadd.s32 %s65, 1
    %s67 = scalar_select %p64, %s65, %s66
    %p70 = pneg %p64
    %p71 = scmp.eq.s32.totalorder %s17, 7
    %p72 = por %p70, %p71
    %p73 = scmp.ne.s32.totalorder %s65, %s68
    %p74 = scmp.eq.s32.totalorder %s17, 0
    %p75 = por %p73, %p74
    %p76 = scmp.ne.s32.totalorder %s65, %s68
    %p77 = scmp.eq.s32.totalorder %s22, 7
    %p78 = por %p76, %p77
    %p79 = scmp.ne.s32.totalorder %s68, %s69
    %p80 = scmp.eq.s32.totalorder %s22, 0
    %p81 = por %p79, %p80
    %p82 = scmp.ne.s32.totalorder %s68, %s69
    %p83 = scmp.eq.s32.totalorder %s23, 7
    %p84 = por %p82, %p83
    %p86 = scmp.ne.s32.totalorder %s69, %s85
    %p87 = scmp.eq.s32.totalorder %s23, 0
    %p88 = por %p86, %p87
    %s89 = ssub.s32 %s25, %s32
    %p90 = scmp.eq.s32.totalorder %s89, 0
    %s92 = sadd.s32 %s91, 1
    %s93 = scalar_select %p90, %s91, %s92
    %p96 = pneg %p90
    %p97 = scmp.eq.s32.totalorder %s17, 7
    %p98 = por %p96, %p97
    %p99 = scmp.ne.s32.totalorder %s91, %s94
    %p100 = scmp.eq.s32.totalorder %s17, 0
    %p101 = por %p99, %p100
    %p102 = scmp.ne.s32.totalorder %s91, %s94
    %p103 = scmp.eq.s32.totalorder %s22, 7
    %p104 = por %p102, %p103
    %p105 = scmp.ne.s32.totalorder %s94, %s95
    %p106 = scmp.eq.s32.totalorder %s22, 0
    %p107 = por %p105, %p106
    %p108 = scmp.ne.s32.totalorder %s94, %s95
    %p109 = scmp.eq.s32.totalorder %s23, 7
    %p110 = por %p108, %p109
    %p112 = scmp.ne.s32.totalorder %s95, %s111
    %p113 = scmp.eq.s32.totalorder %s23, 0
    %p114 = por %p112, %p113
    %s115 = ssub.s32 %s25, %s32
    %p116 = scmp.eq.s32.totalorder %s115, 0
    %s118 = sadd.s32 %s117, 1
    %s119 = scalar_select %p116, %s117, %s118
    %p122 = pneg %p116
    %p123 = scmp.eq.s32.totalorder %s17, 7
    %p124 = por %p122, %p123
    %p125 = scmp.ne.s32.totalorder %s117, %s120
    %p126 = scmp.eq.s32.totalorder %s17, 0
    %p127 = por %p125, %p126
    %p128 = scmp.ne.s32.totalorder %s117, %s120
    %p129 = scmp.eq.s32.totalorder %s22, 7
    %p130 = por %p128, %p129
    %p131 = scmp.ne.s32.totalorder %s120, %s121
    %p132 = scmp.eq.s32.totalorder %s22, 0
    %p133 = por %p131, %p132
    %p134 = scmp.ne.s32.totalorder %s120, %s121
    %p135 = scmp.eq.s32.totalorder %s23, 7
    %p136 = por %p134, %p135
    %p138 = scmp.ne.s32.totalorder %s121, %s137
    %p139 = scmp.eq.s32.totalorder %s23, 0
    %p140 = por %p138, %p139
    %s141 = ssub.s32 %s25, %s32
    %p142 = scmp.eq.s32.totalorder %s141, 0
    %s144 = sadd.s32 %s143, 1
    %s145 = scalar_select %p142, %s143, %s144
    %p148 = pneg %p142
    %p149 = scmp.eq.s32.totalorder %s17, 7
    %p150 = por %p148, %p149
    %p151 = scmp.ne.s32.totalorder %s143, %s146
    %p152 = scmp.eq.s32.totalorder %s17, 0
    %p153 = por %p151, %p152
    %p154 = scmp.ne.s32.totalorder %s143, %s146
    %p155 = scmp.eq.s32.totalorder %s22, 7
    %p156 = por %p154, %p155
    %p157 = scmp.ne.s32.totalorder %s146, %s147
    %p158 = scmp.eq.s32.totalorder %s22, 0
    %p159 = por %p157, %p158
    %p160 = scmp.ne.s32.totalorder %s146, %s147
    %p161 = scmp.eq.s32.totalorder %s23, 7
    %p162 = por %p160, %p161
    %p164 = scmp.ne.s32.totalorder %s147, %s163
    %p165 = scmp.eq.s32.totalorder %s23, 0
    %p166 = por %p164, %p165
    %s167 = ssub.s32 %s25, %s32
    %p168 = scmp.eq.s32.totalorder %s167, 0
    %s170 = sadd.s32 %s169, 1
    %s171 = scalar_select %p168, %s169, %s170
    %p174 = pneg %p168
    %p175 = scmp.eq.s32.totalorder %s17, 7
    %p176 = por %p174, %p175
    %p177 = scmp.ne.s32.totalorder %s169, %s172
    %p178 = scmp.eq.s32.totalorder %s17, 0
    %p179 = por %p177, %p178
    %p180 = scmp.ne.s32.totalorder %s169, %s172
    %p181 = scmp.eq.s32.totalorder %s22, 7
    %p182 = por %p180, %p181
    %p183 = scmp.ne.s32.totalorder %s172, %s173
    %p184 = scmp.eq.s32.totalorder %s22, 0
    %p185 = por %p183, %p184
    %p186 = scmp.ne.s32.totalorder %s172, %s173
    %p187 = scmp.eq.s32.totalorder %s23, 7
    %p188 = por %p186, %p187
    %p190 = scmp.ne.s32.totalorder %s173, %s189
    %p191 = scmp.eq.s32.totalorder %s23, 0
    %p192 = por %p190, %p191
    %s193 = ssub.s32 %s25, %s32
    %p194 = scmp.eq.s32.totalorder %s193, 0
    %s196 = sadd.s32 %s195, 1
    %s197 = scalar_select %p194, %s195, %s196
    %p200 = pneg %p194
    %p201 = scmp.eq.s32.totalorder %s17, 7
    %p202 = por %p200, %p201
    %p203 = scmp.ne.s32.totalorder %s195, %s198
    %p204 = scmp.eq.s32.totalorder %s17, 0
    %p205 = por %p203, %p204
    %p206 = scmp.ne.s32.totalorder %s195, %s198
    %p207 = scmp.eq.s32.totalorder %s22, 7
    %p208 = por %p206, %p207
    %p209 = scmp.ne.s32.totalorder %s198, %s199
    %p210 = scmp.eq.s32.totalorder %s22, 0
    %p211 = por %p209, %p210
    %p212 = scmp.ne.s32.totalorder %s198, %s199
    %p213 = scmp.eq.s32.totalorder %s23, 7
    %p214 = por %p212, %p213
    %p216 = scmp.ne.s32.totalorder %s199, %s215
    %p217 = scmp.eq.s32.totalorder %s23, 0
    %p218 = por %p216, %p217
    %s219 = ssub.s32 %s25, %s32
    %p220 = scmp.eq.s32.totalorder %s219, 0
    %s222 = sadd.s32 %s221, 1
    %s223 = scalar_select %p220, %s221, %s222
    %p226 = pneg %p220
    %p227 = scmp.eq.s32.totalorder %s17, 7
    %p228 = por %p226, %p227
    %p229 = scmp.ne.s32.totalorder %s221, %s224
    %p230 = scmp.eq.s32.totalorder %s17, 0
    %p231 = por %p229, %p230
    %p232 = scmp.ne.s32.totalorder %s221, %s224
    %p233 = scmp.eq.s32.totalorder %s22, 7
    %p234 = por %p232, %p233
    %p235 = scmp.ne.s32.totalorder %s224, %s225
    %p236 = scmp.eq.s32.totalorder %s22, 0
    %p237 = por %p235, %p236
    %p238 = scmp.ne.s32.totalorder %s224, %s225
    %p239 = scmp.eq.s32.totalorder %s23, 7
    %p240 = por %p238, %p239
    %p242 = scmp.ne.s32.totalorder %s225, %s241
    %p243 = scmp.eq.s32.totalorder %s23, 0
    %p244 = por %p242, %p243
    %s246 = sadd.s32 %s245, 1
    %p249 = scmp.eq.s32.totalorder %s17, 7
    %p250 = scmp.ne.s32.totalorder %s245, %s247
    %p251 = scmp.eq.s32.totalorder %s17, 0
    %p252 = por %p250, %p251
    %p253 = scmp.ne.s32.totalorder %s245, %s247
    %p254 = scmp.eq.s32.totalorder %s22, 7
    %p255 = por %p253, %p254
    %p256 = scmp.ne.s32.totalorder %s247, %s248
    %p257 = scmp.eq.s32.totalorder %s22, 0
    %p258 = por %p256, %p257
    %p259 = scmp.ne.s32.totalorder %s247, %s248
    %p260 = scmp.eq.s32.totalorder %s23, 7
    %p261 = por %p259, %p260
    %p263 = scmp.ne.s32.totalorder %s248, %s262
    %p264 = scmp.eq.s32.totalorder %s23, 0
    %p265 = por %p263, %p264
    %s267 = sadd.s32 %s266, 1
    %p270 = scmp.eq.s32.totalorder %s17, 7
    %p271 = scmp.ne.s32.totalorder %s266, %s268
    %p272 = scmp.eq.s32.totalorder %s17, 0
    %p273 = por %p271, %p272
    %p274 = scmp.ne.s32.totalorder %s266, %s268
    %p275 = scmp.eq.s32.totalorder %s22, 7
    %p276 = por %p274, %p275
    %p277 = scmp.ne.s32.totalorder %s268, %s269
    %p278 = scmp.eq.s32.totalorder %s22, 0
    %p279 = por %p277, %p278
    %p280 = scmp.ne.s32.totalorder %s268, %s269
    %p281 = scmp.eq.s32.totalorder %s23, 7
    %p282 = por %p280, %p281
    %p284 = scmp.ne.s32.totalorder %s269, %s283
    %p285 = scmp.eq.s32.totalorder %s23, 0
    %p286 = por %p284, %p285
    %s288 = sadd.s32 %s287, 1
    %p291 = scmp.eq.s32.totalorder %s17, 7
    %p292 = scmp.ne.s32.totalorder %s287, %s289
    %p293 = scmp.eq.s32.totalorder %s17, 0
    %p294 = por %p292, %p293
    %p295 = scmp.ne.s32.totalorder %s287, %s289
    %p296 = scmp.eq.s32.totalorder %s22, 7
    %p297 = por %p295, %p296
    %p298 = scmp.ne.s32.totalorder %s289, %s290
    %p299 = scmp.eq.s32.totalorder %s22, 0
    %p300 = por %p298, %p299
    %p301 = scmp.ne.s32.totalorder %s289, %s290
    %p302 = scmp.eq.s32.totalorder %s23, 7
    %p303 = por %p301, %p302
    %p305 = scmp.ne.s32.totalorder %s290, %s304
    %p306 = scmp.eq.s32.totalorder %s23, 0
    %p307 = por %p305, %p306
    %s308 = ssub.s32 %s24, %s36
    %p309 = scmp.eq.s32.totalorder %s308, 0
    %s311 = sadd.s32 %s310, 1
    %s312 = scalar_select %p309, %s310, %s311
    %p315 = pneg %p309
    %p316 = scmp.eq.s32.totalorder %s17, 7
    %p317 = por %p315, %p316
    %p318 = scmp.ne.s32.totalorder %s310, %s313
    %p319 = scmp.eq.s32.totalorder %s17, 0
    %p320 = por %p318, %p319
    %p321 = scmp.ne.s32.totalorder %s310, %s313
    %p322 = scmp.eq.s32.totalorder %s22, 7
    %p323 = por %p321, %p322
    %p324 = scmp.ne.s32.totalorder %s313, %s314
    %p325 = scmp.eq.s32.totalorder %s22, 0
    %p326 = por %p324, %p325
    %p327 = scmp.ne.s32.totalorder %s313, %s314
    %p328 = scmp.eq.s32.totalorder %s23, 7
    %p329 = por %p327, %p328
    %p331 = scmp.ne.s32.totalorder %s314, %s330
    %p332 = scmp.eq.s32.totalorder %s23, 0
    %p333 = por %p331, %p332
    %p334 = scmp.le.s32.totalorder 1, %s17
    %p335 = scmp.lt.s32.totalorder %s17, 9
    %p336 = pnand %p334, %p335
    %p337 = pneg %p336
    // Predicated region
    $region9: #{sa3_fwd.6} parent=5 // pred_check
      _
    $region10: #{sa3_fwd.6} parent=5 // pred_check_branch
      %339 = sbr.rel (%p336) target = $region12
    $region11: #{sa3_fwd.6} parent=5 // pred_region
      %s340 = ssub.s32 %s17, 1
      // Predicated region
      $region13: #{sa3_fwd.6} parent=11 // pred_check
        %p341 = pneg %p258
      $region14: #{sa3_fwd.6} parent=11 // pred_check_branch
        %343 = sbr.rel (%p341) target = $region16
      $region15: #{sa3_fwd.6} parent=11 // pred_region
        _
      $region16: #{sa3_fwd.6} parent=11 // pred_fallthru
        _
      // Predicated region
      $region17: #{sa3_fwd.6} parent=11 // pred_check
        %p344 = pneg %p279
      $region18: #{sa3_fwd.6} parent=11 // pred_check_branch
        %346 = sbr.rel (%p344) target = $region20
      $region19: #{sa3_fwd.6} parent=11 // pred_region
        _
      $region20: #{sa3_fwd.6} parent=11 // pred_fallthru
        _
      // Predicated region
      $region21: #{sa3_fwd.6} parent=11 // pred_check
        %p347 = pneg %p300
      $region22: #{sa3_fwd.6} parent=11 // pred_check_branch
        %349 = sbr.rel (%p347) target = $region24
      $region23: #{sa3_fwd.6} parent=11 // pred_region
        _
      $region24: #{sa3_fwd.6} parent=11 // pred_fallthru
        _
    $region12: #{sa3_fwd.6} parent=5 // pred_fallthru
      _
    %p350 = scmp.lt.s32.totalorder %s17, 8
    // Predicated region
    $region25: #{sa3_fwd.6} parent=5 // pred_check
      %p351 = pneg %p350
    $region26: #{sa3_fwd.6} parent=5 // pred_check_branch
      %353 = sbr.rel (%p351) target = $region28
    $region27: #{sa3_fwd.6} parent=5 // pred_region
      // Predicated region
      $region29: #{sa3_fwd.6} parent=27 // pred_check
        %p354 = pneg %p49
      $region30: #{sa3_fwd.6} parent=27 // pred_check_branch
        %356 = sbr.rel (%p354) target = $region32
      $region31: #{sa3_fwd.6} parent=27 // pred_region
        %p357 = scmp.lt.s32.totalorder %s24, 1
        %s358 = scalar_select %p357, %s24, 1
        %s359 = smul.addr %s358, 8
        %s360 = scalar_lea.vmem %s0, %s359
      $region32: #{sa3_fwd.6} parent=27 // pred_fallthru
        _
      // Predicated region
      $region33: #{sa3_fwd.6} parent=27 // pred_check
        %p361 = pneg %p75
      $region34: #{sa3_fwd.6} parent=27 // pred_check_branch
        %363 = sbr.rel (%p361) target = $region36
      $region35: #{sa3_fwd.6} parent=27 // pred_region
        %p364 = scmp.lt.s32.totalorder %s25, 3
        %s365 = scalar_select %p364, %s25, 3
        %s366 = smul.addr %s365, 8
        %s367 = smul.addr %s366, 4
        %s368 = scalar_lea.vmem %s1, %s367
      $region36: #{sa3_fwd.6} parent=27 // pred_fallthru
        _
      // Predicated region
      $region37: #{sa3_fwd.6} parent=27 // pred_check
        %p369 = pneg %p101
      $region38: #{sa3_fwd.6} parent=27 // pred_check_branch
        %371 = sbr.rel (%p369) target = $region40
      $region39: #{sa3_fwd.6} parent=27 // pred_region
        %p372 = scmp.lt.s32.totalorder %s25, 3
        %s373 = scalar_select %p372, %s25, 3
        %s374 = scalar_lea.vmem %s2, %s373
      $region40: #{sa3_fwd.6} parent=27 // pred_fallthru
        _
      // Predicated region
      $region41: #{sa3_fwd.6} parent=27 // pred_check
        %p375 = pneg %p127
      $region42: #{sa3_fwd.6} parent=27 // pred_check_branch
        %377 = sbr.rel (%p375) target = $region44
      $region43: #{sa3_fwd.6} parent=27 // pred_region
        %p378 = scmp.lt.s32.totalorder %s25, 3
        %s379 = scalar_select %p378, %s25, 3
        %s380 = smul.addr %s379, 8
        %s381 = smul.addr %s380, 4
        %s382 = scalar_lea.vmem %s3, %s381
      $region44: #{sa3_fwd.6} parent=27 // pred_fallthru
        _
      // Predicated region
      $region45: #{sa3_fwd.6} parent=27 // pred_check
        %p383 = pneg %p153
      $region46: #{sa3_fwd.6} parent=27 // pred_check_branch
        %385 = sbr.rel (%p383) target = $region48
      $region47: #{sa3_fwd.6} parent=27 // pred_region
        %p386 = scmp.lt.s32.totalorder %s25, 3
        %s387 = scalar_select %p386, %s25, 3
        %s388 = scalar_lea.vmem %s4, %s387
      $region48: #{sa3_fwd.6} parent=27 // pred_fallthru
        _
      // Predicated region
      $region49: #{sa3_fwd.6} parent=27 // pred_check
        %p389 = pneg %p179
      $region50: #{sa3_fwd.6} parent=27 // pred_check_branch
        %391 = sbr.rel (%p389) target = $region52
      $region51: #{sa3_fwd.6} parent=27 // pred_region
        %p392 = scmp.lt.s32.totalorder %s25, 3
        %s393 = scalar_select %p392, %s25, 3
        %s394 = smul.addr %s393, 8
        %s395 = smul.addr %s394, 4
        %s396 = scalar_lea.vmem %s5, %s395
      $region52: #{sa3_fwd.6} parent=27 // pred_fallthru
        _
      // Predicated region
      $region53: #{sa3_fwd.6} parent=27 // pred_check
        %p397 = pneg %p205
      $region54: #{sa3_fwd.6} parent=27 // pred_check_branch
        %399 = sbr.rel (%p397) target = $region56
      $region55: #{sa3_fwd.6} parent=27 // pred_region
        %p400 = scmp.lt.s32.totalorder %s25, 3
        %s401 = scalar_select %p400, %s25, 3
        %s402 = scalar_lea.vmem %s6, %s401
      $region56: #{sa3_fwd.6} parent=27 // pred_fallthru
        _
      // Predicated region
      $region57: #{sa3_fwd.6} parent=27 // pred_check
        %p403 = pneg %p231
      $region58: #{sa3_fwd.6} parent=27 // pred_check_branch
        %405 = sbr.rel (%p403) target = $region60
      $region59: #{sa3_fwd.6} parent=27 // pred_region
        %p406 = scmp.lt.s32.totalorder %s25, 3
        %s407 = scalar_select %p406, %s25, 3
        %s408 = smul.addr %s407, 2
        %s409 = smul.addr %s408, 4
        %s410 = scalar_lea.vmem %s7, %s409
      $region60: #{sa3_fwd.6} parent=27 // pred_fallthru
        _
    $region28: #{sa3_fwd.6} parent=5 // pred_fallthru
      _
    %p411 = scmp.le.s32.totalorder 1, %s17
    %p412 = scmp.lt.s32.totalorder %s17, 9
    %p413 = pnand %p411, %p412
    %p414 = pneg %p413
    // Predicated region
    $region61: #{sa3_fwd.6} parent=5 // pred_check
      _
    $region62: #{sa3_fwd.6} parent=5 // pred_check_branch
      %416 = sbr.rel (%p413) target = $region64
    $region63: #{sa3_fwd.6} parent=5 // pred_region
      %s417 = ssub.s32 %s17, 1
      %p418 = scmp.lt.s32.totalorder %s26, 1
      %s419 = scalar_select %p418, %s26, 1
      %s420 = smul.addr %s419, 8
      %s421 = scalar_lea.vmem %s0, %s420
      %p422 = pneg %p55
      %p423 = pneg %p52
      %p424 = scmp.lt.s32.totalorder %s27, 3
      %s425 = scalar_select %p424, %s27, 3
      %s426 = smul.addr %s425, 8
      %s427 = smul.addr %s426, 4
      %s428 = scalar_lea.vmem %s1, %s427
      %p429 = pneg %p81
      %p430 = pneg %p78
      %p431 = scmp.lt.s32.totalorder %s27, 3
      %s432 = scalar_select %p431, %s27, 3
      %s433 = scalar_lea.vmem %s2, %s432
      %p434 = pneg %p107
      %p435 = pneg %p104
      %p436 = scmp.lt.s32.totalorder %s27, 3
      %s437 = scalar_select %p436, %s27, 3
      %s438 = smul.addr %s437, 8
      %s439 = smul.addr %s438, 4
      %s440 = scalar_lea.vmem %s3, %s439
      %p441 = pneg %p133
      %p442 = pneg %p130
      %p443 = scmp.lt.s32.totalorder %s27, 3
      %s444 = scalar_select %p443, %s27, 3
      %s445 = scalar_lea.vmem %s4, %s444
      %p446 = pneg %p159
      %p447 = pneg %p156
      %p448 = scmp.lt.s32.totalorder %s27, 3
      %s449 = scalar_select %p448, %s27, 3
      %s450 = smul.addr %s449, 8
      %s451 = smul.addr %s450, 4
      %s452 = scalar_lea.vmem %s5, %s451
      %p453 = pneg %p185
      %p454 = pneg %p182
      %p455 = scmp.lt.s32.totalorder %s27, 3
      %s456 = scalar_select %p455, %s27, 3
      %s457 = scalar_lea.vmem %s6, %s456
      %p458 = pneg %p211
      %p459 = pneg %p208
      %p460 = scmp.lt.s32.totalorder %s27, 3
      %s461 = scalar_select %p460, %s27, 3
      %s462 = smul.addr %s461, 2
      %s463 = smul.addr %s462, 4
      %s464 = scalar_lea.vmem %s7, %s463
      %p465 = pneg %p237
      %p466 = pneg %p234
      %p467 = pneg %p258
      %p468 = pneg %p255
      %p469 = pneg %p279
      %p470 = pneg %p276
      %p471 = pneg %p300
      %p472 = pneg %p297
      %p473 = pneg %p326
      %p474 = pneg %p323
      %p475 = scmp.lt.s32.totalorder %s26, 1
      %s476 = scalar_select %p475, %s26, 1
      %s477 = smul.addr %s476, 8
      %s478 = scalar_lea.vmem %s11, %s477
      %p479 = scmp.lt.s32.totalorder %s26, 1
      %s480 = scalar_select %p479, %s26, 1
      %s481 = smul.addr %s480, 8
      %s482 = scalar_lea.vmem %s0, %s481
      %p483 = scmp.lt.s32.totalorder %s27, 3
      %s484 = scalar_select %p483, %s27, 3
      %s485 = smul.addr %s484, 8
      %s486 = smul.addr %s485, 4
      %s487 = scalar_lea.vmem %s1, %s486
      %p488 = scmp.lt.s32.totalorder %s27, 3
      %s489 = scalar_select %p488, %s27, 3
      %s490 = scalar_lea.vmem %s2, %s489
      %p491 = scmp.lt.s32.totalorder %s27, 3
      %s492 = scalar_select %p491, %s27, 3
      %s493 = smul.addr %s492, 8
      %s494 = smul.addr %s493, 4
      %s495 = scalar_lea.vmem %s3, %s494
      %p496 = scmp.lt.s32.totalorder %s27, 3
      %s497 = scalar_select %p496, %s27, 3
      %s498 = scalar_lea.vmem %s4, %s497
      %p499 = scmp.lt.s32.totalorder %s27, 3
      %s500 = scalar_select %p499, %s27, 3
      %s501 = smul.addr %s500, 8
      %s502 = smul.addr %s501, 4
      %s503 = scalar_lea.vmem %s5, %s502
      %p504 = scmp.lt.s32.totalorder %s27, 3
      %s505 = scalar_select %p504, %s27, 3
      %s506 = scalar_lea.vmem %s6, %s505
      %p507 = scmp.lt.s32.totalorder %s27, 3
      %s508 = scalar_select %p507, %s27, 3
      %s509 = smul.addr %s508, 2
      %s510 = smul.addr %s509, 4
      %s511 = scalar_lea.vmem %s7, %s510
      %p512 = scmp.lt.s32.totalorder %s26, 1
      %s513 = scalar_select %p512, %s26, 1
      %s514 = smul.addr %s513, 8
      %s515 = scalar_lea.vmem %s11, %s514
      %v517 = vld [vmem:[%s482] sm:$0xff]
      %v518 = vpack.c.bf16 %v517, %v517
      %v519 = vld [vmem:[%s487] sm:$0xf]
      %v520 = vld [vmem:[%s487 + $0x4] sm:$0xf]
      %v521 = vld [vmem:[%s487 + $0x8] sm:$0xf]
      %v522 = vld [vmem:[%s487 + $0xc] sm:$0xf]
      %v523 = vld [vmem:[%s487 + $0x10] sm:$0xf]
      %v524 = vld [vmem:[%s487 + $0x14] sm:$0xf]
      %v525 = vld [vmem:[%s487 + $0x18] sm:$0xf]
      %v526 = vld [vmem:[%s487 + $0x1c] sm:$0xf]
      %v527 = vld [vmem:[%s490] sm:$0x1]
      %v529 = vperm.slane %v527, 0
      %v539 = vunpack.c.l.b16 %v519
      %v540 = vunpack.c.l.b16 %v520
      %v541 = vunpack.c.l.b16 %v521
      %v542 = vunpack.c.l.b16 %v522
      %v543 = vunpack.c.l.b16 %v523
      %v544 = vunpack.c.l.b16 %v524
      %v545 = vunpack.c.l.b16 %v525
      %v546 = vunpack.c.l.b16 %v526
      %v547 = vpack.c.b16 %v540, %v539
      %v548 = vpack.c.b16 %v542, %v541
      %v549 = vpack.c.b16 %v544, %v543
      %v550 = vpack.c.b16 %v546, %v545
      %vm555 = vcmask 523264
      %v557 = vsel %vm555, %v518, 0
      %559 = vmatpush.bf16.msra.mxu0 0
      %560 = vmatpush.bf16.msra.mxu0 0
      %561 = vmatpush.bf16.msra.mxu0 0
      %562 = vmatpush.bf16.msra.mxu0 0
      %563 = vmatpush.bf16.msra.mxu0 %v550
      %564 = vmatpush.bf16.msra.mxu0 %v549
      %565 = vmatpush.bf16.msra.mxu0 %v548
      %566 = vmatpush.bf16.msra.mxu0 %v547
      %567 = vmatmul.bf16.gmra.mxu0 %v557
      %v568 = vpop.f32.mrf.mxu0
      %v569 = vadd.f32 %v529, %v568
      %v570 = vpop.f32.mrf.mxu0
      %571 = vdwg.mxu0
      %v572 = vld [vmem:[%s495] sm:$0xf]
      %v573 = vld [vmem:[%s495 + $0x4] sm:$0xf]
      %v574 = vld [vmem:[%s495 + $0x8] sm:$0xf]
      %v575 = vld [vmem:[%s495 + $0xc] sm:$0xf]
      %v576 = vld [vmem:[%s495 + $0x10] sm:$0xf]
      %v577 = vld [vmem:[%s495 + $0x14] sm:$0xf]
      %v578 = vld [vmem:[%s495 + $0x18] sm:$0xf]
      %v579 = vld [vmem:[%s495 + $0x1c] sm:$0xf]
      %v580 = vld [vmem:[%s498] sm:$0x1]
      %v582 = vperm.slane %v580, 0
      %v592 = vunpack.c.l.b16 %v572
      %v593 = vunpack.c.l.b16 %v573
      %v594 = vunpack.c.l.b16 %v574
      %v595 = vunpack.c.l.b16 %v575
      %v596 = vunpack.c.l.b16 %v576
      %v597 = vunpack.c.l.b16 %v577
      %v598 = vunpack.c.l.b16 %v578
      %v599 = vunpack.c.l.b16 %v579
      %v600 = vpack.c.b16 %v593, %v592
      %v601 = vpack.c.b16 %v595, %v594
      %v602 = vpack.c.b16 %v597, %v596
      %v603 = vpack.c.b16 %v599, %v598
      %608 = vmatpush.bf16.msra.mxu0 0
      %609 = vmatpush.bf16.msra.mxu0 0
      %610 = vmatpush.bf16.msra.mxu0 0
      %611 = vmatpush.bf16.msra.mxu0 0
      %612 = vmatpush.bf16.msra.mxu0 %v603
      %613 = vmatpush.bf16.msra.mxu0 %v602
      %614 = vmatpush.bf16.msra.mxu0 %v601
      %615 = vmatpush.bf16.msra.mxu0 %v600
      %616 = vmatmul.bf16.gmra.mxu0 %v557
      %v617 = vpop.f32.mrf.mxu0
      %v618 = vadd.f32 %v582, %v617
      %v619 = vpop.f32.mrf.mxu0
      %620 = vdwg.mxu0
      %v621 = vld [vmem:[%s503] sm:$0xf]
      %v622 = vld [vmem:[%s503 + $0x4] sm:$0xf]
      %v623 = vld [vmem:[%s503 + $0x8] sm:$0xf]
      %v624 = vld [vmem:[%s503 + $0xc] sm:$0xf]
      %v625 = vld [vmem:[%s503 + $0x10] sm:$0xf]
      %v626 = vld [vmem:[%s503 + $0x14] sm:$0xf]
      %v627 = vld [vmem:[%s503 + $0x18] sm:$0xf]
      %v628 = vld [vmem:[%s503 + $0x1c] sm:$0xf]
      %v629 = vld [vmem:[%s506] sm:$0x1]
      %v631 = vperm.slane %v629, 0
      %v641 = vunpack.c.l.b16 %v621
      %v642 = vunpack.c.l.b16 %v622
      %v643 = vunpack.c.l.b16 %v623
      %v644 = vunpack.c.l.b16 %v624
      %v645 = vunpack.c.l.b16 %v625
      %v646 = vunpack.c.l.b16 %v626
      %v647 = vunpack.c.l.b16 %v627
      %v648 = vunpack.c.l.b16 %v628
      %v649 = vpack.c.b16 %v642, %v641
      %v650 = vpack.c.b16 %v644, %v643
      %v651 = vpack.c.b16 %v646, %v645
      %v652 = vpack.c.b16 %v648, %v647
      %657 = vmatpush.bf16.msra.mxu0 0
      %658 = vmatpush.bf16.msra.mxu0 0
      %659 = vmatpush.bf16.msra.mxu0 0
      %660 = vmatpush.bf16.msra.mxu0 0
      %661 = vmatpush.bf16.msra.mxu0 %v652
      %662 = vmatpush.bf16.msra.mxu0 %v651
      %663 = vmatpush.bf16.msra.mxu0 %v650
      %664 = vmatpush.bf16.msra.mxu0 %v649
      %665 = vmatmul.bf16.gmra.mxu0 %v557
      %v666 = vpop.f32.mrf.mxu0
      %v667 = vadd.f32 %v631, %v666
      %v668 = vpop.f32.mrf.mxu0
      %669 = vdwg.mxu0
      %v670 = vmul.f32 %v569, 0.25
      %v671 = vpack.c.bf16 %v670, %v670
      %v672 = vpack.c.bf16 %v618, %v618
      %vm673 = vcmask 130048
      %v675 = vsel %vm673, %v671, 0
      %v678 = vsel %vm673, %v672, 0
      %680 = vmatpush.bf16.xpose.msra.mxu0 0
      %681 = vmatpush.bf16.xpose.msra.mxu0 0
      %682 = vmatpush.bf16.xpose.msra.mxu0 0
      %683 = vmatpush.bf16.xpose.msra.mxu0 0
      %684 = vmatpush.bf16.xpose.msra.mxu0 0
      %685 = vmatpush.bf16.xpose.msra.mxu0 0
      %686 = vmatpush.bf16.xpose.msra.mxu0 0
      %687 = vmatpush.bf16.xpose.msra.mxu0 %v678
      %688 = vmatmul.bf16.gmra.mxu0 %v675
      %v689 = vpop.f32.mrf.mxu0
      %v690 = vadd.f32 0.0, %v689
      %v691 = vpop.f32.mrf.mxu0
      %692 = vdwg.mxu0
      %vm693 = vcmask 64512
      %v694 = vsel %vm693, %v690, -inf
      %695 = vmax.xlane.f32.xlu0 %v694
      %v696 = vpop.xlane.xlu0 %695
      %v697 = vsub.f32 %v690, %v696
      %v698 = vmul.f32 %v697, 1.442695
      %v699 = vpow.pop %v698
      %v700 = vsel %vm693, %v699, 0.0
      %701 = vadd.xlane.f32.xlu0 %v700
      %v702 = vpop.xlane.xlu0 %701
      %v703 = vrcp.pop %v702
      %v704 = vmul.f32 %v699, %v703
      %v705 = vpack.c.bf16 %v704, %v704
      %v706 = vpack.c.bf16 %v667, %v667
      %v708 = vsel %vm693, %v705, 0
      %vm710 = vcmask 1043456
      %v712 = vsel %vm710, %v706, 0
      %714 = vmatpush.bf16.msra.mxu0 0
      %715 = vmatpush.bf16.msra.mxu0 0
      %716 = vmatpush.bf16.msra.mxu0 0
      %717 = vmatpush.bf16.msra.mxu0 0
      %718 = vmatpush.bf16.msra.mxu0 0
      %719 = vmatpush.bf16.msra.mxu0 0
      %720 = vmatpush.bf16.msra.mxu0 0
      %721 = vmatpush.bf16.msra.mxu0 %v712
      %722 = vmatmul.bf16.gmra.mxu0 %v708
      %v723 = vpop.f32.mrf.mxu0
      %v724 = vadd.f32 0.0, %v723
      %v725 = vpop.f32.mrf.mxu0
      %726 = vdwg.mxu0
      %v727 = vpack.c.bf16 %v724, %v724
      %v728 = vld [vmem:[%s511] sm:$0xf]
      %v729 = vld [vmem:[%s511 + $0x4] sm:$0xf]
      %v732 = vunpack.c.l.b16 %v728
      %v733 = vunpack.c.l.b16 %v729
      %v734 = vpack.c.b16 %v733, %v732
      %v737 = vsel %vm673, %v727, 0
      %739 = vmatpush.bf16.msra.mxu0 0
      %740 = vmatpush.bf16.msra.mxu0 0
      %741 = vmatpush.bf16.msra.mxu0 0
      %742 = vmatpush.bf16.msra.mxu0 0
      %743 = vmatpush.bf16.msra.mxu0 0
      %744 = vmatpush.bf16.msra.mxu0 0
      %745 = vmatpush.bf16.msra.mxu0 0
      %746 = vmatpush.bf16.msra.mxu0 %v734
      %747 = vmatmul.bf16.gmra.mxu0 %v737
      %v748 = vpop.f32.mrf.mxu0
      %v749 = vadd.f32 0.0, %v748
      %v750 = vpop.f32.mrf.mxu0
      %751 = vdwg.mxu0
      %p752 = scmp.eq.s32.totalorder %s27, 0
      // Predicated region
      $region65: #{sa3_fwd.6} parent=63 // pred_check
        %p753 = pneg %p752
      $region66: #{sa3_fwd.6} parent=63 // pred_check_branch
        %755 = sbr.rel (%p753) target = $region68
      $region67: #{sa3_fwd.6} parent=63 // pred_region
        %756 = vst.msk [vmem:[%s515] sm:$0xff] %vm555, %v749
      $region68: #{sa3_fwd.6} parent=63 // pred_fallthru
        _
      %p757 = scmp.ne.s32.totalorder %s27, 0
      // Predicated region
      $region69: #{sa3_fwd.6} parent=63 // pred_check
        %p758 = pneg %p757
      $region70: #{sa3_fwd.6} parent=63 // pred_check_branch
        %760 = sbr.rel (%p758) target = $region72
      $region71: #{sa3_fwd.6} parent=63 // pred_region
        %v761 = vld [vmem:[%s515] sm:$0xff]
        %v762 = vadd.f32 %v761, %v749
        %763 = vst.msk [vmem:[%s515] sm:$0xff] %vm555, %v762
      $region72: #{sa3_fwd.6} parent=63 // pred_fallthru
        _
      %p764 = scmp.eq.s32.totalorder %s27, 3
      // Predicated region
      $region73: #{sa3_fwd.6} parent=63 // pred_check
        %p765 = pneg %p764
      $region74: #{sa3_fwd.6} parent=63 // pred_check_branch
        %767 = sbr.rel (%p765) target = $region76
      $region75: #{sa3_fwd.6} parent=63 // pred_region
        %v768 = vld [vmem:[%s515] sm:$0xff]
        %v769 = vadd.f32 %v517, %v768
        %v770 = vld [vmem:[%s8] sm:$0x1]
        %v772 = vperm.slane %v770, 0
        %v774 = vadd.f32 %v769, %v772
        %v775 = vld [vmem:[%s9] sm:$0x1]
        %v776 = vld [vmem:[%s10] sm:$0x1]
        %v777 = vsel %vm555, %v774, 0.0
        %778 = vadd.xlane.f32.xlu0 %v777
        %v779 = vpop.xlane.xlu0 %778
        %v780 = vrcp.pop 64.0
        %v781 = vmul.f32 64.0, %v780
        %v782 = vsub.f32 1.0, %v781
        %v783 = vmul.f32 %v780, %v782
        %v784 = vadd.f32 %v780, %v783
        %vm785 = vweird.f32 %v780
        %v786 = vsel %vm785, %v780, %v784
        %v787 = vmul.f32 %v779, %v786
        %v788 = vsub.f32 %v774, %v787
        %v789 = vmul.f32 %v788, %v788
        %v790 = vsel %vm555, %v789, 0.0
        %791 = vadd.xlane.f32.xlu0 %v790
        %v792 = vpop.xlane.xlu0 %791
        %v793 = vmul.f32 %v792, 0.015873017
        %v794 = vrsqrt.pop %v793
        %v795 = vmul.f32 %v794, %v793
        %v796 = vmul.f32 %v795, %v794
        %v797 = vmul.f32 0.5, %v796
        %v798 = vsub.f32 1.5, %v797
        %v799 = vmul.f32 %v794, %v798
        %v800 = vmul.f32 %v793, %v799
        %vm801 = vcmp.eq.f32.partialorder %v793, inf
        %v802 = vsel %vm801, %v793, %v800
        %vm803 = vcmp.eq.f32.partialorder %v793, 0.0
        %v804 = vand.u32 %v793, 2147483648
        %v805 = vsel %vm803, %v804, %v802
        %v807 = vperm.slane %v775, 0
        %v809 = vmul.f32 %v807, %v788
        %v810 = vadd.f32 %v805, 1e-06
        %v811 = vrcp.pop %v810
        %v812 = vmul.f32 %v809, %v811
        %v814 = vperm.slane %v776, 0
        %v816 = vadd.f32 %v812, %v814
        %817 = vst.msk [vmem:[%s515] sm:$0xff] %vm555, %v816
      $region76: #{sa3_fwd.6} parent=63 // pred_fallthru
        _
      %p818 = scmp.lt.s32.totalorder %s26, 1
      %s819 = scalar_select %p818, %s26, 1
      %s820 = smul.addr %s819, 8
      %s821 = scalar_lea.vmem %s11, %s820
      // Predicated region
      $region77: #{sa3_fwd.6} parent=63 // pred_check
        %p822 = pneg %p323
      $region78: #{sa3_fwd.6} parent=63 // pred_check_branch
        %824 = sbr.rel (%p822) target = $region80
      $region79: #{sa3_fwd.6} parent=63 // pred_region
        _
      $region80: #{sa3_fwd.6} parent=63 // pred_fallthru
        _
    $region64: #{sa3_fwd.6} parent=5 // pred_fallthru
      _
    %p825 = scmp.le.s32.totalorder 2, %s17
    // Predicated region
    $region81: #{sa3_fwd.6} parent=5 // pred_check
      %p826 = pneg %p825
    $region82: #{sa3_fwd.6} parent=5 // pred_check_branch
      %828 = sbr.rel (%p826) target = $region84
    $region83: #{sa3_fwd.6} parent=5 // pred_region
      %s829 = ssub.s32 %s17, 2
      // Predicated region
      $region85: #{sa3_fwd.6} parent=83 // pred_check
        %p830 = pneg %p329
      $region86: #{sa3_fwd.6} parent=83 // pred_check_branch
        %832 = sbr.rel (%p830) target = $region88
      $region87: #{sa3_fwd.6} parent=83 // pred_region
        %p833 = scmp.lt.s32.totalorder %s28, 1
        %s834 = scalar_select %p833, %s28, 1
        %s835 = smul.addr %s834, 8
        %s836 = scalar_lea.vmem %s11, %s835
      $region88: #{sa3_fwd.6} parent=83 // pred_fallthru
        _
    $region84: #{sa3_fwd.6} parent=5 // pred_fallthru
      _
  $region6: #{sa3_fwd.6} parent=0 // loop_footer
    %s21 = sadd.s32 1, %s17
  $region7: #{sa3_fwd.6} parent=0 // loop_footer_branch
    %16 = sbr.rel target = $region3
  $region8: #{sa3_fwd.6} parent=0 // loop_exit
    _

// kernel: sa3_fwd.11
$region0: #{sa3_fwd.11}
  #allocation0 [shape = 'u32[]', space=smem, size = 0x4, offset = 0x4, fixed_abs, tag = 'smem constant byte address 0x4 - core index']
  #allocation1 [shape = 'u32[72,128]{1,0:T(1,128)}', space=vmem, size = 0x9000, scoped, tag = 'internal scratch']
  %s0 = inlined_call_operand.vmem [shape: f32[32,128], index: 0, kind: input, shape index: {}]
  %s1 = inlined_call_operand.vmem [shape: f32[16,64], index: 1, kind: input, shape index: {}]
  %s2 = inlined_call_operand.vmem [shape: bf16[128,64], index: 2, kind: input, shape index: {}]
  %s3 = inlined_call_operand.vmem [shape: f32[1,64], index: 3, kind: input, shape index: {}]
  %s4 = inlined_call_operand.vmem [shape: bf16[64,64], index: 4, kind: input, shape index: {}]
  %s5 = inlined_call_operand.vmem [shape: f32[1,64], index: 5, kind: input, shape index: {}]
  %s6 = inlined_call_operand.vmem [shape: bf16[64,32], index: 6, kind: input, shape index: {}]
  %s7 = inlined_call_operand.vmem [shape: f32[1,32], index: 7, kind: input, shape index: {}]
  %s8 = inlined_call_operand.vmem [shape: bf16[32,16], index: 8, kind: input, shape index: {}]
  %s9 = inlined_call_operand.vmem [shape: f32[1,16], index: 9, kind: input, shape index: {}]
  %s10 = inlined_call_operand.hbm [shape: f32[32,16], index: 10, kind: output, shape index: {0}]
  %s11 = inlined_call_operand.hbm [shape: f32[16,16], index: 11, kind: output, shape index: {1}]
  %12 = xla_tuple %s10, %s11
  %s13 = sld [smem:[#allocation0]]
  $region58: #{sa3_fwd.11} parent=0
    _
  %s15 = ssub.s32 1, %s13
  %s16 = scalar_select 0, %s15, %s13
  $region1: #{sa3_fwd.11} parent=0
    #allocation2 [shape = 'u8[16384]{0}', space=vmem, size = 0x4000, scoped, tag = 'output window, operand 0, single buffered']
    #allocation3 [shape = 's32[1]{0}', space=sflag, size = 0x4, scoped, tag = 'scoped memory for sa3_fwd.11']
    #allocation4 [shape = 'u8[8192]{0}', space=vmem, size = 0x2000, scoped, tag = 'output window, operand 1, single buffered']
    #allocation5 [shape = 's32[1]{0}', space=sflag, size = 0x4, scoped, tag = 'scoped memory for sa3_fwd.11']
    %17 = vsyncpa [#allocation3], 0
    %18 = vsyncpa [#allocation5], 0
    // Predicated region
    $region2: #{sa3_fwd.11} parent=1 // pred_check
      _
    $region3: #{sa3_fwd.11} parent=1 // pred_check_branch
      %20 = sbr.rel (0) target = $region5
    $region4: #{sa3_fwd.11} parent=1 // pred_region
      _
    $region5: #{sa3_fwd.11} parent=1 // pred_fallthru
      _
    // Predicated region
    $region6: #{sa3_fwd.11} parent=1 // pred_check
      _
    $region7: #{sa3_fwd.11} parent=1 // pred_check_branch
      %22 = sbr.rel (0) target = $region9
    $region8: #{sa3_fwd.11} parent=1 // pred_region
      _
    $region9: #{sa3_fwd.11} parent=1 // pred_fallthru
      _
    // Predicated region
    $region10: #{sa3_fwd.11} parent=1 // pred_check
      _
    $region11: #{sa3_fwd.11} parent=1 // pred_check_branch
      %24 = sbr.rel (0) target = $region13
    $region12: #{sa3_fwd.11} parent=1 // pred_region
      _
    $region13: #{sa3_fwd.11} parent=1 // pred_fallthru
      _
    // Predicated region
    $region14: #{sa3_fwd.11} parent=1 // pred_check
      _
    $region15: #{sa3_fwd.11} parent=1 // pred_check_branch
      %26 = sbr.rel (0) target = $region17
    $region16: #{sa3_fwd.11} parent=1 // pred_region
      _
    $region17: #{sa3_fwd.11} parent=1 // pred_fallthru
      _
    // Predicated region
    $region18: #{sa3_fwd.11} parent=1 // pred_check
      _
    $region19: #{sa3_fwd.11} parent=1 // pred_check_branch
      %28 = sbr.rel (0) target = $region21
    $region20: #{sa3_fwd.11} parent=1 // pred_region
      _
    $region21: #{sa3_fwd.11} parent=1 // pred_fallthru
      _
    // Predicated region
    $region22: #{sa3_fwd.11} parent=1 // pred_check
      _
    $region23: #{sa3_fwd.11} parent=1 // pred_check_branch
      %30 = sbr.rel (0) target = $region25
    $region24: #{sa3_fwd.11} parent=1 // pred_region
      _
    $region25: #{sa3_fwd.11} parent=1 // pred_fallthru
      _
    // Predicated region
    $region26: #{sa3_fwd.11} parent=1 // pred_check
      _
    $region27: #{sa3_fwd.11} parent=1 // pred_check_branch
      %32 = sbr.rel (0) target = $region29
    $region28: #{sa3_fwd.11} parent=1 // pred_region
      _
    $region29: #{sa3_fwd.11} parent=1 // pred_fallthru
      _
    // Predicated region
    $region30: #{sa3_fwd.11} parent=1 // pred_check
      _
    $region31: #{sa3_fwd.11} parent=1 // pred_check_branch
      %34 = sbr.rel (0) target = $region33
    $region32: #{sa3_fwd.11} parent=1 // pred_region
      _
    $region33: #{sa3_fwd.11} parent=1 // pred_fallthru
      _
    // Predicated region
    $region34: #{sa3_fwd.11} parent=1 // pred_check
      _
    $region35: #{sa3_fwd.11} parent=1 // pred_check_branch
      %36 = sbr.rel (0) target = $region37
    $region36: #{sa3_fwd.11} parent=1 // pred_region
      _
    $region37: #{sa3_fwd.11} parent=1 // pred_fallthru
      _
    // Predicated region
    $region38: #{sa3_fwd.11} parent=1 // pred_check
      _
    $region39: #{sa3_fwd.11} parent=1 // pred_check_branch
      %38 = sbr.rel (0) target = $region41
    $region40: #{sa3_fwd.11} parent=1 // pred_region
      _
    $region41: #{sa3_fwd.11} parent=1 // pred_fallthru
      _
    %v40 = vld [vmem:[%s0] sm:$0xff]
    %v41 = vld [vmem:[%s0 + $0x8] sm:$0xff]
    %v42 = vld [vmem:[%s0 + $0x10] sm:$0xff]
    %v43 = vld [vmem:[%s0 + $0x18] sm:$0xff]
    %v44 = vpack.c.bf16 %v41, %v40
    %v45 = vpack.c.bf16 %v43, %v42
    %v46 = vld [vmem:[%s2] sm:$0xf]
    %v47 = vld [vmem:[%s2 + $0x4] sm:$0xf]
    %v48 = vld [vmem:[%s2 + $0x8] sm:$0xf]
    %v49 = vld [vmem:[%s2 + $0xc] sm:$0xf]
    %v50 = vld [vmem:[%s2 + $0x10] sm:$0xf]
    %v51 = vld [vmem:[%s2 + $0x14] sm:$0xf]
    %v52 = vld [vmem:[%s2 + $0x18] sm:$0xf]
    %v53 = vld [vmem:[%s2 + $0x1c] sm:$0xf]
    %v54 = vld [vmem:[%s2 + $0x20] sm:$0xf]
    %v55 = vld [vmem:[%s2 + $0x24] sm:$0xf]
    %v56 = vld [vmem:[%s2 + $0x28] sm:$0xf]
    %v57 = vld [vmem:[%s2 + $0x2c] sm:$0xf]
    %v58 = vld [vmem:[%s2 + $0x30] sm:$0xf]
    %v59 = vld [vmem:[%s2 + $0x34] sm:$0xf]
    %v60 = vld [vmem:[%s2 + $0x38] sm:$0xf]
    %v61 = vld [vmem:[%s2 + $0x3c] sm:$0xf]
    %v62 = vld [vmem:[%s3] sm:$0x1]
    %v64 = vperm.slane %v62, 0
    %v82 = vunpack.c.l.b16 %v46
    %v83 = vunpack.c.l.b16 %v47
    %v84 = vunpack.c.l.b16 %v48
    %v85 = vunpack.c.l.b16 %v49
    %v86 = vunpack.c.l.b16 %v50
    %v87 = vunpack.c.l.b16 %v51
    %v88 = vunpack.c.l.b16 %v52
    %v89 = vunpack.c.l.b16 %v53
    %v90 = vunpack.c.l.b16 %v54
    %v91 = vunpack.c.l.b16 %v55
    %v92 = vunpack.c.l.b16 %v56
    %v93 = vunpack.c.l.b16 %v57
    %v94 = vunpack.c.l.b16 %v58
    %v95 = vunpack.c.l.b16 %v59
    %v96 = vunpack.c.l.b16 %v60
    %v97 = vunpack.c.l.b16 %v61
    %v98 = vpack.c.b16 %v83, %v82
    %v99 = vpack.c.b16 %v85, %v84
    %v100 = vpack.c.b16 %v87, %v86
    %v101 = vpack.c.b16 %v89, %v88
    %v102 = vpack.c.b16 %v91, %v90
    %v103 = vpack.c.b16 %v93, %v92
    %v104 = vpack.c.b16 %v95, %v94
    %v105 = vpack.c.b16 %v97, %v96
    %114 = vmatpush.bf16.msra.mxu0 %v105
    %115 = vmatpush.bf16.msra.mxu0 %v104
    %116 = vmatpush.bf16.msra.mxu0 %v103
    %117 = vmatpush.bf16.msra.mxu0 %v102
    %118 = vmatpush.bf16.msra.mxu0 %v101
    %119 = vmatpush.bf16.msra.mxu0 %v100
    %120 = vmatpush.bf16.msra.mxu0 %v99
    %121 = vmatpush.bf16.msra.mxu0 %v98
    %122 = vmatmul.bf16.gmra.mxu0 %v44
    %v123 = vpop.f32.mrf.mxu0
    %v124 = vadd.f32 %v64, %v123
    %v125 = vpop.f32.mrf.mxu0
    %v126 = vadd.f32 %v64, %v125
    %127 = vmatmul.bf16.gmra.mxu0 %v45
    %v128 = vpop.f32.mrf.mxu0
    %v129 = vadd.f32 %v64, %v128
    %v130 = vpop.f32.mrf.mxu0
    %v131 = vadd.f32 %v64, %v130
    %132 = vdwg.mxu0
    %v133 = vld [vmem:[%s1] sm:$0xff]
    %v134 = vld [vmem:[%s1 + $0x8] sm:$0xff]
    %v135 = vpack.c.bf16 %v134, %v133
    %v136 = vld [vmem:[%s4] sm:$0xf]
    %v137 = vld [vmem:[%s4 + $0x4] sm:$0xf]
    %v138 = vld [vmem:[%s4 + $0x8] sm:$0xf]
    %v139 = vld [vmem:[%s4 + $0xc] sm:$0xf]
    %v140 = vld [vmem:[%s4 + $0x10] sm:$0xf]
    %v141 = vld [vmem:[%s4 + $0x14] sm:$0xf]
    %v142 = vld [vmem:[%s4 + $0x18] sm:$0xf]
    %v143 = vld [vmem:[%s4 + $0x1c] sm:$0xf]
    %v144 = vld [vmem:[%s5] sm:$0x1]
    %v146 = vperm.slane %v144, 0
    %v156 = vunpack.c.l.b16 %v136
    %v157 = vunpack.c.l.b16 %v137
    %v158 = vunpack.c.l.b16 %v138
    %v159 = vunpack.c.l.b16 %v139
    %v160 = vunpack.c.l.b16 %v140
    %v161 = vunpack.c.l.b16 %v141
    %v162 = vunpack.c.l.b16 %v142
    %v163 = vunpack.c.l.b16 %v143
    %v164 = vpack.c.b16 %v157, %v156
    %v165 = vpack.c.b16 %v159, %v158
    %v166 = vpack.c.b16 %v161, %v160
    %v167 = vpack.c.b16 %v163, %v162
    %vm172 = vcmask 523264
    %v174 = vsel %vm172, %v135, 0
    %176 = vmatpush.bf16.msra.mxu0 0
    %177 = vmatpush.bf16.msra.mxu0 0
    %178 = vmatpush.bf16.msra.mxu0 0
    %179 = vmatpush.bf16.msra.mxu0 0
    %180 = vmatpush.bf16.msra.mxu0 %v167
    %181 = vmatpush.bf16.msra.mxu0 %v166
    %182 = vmatpush.bf16.msra.mxu0 %v165
    %183 = vmatpush.bf16.msra.mxu0 %v164
    %184 = vmatmul.bf16.gmra.mxu0 %v174
    %v185 = vpop.f32.mrf.mxu0
    %v186 = vadd.f32 %v146, %v185
    %v187 = vpop.f32.mrf.mxu0
    %v188 = vadd.f32 %v146, %v187
    %189 = vdwg.mxu0
    %v190 = vpack.c.bf16 %v126, %v124
    %v191 = vpack.c.bf16 %v131, %v129
    %v192 = vld [vmem:[%s6] sm:$0xf]
    %v193 = vld [vmem:[%s6 + $0x4] sm:$0xf]
    %v194 = vld [vmem:[%s6 + $0x8] sm:$0xf]
    %v195 = vld [vmem:[%s6 + $0xc] sm:$0xf]
    %v196 = vld [vmem:[%s6 + $0x10] sm:$0xf]
    %v197 = vld [vmem:[%s6 + $0x14] sm:$0xf]
    %v198 = vld [vmem:[%s6 + $0x18] sm:$0xf]
    %v199 = vld [vmem:[%s6 + $0x1c] sm:$0xf]
    %v200 = vld [vmem:[%s7] sm:$0x1]
    %v202 = vperm.slane %v200, 0
    %v212 = vunpack.c.l.b16 %v192
    %v213 = vunpack.c.l.b16 %v193
    %v214 = vunpack.c.l.b16 %v194
    %v215 = vunpack.c.l.b16 %v195
    %v216 = vunpack.c.l.b16 %v196
    %v217 = vunpack.c.l.b16 %v197
    %v218 = vunpack.c.l.b16 %v198
    %v219 = vunpack.c.l.b16 %v199
    %v220 = vpack.c.b16 %v213, %v212
    %v221 = vpack.c.b16 %v215, %v214
    %v222 = vpack.c.b16 %v217, %v216
    %v223 = vpack.c.b16 %v219, %v218
    %v229 = vsel %vm172, %v190, 0
    %v232 = vsel %vm172, %v191, 0
    %234 = vmatpush.bf16.msra.mxu0 0
    %235 = vmatpush.bf16.msra.mxu0 0
    %236 = vmatpush.bf16.msra.mxu0 0
    %237 = vmatpush.bf16.msra.mxu0 0
    %238 = vmatpush.bf16.msra.mxu0 %v223
    %239 = vmatpush.bf16.msra.mxu0 %v222
    %240 = vmatpush.bf16.msra.mxu0 %v221
    %241 = vmatpush.bf16.msra.mxu0 %v220
    %242 = vmatmul.bf16.gmra.mxu0 %v229
    %v243 = vpop.f32.mrf.mxu0
    %v244 = vadd.f32 %v202, %v243
    %v245 = vpop.f32.mrf.mxu0
    %v246 = vadd.f32 %v202, %v245
    %247 = vmatmul.bf16.gmra.mxu0 %v232
    %v248 = vpop.f32.mrf.mxu0
    %v249 = vadd.f32 %v202, %v248
    %v250 = vpop.f32.mrf.mxu0
    %v251 = vadd.f32 %v202, %v250
    %252 = vdwg.mxu0
    %v253 = vpack.c.bf16 %v188, %v186
    %v255 = vsel %vm172, %v253, 0
    %257 = vmatpush.bf16.msra.mxu0 0
    %258 = vmatpush.bf16.msra.mxu0 0
    %259 = vmatpush.bf16.msra.mxu0 0
    %260 = vmatpush.bf16.msra.mxu0 0
    %261 = vmatpush.bf16.msra.mxu0 %v223
    %262 = vmatpush.bf16.msra.mxu0 %v222
    %263 = vmatpush.bf16.msra.mxu0 %v221
    %264 = vmatpush.bf16.msra.mxu0 %v220
    %265 = vmatmul.bf16.gmra.mxu0 %v255
    %v266 = vpop.f32.mrf.mxu0
    %v267 = vadd.f32 %v202, %v266
    %v268 = vpop.f32.mrf.mxu0
    %v269 = vadd.f32 %v202, %v268
    %270 = vdwg.mxu0
    %v271 = vpack.c.bf16 %v246, %v244
    %v272 = vpack.c.bf16 %v251, %v249
    %v273 = vld [vmem:[%s8] sm:$0xf]
    %v274 = vld [vmem:[%s8 + $0x4] sm:$0xf]
    %v275 = vld [vmem:[%s8 + $0x8] sm:$0xf]
    %v276 = vld [vmem:[%s8 + $0xc] sm:$0xf]
    %v277 = vld [vmem:[%s9] sm:$0x1]
    %v279 = vperm.slane %v277, 0
    %v285 = vunpack.c.l.b16 %v273
    %v286 = vunpack.c.l.b16 %v274
    %v287 = vunpack.c.l.b16 %v275
    %v288 = vunpack.c.l.b16 %v276
    %v289 = vpack.c.b16 %v286, %v285
    %v290 = vpack.c.b16 %v288, %v287
    %vm293 = vcmask 261120
    %v295 = vsel %vm293, %v271, 0
    %v298 = vsel %vm293, %v272, 0
    %300 = vmatpush.bf16.msra.mxu0 0
    %301 = vmatpush.bf16.msra.mxu0 0
    %302 = vmatpush.bf16.msra.mxu0 0
    %303 = vmatpush.bf16.msra.mxu0 0
    %304 = vmatpush.bf16.msra.mxu0 0
    %305 = vmatpush.bf16.msra.mxu0 0
    %306 = vmatpush.bf16.msra.mxu0 %v290
    %307 = vmatpush.bf16.msra.mxu0 %v289
    %308 = vmatmul.bf16.gmra.mxu0 %v295
    %v309 = vpop.f32.mrf.mxu0
    %v310 = vadd.f32 %v279, %v309
    %v311 = vpop.f32.mrf.mxu0
    %v312 = vadd.f32 %v279, %v311
    %313 = vmatmul.bf16.gmra.mxu0 %v298
    %v314 = vpop.f32.mrf.mxu0
    %v315 = vadd.f32 %v279, %v314
    %v316 = vpop.f32.mrf.mxu0
    %v317 = vadd.f32 %v279, %v316
    %318 = vdwg.mxu0
    %vm319 = vcmask 130048
    %320 = vst.msk [vmem:[#allocation2] sm:$0xff] %vm319, %v310
    %321 = vst.msk [vmem:[#allocation2 + $0x8] sm:$0xff] %vm319, %v312
    %322 = vst.msk [vmem:[#allocation2 + $0x10] sm:$0xff] %vm319, %v315
    %323 = vst.msk [vmem:[#allocation2 + $0x18] sm:$0xff] %vm319, %v317
    %v324 = vpack.c.bf16 %v269, %v267
    %v325 = vld [vmem:[%s8] sm:$0xf]
    %v326 = vld [vmem:[%s8 + $0x4] sm:$0xf]
    %v327 = vld [vmem:[%s8 + $0x8] sm:$0xf]
    %v328 = vld [vmem:[%s8 + $0xc] sm:$0xf]
    %v329 = vld [vmem:[%s9] sm:$0x1]
    %v331 = vperm.slane %v329, 0
    %v337 = vunpack.c.l.b16 %v325
    %v338 = vunpack.c.l.b16 %v326
    %v339 = vunpack.c.l.b16 %v327
    %v340 = vunpack.c.l.b16 %v328
    %v341 = vpack.c.b16 %v338, %v337
    %v342 = vpack.c.b16 %v340, %v339
    %v346 = vsel %vm293, %v324, 0
    %348 = vmatpush.bf16.msra.mxu0 0
    %349 = vmatpush.bf16.msra.mxu0 0
    %350 = vmatpush.bf16.msra.mxu0 0
    %351 = vmatpush.bf16.msra.mxu0 0
    %352 = vmatpush.bf16.msra.mxu0 0
    %353 = vmatpush.bf16.msra.mxu0 0
    %354 = vmatpush.bf16.msra.mxu0 %v342
    %355 = vmatpush.bf16.msra.mxu0 %v341
    %356 = vmatmul.bf16.gmra.mxu0 %v346
    %v357 = vpop.f32.mrf.mxu0
    %v358 = vadd.f32 %v331, %v357
    %v359 = vpop.f32.mrf.mxu0
    %v360 = vadd.f32 %v331, %v359
    %361 = vdwg.mxu0
    %362 = vst.msk [vmem:[#allocation4] sm:$0xff] %vm319, %v358
    %363 = vst.msk [vmem:[#allocation4 + $0x8] sm:$0xff] %vm319, %v360
    // Predicated region
    $region42: #{sa3_fwd.11} parent=1 // pred_check
      _
    $region43: #{sa3_fwd.11} parent=1 // pred_check_branch
      %365 = sbr.rel (0) target = $region45
    $region44: #{sa3_fwd.11} parent=1 // pred_region
      %367 = vsyncadd [#allocation3], 0
      %s368 = sshll.u32 [#allocation2], 4
      %s369 = int_to_ptr.vmem [resolvable:$true] %s368
      %s370 = sshll.u32 %s10, 4
      %s371 = int_to_ptr.hbm [resolvable:$true] %s370
      %376 = dma.vmem_to_hbm [thread:$0]  %s369, 512, %s371, [#allocation3], 128, 128, 8
    $region45: #{sa3_fwd.11} parent=1 // pred_fallthru
      _
    // Predicated region
    $region46: #{sa3_fwd.11} parent=1 // pred_check
      _
    $region47: #{sa3_fwd.11} parent=1 // pred_check_branch
      %378 = sbr.rel (0) target = $region49
    $region48: #{sa3_fwd.11} parent=1 // pred_region
      %380 = vsyncadd [#allocation5], 0
      %s381 = sshll.u32 [#allocation4], 4
      %s382 = int_to_ptr.vmem [resolvable:$true] %s381
      %s383 = sshll.u32 %s11, 4
      %s384 = int_to_ptr.hbm [resolvable:$true] %s383
      %389 = dma.vmem_to_hbm [thread:$0]  %s382, 256, %s384, [#allocation5], 128, 128, 8
    $region49: #{sa3_fwd.11} parent=1 // pred_fallthru
      _
    // Predicated region
    $region50: #{sa3_fwd.11} parent=1 // pred_check
      _
    $region51: #{sa3_fwd.11} parent=1 // pred_check_branch
      %391 = sbr.rel (0) target = $region53
    $region52: #{sa3_fwd.11} parent=1 // pred_region
      %393 = dma.done [#allocation3], 512
    $region53: #{sa3_fwd.11} parent=1 // pred_fallthru
      _
    // Predicated region
    $region54: #{sa3_fwd.11} parent=1 // pred_check
      _
    $region55: #{sa3_fwd.11} parent=1 // pred_check_branch
      %395 = sbr.rel (0) target = $region57
    $region56: #{sa3_fwd.11} parent=1 // pred_region
      %397 = dma.done [#allocation5], 256
    $region57: #{sa3_fwd.11} parent=1 // pred_fallthru
      _
    %398 = vsyncpa [#allocation3], 1
    %399 = vsyncpa [#allocation5], 1

// kernel: sa3_fwd.10
$region0: #{sa3_fwd.10}
  #allocation0 [shape = 'u32[]', space=smem, size = 0x4, offset = 0x4, fixed_abs, tag = 'smem constant byte address 0x4 - core index']
  #allocation1 [shape = 'u32[72,128]{1,0:T(1,128)}', space=vmem, size = 0x9000, scoped, tag = 'internal scratch']
  %s0 = inlined_call_operand.vmem [shape: f32[2,16,128], index: 0, kind: input, shape index: {}]
  %s1 = inlined_call_operand.vmem [shape: f32[2,8,64], index: 1, kind: input, shape index: {}]
  %s2 = inlined_call_operand.vmem [shape: bf16[4,128,32], index: 2, kind: input, shape index: {}]
  %s3 = inlined_call_operand.vmem [shape: bf16[4,128,32], index: 3, kind: input, shape index: {}]
  %s4 = inlined_call_operand.vmem [shape: bf16[4,64,32], index: 4, kind: input, shape index: {}]
  %s5 = inlined_call_operand.vmem [shape: bf16[4,64,32], index: 5, kind: input, shape index: {}]
  %s6 = inlined_call_operand.vmem [shape: bf16[4,32,128], index: 6, kind: input, shape index: {}]
  %s7 = inlined_call_operand.vmem [shape: f32[1,128], index: 7, kind: input, shape index: {}]
  %s8 = inlined_call_operand.vmem [shape: bf16[4,32,64], index: 8, kind: input, shape index: {}]
  %s9 = inlined_call_operand.vmem [shape: f32[1,64], index: 9, kind: input, shape index: {}]
  %s10 = inlined_call_operand.vmem [shape: f32[1,128], index: 10, kind: input, shape index: {}]
  %s11 = inlined_call_operand.vmem [shape: f32[1,128], index: 11, kind: input, shape index: {}]
  %s12 = inlined_call_operand.vmem [shape: f32[1,64], index: 12, kind: input, shape index: {}]
  %s13 = inlined_call_operand.vmem [shape: f32[1,64], index: 13, kind: input, shape index: {}]
  %s14 = inlined_call_operand.vmem [shape: f32[2,16,128], index: 14, kind: output, shape index: {0}]
  %s15 = inlined_call_operand.vmem [shape: f32[2,8,64], index: 15, kind: output, shape index: {1}]
  %16 = xla_tuple %s14, %s15
  %s17 = sld [smem:[#allocation0]]
  $region109: #{sa3_fwd.10} parent=0
    _
  %s19 = ssub.s32 1, %s17
  %s20 = scalar_select 0, %s19, %s17
  loop: start=0, step=1, limit=10
  $region2: #{sa3_fwd.10} parent=0 // loop_pre_header
    _
  $region3: #{sa3_fwd.10} parent=0 // loop_header
    %s22 = sphi 0, %s26
    %p23 = scmp.ge.s32.totalorder %s22, 10
    %s29 = sphi 0, %s41
    %s30 = sphi 0, %s37
    %s31 = sphi 0, %s29
    %s32 = sphi 0, %s30
    %s33 = sphi 0, %s31
    %s34 = sphi 0, %s32
    %s44 = sphi 0, %s46
    %s47 = sphi 0, %s44
    %s48 = sphi 0, %s47
    %s64 = sphi 0, %s48
    %s70 = sphi 0, %s72
    %s73 = sphi 0, %s70
    %s74 = sphi 0, %s73
    %s90 = sphi 0, %s74
    %s96 = sphi 0, %s98
    %s99 = sphi 0, %s96
    %s100 = sphi 0, %s99
    %s116 = sphi 0, %s100
    %s122 = sphi 0, %s124
    %s125 = sphi 0, %s122
    %s126 = sphi 0, %s125
    %s142 = sphi 0, %s126
    %s148 = sphi 0, %s150
    %s151 = sphi 0, %s148
    %s152 = sphi 0, %s151
    %s168 = sphi 0, %s152
    %s174 = sphi 0, %s176
    %s177 = sphi 0, %s174
    %s178 = sphi 0, %s177
    %s194 = sphi 0, %s178
    %s200 = sphi 0, %s202
    %s203 = sphi 0, %s200
    %s204 = sphi 0, %s203
    %s220 = sphi 0, %s204
    %s224 = sphi 0, %s224
    %s226 = sphi 0, %s224
    %s227 = sphi 0, %s226
    %s241 = sphi 0, %s227
    %s247 = sphi 0, %s249
    %s250 = sphi 0, %s247
    %s251 = sphi 0, %s250
    %s267 = sphi 0, %s251
    %s271 = sphi 0, %s271
    %s273 = sphi 0, %s271
    %s274 = sphi 0, %s273
    %s288 = sphi 0, %s274
    %s292 = sphi 0, %s292
    %s294 = sphi 0, %s292
    %s295 = sphi 0, %s294
    %s309 = sphi 0, %s295
    %s313 = sphi 0, %s313
    %s315 = sphi 0, %s313
    %s316 = sphi 0, %s315
    %s330 = sphi 0, %s316
    %s334 = sphi 0, %s334
    %s336 = sphi 0, %s334
    %s337 = sphi 0, %s336
    %s351 = sphi 0, %s337
    %s355 = sphi 0, %s355
    %s357 = sphi 0, %s355
    %s358 = sphi 0, %s357
    %s372 = sphi 0, %s358
    %s378 = sphi 0, %s380
    %s381 = sphi 0, %s378
    %s382 = sphi 0, %s381
    %s398 = sphi 0, %s382
    %s404 = sphi 0, %s406
    %s407 = sphi 0, %s404
    %s408 = sphi 0, %s407
    %s424 = sphi 0, %s408
  $region4: #{sa3_fwd.10} parent=0 // loop_header_branch
    %25 = sbr.rel (%p23) target = $region8
  $region5: #{sa3_fwd.10} parent=0 // loop_body
    %s27 = ssub.s32 %s22, 1
    %s28 = ssub.s32 %s22, 2
    %s35 = sadd.s32 1, %s30
    %p36 = scmp.ge.s32.totalorder %s35, 4
    %s37 = scalar_select %p36, 0, %s35
    %s38 = sadd.s32 1, %s29
    %s39 = scalar_select %p36, %s38, %s29
    %p40 = scmp.ge.s32.totalorder %s39, 2
    %s41 = scalar_select %p40, 0, %s39
    %s42 = ssub.s32 %s29, %s41
    %p43 = scmp.eq.s32.totalorder %s42, 0
    %s45 = sadd.s32 %s44, 1
    %s46 = scalar_select %p43, %s44, %s45
    %p49 = pneg %p43
    %p50 = scmp.eq.s32.totalorder %s22, 7
    %p51 = por %p49, %p50
    %p52 = scmp.ne.s32.totalorder %s44, %s47
    %p53 = scmp.eq.s32.totalorder %s22, 0
    %p54 = por %p52, %p53
    %p55 = scmp.ne.s32.totalorder %s44, %s47
    %p56 = scmp.eq.s32.totalorder %s27, 7
    %p57 = por %p55, %p56
    %p58 = scmp.ne.s32.totalorder %s47, %s48
    %p59 = scmp.eq.s32.totalorder %s27, 0
    %p60 = por %p58, %p59
    %p61 = scmp.ne.s32.totalorder %s47, %s48
    %p62 = scmp.eq.s32.totalorder %s28, 7
    %p63 = por %p61, %p62
    %p65 = scmp.ne.s32.totalorder %s48, %s64
    %p66 = scmp.eq.s32.totalorder %s28, 0
    %p67 = por %p65, %p66
    %s68 = ssub.s32 %s29, %s41
    %p69 = scmp.eq.s32.totalorder %s68, 0
    %s71 = sadd.s32 %s70, 1
    %s72 = scalar_select %p69, %s70, %s71
    %p75 = pneg %p69
    %p76 = scmp.eq.s32.totalorder %s22, 7
    %p77 = por %p75, %p76
    %p78 = scmp.ne.s32.totalorder %s70, %s73
    %p79 = scmp.eq.s32.totalorder %s22, 0
    %p80 = por %p78, %p79
    %p81 = scmp.ne.s32.totalorder %s70, %s73
    %p82 = scmp.eq.s32.totalorder %s27, 7
    %p83 = por %p81, %p82
    %p84 = scmp.ne.s32.totalorder %s73, %s74
    %p85 = scmp.eq.s32.totalorder %s27, 0
    %p86 = por %p84, %p85
    %p87 = scmp.ne.s32.totalorder %s73, %s74
    %p88 = scmp.eq.s32.totalorder %s28, 7
    %p89 = por %p87, %p88
    %p91 = scmp.ne.s32.totalorder %s74, %s90
    %p92 = scmp.eq.s32.totalorder %s28, 0
    %p93 = por %p91, %p92
    %s94 = ssub.s32 %s30, %s37
    %p95 = scmp.eq.s32.totalorder %s94, 0
    %s97 = sadd.s32 %s96, 1
    %s98 = scalar_select %p95, %s96, %s97
    %p101 = pneg %p95
    %p102 = scmp.eq.s32.totalorder %s22, 7
    %p103 = por %p101, %p102
    %p104 = scmp.ne.s32.totalorder %s96, %s99
    %p105 = scmp.eq.s32.totalorder %s22, 0
    %p106 = por %p104, %p105
    %p107 = scmp.ne.s32.totalorder %s96, %s99
    %p108 = scmp.eq.s32.totalorder %s27, 7
    %p109 = por %p107, %p108
    %p110 = scmp.ne.s32.totalorder %s99, %s100
    %p111 = scmp.eq.s32.totalorder %s27, 0
    %p112 = por %p110, %p111
    %p113 = scmp.ne.s32.totalorder %s99, %s100
    %p114 = scmp.eq.s32.totalorder %s28, 7
    %p115 = por %p113, %p114
    %p117 = scmp.ne.s32.totalorder %s100, %s116
    %p118 = scmp.eq.s32.totalorder %s28, 0
    %p119 = por %p117, %p118
    %s120 = ssub.s32 %s30, %s37
    %p121 = scmp.eq.s32.totalorder %s120, 0
    %s123 = sadd.s32 %s122, 1
    %s124 = scalar_select %p121, %s122, %s123
    %p127 = pneg %p121
    %p128 = scmp.eq.s32.totalorder %s22, 7
    %p129 = por %p127, %p128
    %p130 = scmp.ne.s32.totalorder %s122, %s125
    %p131 = scmp.eq.s32.totalorder %s22, 0
    %p132 = por %p130, %p131
    %p133 = scmp.ne.s32.totalorder %s122, %s125
    %p134 = scmp.eq.s32.totalorder %s27, 7
    %p135 = por %p133, %p134
    %p136 = scmp.ne.s32.totalorder %s125, %s126
    %p137 = scmp.eq.s32.totalorder %s27, 0
    %p138 = por %p136, %p137
    %p139 = scmp.ne.s32.totalorder %s125, %s126
    %p140 = scmp.eq.s32.totalorder %s28, 7
    %p141 = por %p139, %p140
    %p143 = scmp.ne.s32.totalorder %s126, %s142
    %p144 = scmp.eq.s32.totalorder %s28, 0
    %p145 = por %p143, %p144
    %s146 = ssub.s32 %s30, %s37
    %p147 = scmp.eq.s32.totalorder %s146, 0
    %s149 = sadd.s32 %s148, 1
    %s150 = scalar_select %p147, %s148, %s149
    %p153 = pneg %p147
    %p154 = scmp.eq.s32.totalorder %s22, 7
    %p155 = por %p153, %p154
    %p156 = scmp.ne.s32.totalorder %s148, %s151
    %p157 = scmp.eq.s32.totalorder %s22, 0
    %p158 = por %p156, %p157
    %p159 = scmp.ne.s32.totalorder %s148, %s151
    %p160 = scmp.eq.s32.totalorder %s27, 7
    %p161 = por %p159, %p160
    %p162 = scmp.ne.s32.totalorder %s151, %s152
    %p163 = scmp.eq.s32.totalorder %s27, 0
    %p164 = por %p162, %p163
    %p165 = scmp.ne.s32.totalorder %s151, %s152
    %p166 = scmp.eq.s32.totalorder %s28, 7
    %p167 = por %p165, %p166
    %p169 = scmp.ne.s32.totalorder %s152, %s168
    %p170 = scmp.eq.s32.totalorder %s28, 0
    %p171 = por %p169, %p170
    %s172 = ssub.s32 %s30, %s37
    %p173 = scmp.eq.s32.totalorder %s172, 0
    %s175 = sadd.s32 %s174, 1
    %s176 = scalar_select %p173, %s174, %s175
    %p179 = pneg %p173
    %p180 = scmp.eq.s32.totalorder %s22, 7
    %p181 = por %p179, %p180
    %p182 = scmp.ne.s32.totalorder %s174, %s177
    %p183 = scmp.eq.s32.totalorder %s22, 0
    %p184 = por %p182, %p183
    %p185 = scmp.ne.s32.totalorder %s174, %s177
    %p186 = scmp.eq.s32.totalorder %s27, 7
    %p187 = por %p185, %p186
    %p188 = scmp.ne.s32.totalorder %s177, %s178
    %p189 = scmp.eq.s32.totalorder %s27, 0
    %p190 = por %p188, %p189
    %p191 = scmp.ne.s32.totalorder %s177, %s178
    %p192 = scmp.eq.s32.totalorder %s28, 7
    %p193 = por %p191, %p192
    %p195 = scmp.ne.s32.totalorder %s178, %s194
    %p196 = scmp.eq.s32.totalorder %s28, 0
    %p197 = por %p195, %p196
    %s198 = ssub.s32 %s30, %s37
    %p199 = scmp.eq.s32.totalorder %s198, 0
    %s201 = sadd.s32 %s200, 1
    %s202 = scalar_select %p199, %s200, %s201
    %p205 = pneg %p199
    %p206 = scmp.eq.s32.totalorder %s22, 7
    %p207 = por %p205, %p206
    %p208 = scmp.ne.s32.totalorder %s200, %s203
    %p209 = scmp.eq.s32.totalorder %s22, 0
    %p210 = por %p208, %p209
    %p211 = scmp.ne.s32.totalorder %s200, %s203
    %p212 = scmp.eq.s32.totalorder %s27, 7
    %p213 = por %p211, %p212
    %p214 = scmp.ne.s32.totalorder %s203, %s204
    %p215 = scmp.eq.s32.totalorder %s27, 0
    %p216 = por %p214, %p215
    %p217 = scmp.ne.s32.totalorder %s203, %s204
    %p218 = scmp.eq.s32.totalorder %s28, 7
    %p219 = por %p217, %p218
    %p221 = scmp.ne.s32.totalorder %s204, %s220
    %p222 = scmp.eq.s32.totalorder %s28, 0
    %p223 = por %p221, %p222
    %s225 = sadd.s32 %s224, 1
    %p228 = scmp.eq.s32.totalorder %s22, 7
    %p229 = scmp.ne.s32.totalorder %s224, %s226
    %p230 = scmp.eq.s32.totalorder %s22, 0
    %p231 = por %p229, %p230
    %p232 = scmp.ne.s32.totalorder %s224, %s226
    %p233 = scmp.eq.s32.totalorder %s27, 7
    %p234 = por %p232, %p233
    %p235 = scmp.ne.s32.totalorder %s226, %s227
    %p236 = scmp.eq.s32.totalorder %s27, 0
    %p237 = por %p235, %p236
    %p238 = scmp.ne.s32.totalorder %s226, %s227
    %p239 = scmp.eq.s32.totalorder %s28, 7
    %p240 = por %p238, %p239
    %p242 = scmp.ne.s32.totalorder %s227, %s241
    %p243 = scmp.eq.s32.totalorder %s28, 0
    %p244 = por %p242, %p243
    %s245 = ssub.s32 %s30, %s37
    %p246 = scmp.eq.s32.totalorder %s245, 0
    %s248 = sadd.s32 %s247, 1
    %s249 = scalar_select %p246, %s247, %s248
    %p252 = pneg %p246
    %p253 = scmp.eq.s32.totalorder %s22, 7
    %p254 = por %p252, %p253
    %p255 = scmp.ne.s32.totalorder %s247, %s250
    %p256 = scmp.eq.s32.totalorder %s22, 0
    %p257 = por %p255, %p256
    %p258 = scmp.ne.s32.totalorder %s247, %s250
    %p259 = scmp.eq.s32.totalorder %s27, 7
    %p260 = por %p258, %p259
    %p261 = scmp.ne.s32.totalorder %s250, %s251
    %p262 = scmp.eq.s32.totalorder %s27, 0
    %p263 = por %p261, %p262
    %p264 = scmp.ne.s32.totalorder %s250, %s251
    %p265 = scmp.eq.s32.totalorder %s28, 7
    %p266 = por %p264, %p265
    %p268 = scmp.ne.s32.totalorder %s251, %s267
    %p269 = scmp.eq.s32.totalorder %s28, 0
    %p270 = por %p268, %p269
    %s272 = sadd.s32 %s271, 1
    %p275 = scmp.eq.s32.totalorder %s22, 7
    %p276 = scmp.ne.s32.totalorder %s271, %s273
    %p277 = scmp.eq.s32.totalorder %s22, 0
    %p278 = por %p276, %p277
    %p279 = scmp.ne.s32.totalorder %s271, %s273
    %p280 = scmp.eq.s32.totalorder %s27, 7
    %p281 = por %p279, %p280
    %p282 = scmp.ne.s32.totalorder %s273, %s274
    %p283 = scmp.eq.s32.totalorder %s27, 0
    %p284 = por %p282, %p283
    %p285 = scmp.ne.s32.totalorder %s273, %s274
    %p286 = scmp.eq.s32.totalorder %s28, 7
    %p287 = por %p285, %p286
    %p289 = scmp.ne.s32.totalorder %s274, %s288
    %p290 = scmp.eq.s32.totalorder %s28, 0
    %p291 = por %p289, %p290
    %s293 = sadd.s32 %s292, 1
    %p296 = scmp.eq.s32.totalorder %s22, 7
    %p297 = scmp.ne.s32.totalorder %s292, %s294
    %p298 = scmp.eq.s32.totalorder %s22, 0
    %p299 = por %p297, %p298
    %p300 = scmp.ne.s32.totalorder %s292, %s294
    %p301 = scmp.eq.s32.totalorder %s27, 7
    %p302 = por %p300, %p301
    %p303 = scmp.ne.s32.totalorder %s294, %s295
    %p304 = scmp.eq.s32.totalorder %s27, 0
    %p305 = por %p303, %p304
    %p306 = scmp.ne.s32.totalorder %s294, %s295
    %p307 = scmp.eq.s32.totalorder %s28, 7
    %p308 = por %p306, %p307
    %p310 = scmp.ne.s32.totalorder %s295, %s309
    %p311 = scmp.eq.s32.totalorder %s28, 0
    %p312 = por %p310, %p311
    %s314 = sadd.s32 %s313, 1
    %p317 = scmp.eq.s32.totalorder %s22, 7
    %p318 = scmp.ne.s32.totalorder %s313, %s315
    %p319 = scmp.eq.s32.totalorder %s22, 0
    %p320 = por %p318, %p319
    %p321 = scmp.ne.s32.totalorder %s313, %s315
    %p322 = scmp.eq.s32.totalorder %s27, 7
    %p323 = por %p321, %p322
    %p324 = scmp.ne.s32.totalorder %s315, %s316
    %p325 = scmp.eq.s32.totalorder %s27, 0
    %p326 = por %p324, %p325
    %p327 = scmp.ne.s32.totalorder %s315, %s316
    %p328 = scmp.eq.s32.totalorder %s28, 7
    %p329 = por %p327, %p328
    %p331 = scmp.ne.s32.totalorder %s316, %s330
    %p332 = scmp.eq.s32.totalorder %s28, 0
    %p333 = por %p331, %p332
    %s335 = sadd.s32 %s334, 1
    %p338 = scmp.eq.s32.totalorder %s22, 7
    %p339 = scmp.ne.s32.totalorder %s334, %s336
    %p340 = scmp.eq.s32.totalorder %s22, 0
    %p341 = por %p339, %p340
    %p342 = scmp.ne.s32.totalorder %s334, %s336
    %p343 = scmp.eq.s32.totalorder %s27, 7
    %p344 = por %p342, %p343
    %p345 = scmp.ne.s32.totalorder %s336, %s337
    %p346 = scmp.eq.s32.totalorder %s27, 0
    %p347 = por %p345, %p346
    %p348 = scmp.ne.s32.totalorder %s336, %s337
    %p349 = scmp.eq.s32.totalorder %s28, 7
    %p350 = por %p348, %p349
    %p352 = scmp.ne.s32.totalorder %s337, %s351
    %p353 = scmp.eq.s32.totalorder %s28, 0
    %p354 = por %p352, %p353
    %s356 = sadd.s32 %s355, 1
    %p359 = scmp.eq.s32.totalorder %s22, 7
    %p360 = scmp.ne.s32.totalorder %s355, %s357
    %p361 = scmp.eq.s32.totalorder %s22, 0
    %p362 = por %p360, %p361
    %p363 = scmp.ne.s32.totalorder %s355, %s357
    %p364 = scmp.eq.s32.totalorder %s27, 7
    %p365 = por %p363, %p364
    %p366 = scmp.ne.s32.totalorder %s357, %s358
    %p367 = scmp.eq.s32.totalorder %s27, 0
    %p368 = por %p366, %p367
    %p369 = scmp.ne.s32.totalorder %s357, %s358
    %p370 = scmp.eq.s32.totalorder %s28, 7
    %p371 = por %p369, %p370
    %p373 = scmp.ne.s32.totalorder %s358, %s372
    %p374 = scmp.eq.s32.totalorder %s28, 0
    %p375 = por %p373, %p374
    %s376 = ssub.s32 %s29, %s41
    %p377 = scmp.eq.s32.totalorder %s376, 0
    %s379 = sadd.s32 %s378, 1
    %s380 = scalar_select %p377, %s378, %s379
    %p383 = pneg %p377
    %p384 = scmp.eq.s32.totalorder %s22, 7
    %p385 = por %p383, %p384
    %p386 = scmp.ne.s32.totalorder %s378, %s381
    %p387 = scmp.eq.s32.totalorder %s22, 0
    %p388 = por %p386, %p387
    %p389 = scmp.ne.s32.totalorder %s378, %s381
    %p390 = scmp.eq.s32.totalorder %s27, 7
    %p391 = por %p389, %p390
    %p392 = scmp.ne.s32.totalorder %s381, %s382
    %p393 = scmp.eq.s32.totalorder %s27, 0
    %p394 = por %p392, %p393
    %p395 = scmp.ne.s32.totalorder %s381, %s382
    %p396 = scmp.eq.s32.totalorder %s28, 7
    %p397 = por %p395, %p396
    %p399 = scmp.ne.s32.totalorder %s382, %s398
    %p400 = scmp.eq.s32.totalorder %s28, 0
    %p401 = por %p399, %p400
    %s402 = ssub.s32 %s29, %s41
    %p403 = scmp.eq.s32.totalorder %s402, 0
    %s405 = sadd.s32 %s404, 1
    %s406 = scalar_select %p403, %s404, %s405
    %p409 = pneg %p403
    %p410 = scmp.eq.s32.totalorder %s22, 7
    %p411 = por %p409, %p410
    %p412 = scmp.ne.s32.totalorder %s404, %s407
    %p413 = scmp.eq.s32.totalorder %s22, 0
    %p414 = por %p412, %p413
    %p415 = scmp.ne.s32.totalorder %s404, %s407
    %p416 = scmp.eq.s32.totalorder %s27, 7
    %p417 = por %p415, %p416
    %p418 = scmp.ne.s32.totalorder %s407, %s408
    %p419 = scmp.eq.s32.totalorder %s27, 0
    %p420 = por %p418, %p419
    %p421 = scmp.ne.s32.totalorder %s407, %s408
    %p422 = scmp.eq.s32.totalorder %s28, 7
    %p423 = por %p421, %p422
    %p425 = scmp.ne.s32.totalorder %s408, %s424
    %p426 = scmp.eq.s32.totalorder %s28, 0
    %p427 = por %p425, %p426
    %p428 = scmp.le.s32.totalorder 1, %s22
    %p429 = scmp.lt.s32.totalorder %s22, 9
    %p430 = pnand %p428, %p429
    %p431 = pneg %p430
    // Predicated region
    $region9: #{sa3_fwd.10} parent=5 // pred_check
      _
    $region10: #{sa3_fwd.10} parent=5 // pred_check_branch
      %433 = sbr.rel (%p430) target = $region12
    $region11: #{sa3_fwd.10} parent=5 // pred_region
      %s434 = ssub.s32 %s22, 1
      // Predicated region
      $region13: #{sa3_fwd.10} parent=11 // pred_check
        %p435 = pneg %p237
      $region14: #{sa3_fwd.10} parent=11 // pred_check_branch
        %437 = sbr.rel (%p435) target = $region16
      $region15: #{sa3_fwd.10} parent=11 // pred_region
        _
      $region16: #{sa3_fwd.10} parent=11 // pred_fallthru
        _
      // Predicated region
      $region17: #{sa3_fwd.10} parent=11 // pred_check
        %p438 = pneg %p284
      $region18: #{sa3_fwd.10} parent=11 // pred_check_branch
        %440 = sbr.rel (%p438) target = $region20
      $region19: #{sa3_fwd.10} parent=11 // pred_region
        _
      $region20: #{sa3_fwd.10} parent=11 // pred_fallthru
        _
      // Predicated region
      $region21: #{sa3_fwd.10} parent=11 // pred_check
        %p441 = pneg %p305
      $region22: #{sa3_fwd.10} parent=11 // pred_check_branch
        %443 = sbr.rel (%p441) target = $region24
      $region23: #{sa3_fwd.10} parent=11 // pred_region
        _
      $region24: #{sa3_fwd.10} parent=11 // pred_fallthru
        _
      // Predicated region
      $region25: #{sa3_fwd.10} parent=11 // pred_check
        %p444 = pneg %p326
      $region26: #{sa3_fwd.10} parent=11 // pred_check_branch
        %446 = sbr.rel (%p444) target = $region28
      $region27: #{sa3_fwd.10} parent=11 // pred_region
        _
      $region28: #{sa3_fwd.10} parent=11 // pred_fallthru
        _
      // Predicated region
      $region29: #{sa3_fwd.10} parent=11 // pred_check
        %p447 = pneg %p347
      $region30: #{sa3_fwd.10} parent=11 // pred_check_branch
        %449 = sbr.rel (%p447) target = $region32
      $region31: #{sa3_fwd.10} parent=11 // pred_region
        _
      $region32: #{sa3_fwd.10} parent=11 // pred_fallthru
        _
      // Predicated region
      $region33: #{sa3_fwd.10} parent=11 // pred_check
        %p450 = pneg %p368
      $region34: #{sa3_fwd.10} parent=11 // pred_check_branch
        %452 = sbr.rel (%p450) target = $region36
      $region35: #{sa3_fwd.10} parent=11 // pred_region
        _
      $region36: #{sa3_fwd.10} parent=11 // pred_fallthru
        _
    $region12: #{sa3_fwd.10} parent=5 // pred_fallthru
      _
    %p453 = scmp.lt.s32.totalorder %s22, 8
    // Predicated region
    $region37: #{sa3_fwd.10} parent=5 // pred_check
      %p454 = pneg %p453
    $region38: #{sa3_fwd.10} parent=5 // pred_check_branch
      %456 = sbr.rel (%p454) target = $region40
    $region39: #{sa3_fwd.10} parent=5 // pred_region
      // Predicated region
      $region41: #{sa3_fwd.10} parent=39 // pred_check
        %p457 = pneg %p54
      $region42: #{sa3_fwd.10} parent=39 // pred_check_branch
        %459 = sbr.rel (%p457) target = $region44
      $region43: #{sa3_fwd.10} parent=39 // pred_region
        %p460 = scmp.lt.s32.totalorder %s29, 1
        %s461 = scalar_select %p460, %s29, 1
        %s462 = smul.addr %s461, 2
        %s463 = smul.addr %s462, 8
        %s464 = scalar_lea.vmem %s0, %s463
      $region44: #{sa3_fwd.10} parent=39 // pred_fallthru
        _
      // Predicated region
      $region45: #{sa3_fwd.10} parent=39 // pred_check
        %p465 = pneg %p80
      $region46: #{sa3_fwd.10} parent=39 // pred_check_branch
        %467 = sbr.rel (%p465) target = $region48
      $region47: #{sa3_fwd.10} parent=39 // pred_region
        %p468 = scmp.lt.s32.totalorder %s29, 1
        %s469 = scalar_select %p468, %s29, 1
        %s470 = smul.addr %s469, 8
        %s471 = scalar_lea.vmem %s1, %s470
      $region48: #{sa3_fwd.10} parent=39 // pred_fallthru
        _
      // Predicated region
      $region49: #{sa3_fwd.10} parent=39 // pred_check
        %p472 = pneg %p106
      $region50: #{sa3_fwd.10} parent=39 // pred_check_branch
        %474 = sbr.rel (%p472) target = $region52
      $region51: #{sa3_fwd.10} parent=39 // pred_region
        %p475 = scmp.lt.s32.totalorder %s30, 3
        %s476 = scalar_select %p475, %s30, 3
        %s477 = smul.addr %s476, 16
        %s478 = smul.addr %s477, 4
        %s479 = scalar_lea.vmem %s2, %s478
      $region52: #{sa3_fwd.10} parent=39 // pred_fallthru
        _
      // Predicated region
      $region53: #{sa3_fwd.10} parent=39 // pred_check
        %p480 = pneg %p132
      $region54: #{sa3_fwd.10} parent=39 // pred_check_branch
        %482 = sbr.rel (%p480) target = $region56
      $region55: #{sa3_fwd.10} parent=39 // pred_region
        %p483 = scmp.lt.s32.totalorder %s30, 3
        %s484 = scalar_select %p483, %s30, 3
        %s485 = smul.addr %s484, 16
        %s486 = smul.addr %s485, 4
        %s487 = scalar_lea.vmem %s3, %s486
      $region56: #{sa3_fwd.10} parent=39 // pred_fallthru
        _
      // Predicated region
      $region57: #{sa3_fwd.10} parent=39 // pred_check
        %p488 = pneg %p158
      $region58: #{sa3_fwd.10} parent=39 // pred_check_branch
        %490 = sbr.rel (%p488) target = $region60
      $region59: #{sa3_fwd.10} parent=39 // pred_region
        %p491 = scmp.lt.s32.totalorder %s30, 3
        %s492 = scalar_select %p491, %s30, 3
        %s493 = smul.addr %s492, 8
        %s494 = smul.addr %s493, 4
        %s495 = scalar_lea.vmem %s4, %s494
      $region60: #{sa3_fwd.10} parent=39 // pred_fallthru
        _
      // Predicated region
      $region61: #{sa3_fwd.10} parent=39 // pred_check
        %p496 = pneg %p184
      $region62: #{sa3_fwd.10} parent=39 // pred_check_branch
        %498 = sbr.rel (%p496) target = $region64
      $region63: #{sa3_fwd.10} parent=39 // pred_region
        %p499 = scmp.lt.s32.totalorder %s30, 3
        %s500 = scalar_select %p499, %s30, 3
        %s501 = smul.addr %s500, 8
        %s502 = smul.addr %s501, 4
        %s503 = scalar_lea.vmem %s5, %s502
      $region64: #{sa3_fwd.10} parent=39 // pred_fallthru
        _
      // Predicated region
      $region65: #{sa3_fwd.10} parent=39 // pred_check
        %p504 = pneg %p210
      $region66: #{sa3_fwd.10} parent=39 // pred_check_branch
        %506 = sbr.rel (%p504) target = $region68
      $region67: #{sa3_fwd.10} parent=39 // pred_region
        %p507 = scmp.lt.s32.totalorder %s30, 3
        %s508 = scalar_select %p507, %s30, 3
        %s509 = smul.addr %s508, 4
        %s510 = smul.addr %s509, 4
        %s511 = scalar_lea.vmem %s6, %s510
      $region68: #{sa3_fwd.10} parent=39 // pred_fallthru
        _
      // Predicated region
      $region69: #{sa3_fwd.10} parent=39 // pred_check
        %p512 = pneg %p257
      $region70: #{sa3_fwd.10} parent=39 // pred_check_branch
        %514 = sbr.rel (%p512) target = $region72
      $region71: #{sa3_fwd.10} parent=39 // pred_region
        %p515 = scmp.lt.s32.totalorder %s30, 3
        %s516 = scalar_select %p515, %s30, 3
        %s517 = smul.addr %s516, 4
        %s518 = smul.addr %s517, 4
        %s519 = scalar_lea.vmem %s8, %s518
      $region72: #{sa3_fwd.10} parent=39 // pred_fallthru
        _
    $region40: #{sa3_fwd.10} parent=5 // pred_fallthru
      _
    %p520 = scmp.le.s32.totalorder 1, %s22
    %p521 = scmp.lt.s32.totalorder %s22, 9
    %p522 = pnand %p520, %p521
    %p523 = pneg %p522
    // Predicated region
    $region73: #{sa3_fwd.10} parent=5 // pred_check
      _
    $region74: #{sa3_fwd.10} parent=5 // pred_check_branch
      %525 = sbr.rel (%p522) target = $region76
    $region75: #{sa3_fwd.10} parent=5 // pred_region
      %s526 = ssub.s32 %s22, 1
      %p527 = scmp.lt.s32.totalorder %s31, 1
      %s528 = scalar_select %p527, %s31, 1
      %s529 = smul.addr %s528, 2
      %s530 = smul.addr %s529, 8
      %s531 = scalar_lea.vmem %s0, %s530
      %p532 = pneg %p60
      %p533 = pneg %p57
      %p534 = scmp.lt.s32.totalorder %s31, 1
      %s535 = scalar_select %p534, %s31, 1
      %s536 = smul.addr %s535, 8
      %s537 = scalar_lea.vmem %s1, %s536
      %p538 = pneg %p86
      %p539 = pneg %p83
      %p540 = scmp.lt.s32.totalorder %s32, 3
      %s541 = scalar_select %p540, %s32, 3
      %s542 = smul.addr %s541, 16
      %s543 = smul.addr %s542, 4
      %s544 = scalar_lea.vmem %s2, %s543
      %p545 = pneg %p112
      %p546 = pneg %p109
      %p547 = scmp.lt.s32.totalorder %s32, 3
      %s548 = scalar_select %p547, %s32, 3
      %s549 = smul.addr %s548, 16
      %s550 = smul.addr %s549, 4
      %s551 = scalar_lea.vmem %s3, %s550
      %p552 = pneg %p138
      %p553 = pneg %p135
      %p554 = scmp.lt.s32.totalorder %s32, 3
      %s555 = scalar_select %p554, %s32, 3
      %s556 = smul.addr %s555, 8
      %s557 = smul.addr %s556, 4
      %s558 = scalar_lea.vmem %s4, %s557
      %p559 = pneg %p164
      %p560 = pneg %p161
      %p561 = scmp.lt.s32.totalorder %s32, 3
      %s562 = scalar_select %p561, %s32, 3
      %s563 = smul.addr %s562, 8
      %s564 = smul.addr %s563, 4
      %s565 = scalar_lea.vmem %s5, %s564
      %p566 = pneg %p190
      %p567 = pneg %p187
      %p568 = scmp.lt.s32.totalorder %s32, 3
      %s569 = scalar_select %p568, %s32, 3
      %s570 = smul.addr %s569, 4
      %s571 = smul.addr %s570, 4
      %s572 = scalar_lea.vmem %s6, %s571
      %p573 = pneg %p216
      %p574 = pneg %p213
      %p575 = pneg %p237
      %p576 = pneg %p234
      %p577 = scmp.lt.s32.totalorder %s32, 3
      %s578 = scalar_select %p577, %s32, 3
      %s579 = smul.addr %s578, 4
      %s580 = smul.addr %s579, 4
      %s581 = scalar_lea.vmem %s8, %s580
      %p582 = pneg %p263
      %p583 = pneg %p260
      %p584 = pneg %p284
      %p585 = pneg %p281
      %p586 = pneg %p305
      %p587 = pneg %p302
      %p588 = pneg %p326
      %p589 = pneg %p323
      %p590 = pneg %p347
      %p591 = pneg %p344
      %p592 = pneg %p368
      %p593 = pneg %p365
      %p594 = pneg %p394
      %p595 = pneg %p391
      %p596 = scmp.lt.s32.totalorder %s31, 1
      %s597 = scalar_select %p596, %s31, 1
      %s598 = smul.addr %s597, 2
      %s599 = smul.addr %s598, 8
      %s600 = scalar_lea.vmem %s14, %s599
      %p601 = pneg %p420
      %p602 = pneg %p417
      %p603 = scmp.lt.s32.totalorder %s31, 1
      %s604 = scalar_select %p603, %s31, 1
      %s605 = smul.addr %s604, 8
      %s606 = scalar_lea.vmem %s15, %s605
      %p607 = scmp.lt.s32.totalorder %s31, 1
      %s608 = scalar_select %p607, %s31, 1
      %s609 = smul.addr %s608, 2
      %s610 = smul.addr %s609, 8
      %s611 = scalar_lea.vmem %s0, %s610
      %p612 = scmp.lt.s32.totalorder %s31, 1
      %s613 = scalar_select %p612, %s31, 1
      %s614 = smul.addr %s613, 8
      %s615 = scalar_lea.vmem %s1, %s614
      %p616 = scmp.lt.s32.totalorder %s32, 3
      %s617 = scalar_select %p616, %s32, 3
      %s618 = smul.addr %s617, 16
      %s619 = smul.addr %s618, 4
      %s620 = scalar_lea.vmem %s2, %s619
      %p621 = scmp.lt.s32.totalorder %s32, 3
      %s622 = scalar_select %p621, %s32, 3
      %s623 = smul.addr %s622, 16
      %s624 = smul.addr %s623, 4
      %s625 = scalar_lea.vmem %s3, %s624
      %p626 = scmp.lt.s32.totalorder %s32, 3
      %s627 = scalar_select %p626, %s32, 3
      %s628 = smul.addr %s627, 8
      %s629 = smul.addr %s628, 4
      %s630 = scalar_lea.vmem %s4, %s629
      %p631 = scmp.lt.s32.totalorder %s32, 3
      %s632 = scalar_select %p631, %s32, 3
      %s633 = smul.addr %s632, 8
      %s634 = smul.addr %s633, 4
      %s635 = scalar_lea.vmem %s5, %s634
      %p636 = scmp.lt.s32.totalorder %s32, 3
      %s637 = scalar_select %p636, %s32, 3
      %s638 = smul.addr %s637, 4
      %s639 = smul.addr %s638, 4
      %s640 = scalar_lea.vmem %s6, %s639
      %p641 = scmp.lt.s32.totalorder %s32, 3
      %s642 = scalar_select %p641, %s32, 3
      %s643 = smul.addr %s642, 4
      %s644 = smul.addr %s643, 4
      %s645 = scalar_lea.vmem %s8, %s644
      %p646 = scmp.lt.s32.totalorder %s31, 1
      %s647 = scalar_select %p646, %s31, 1
      %s648 = smul.addr %s647, 2
      %s649 = smul.addr %s648, 8
      %s650 = scalar_lea.vmem %s14, %s649
      %p651 = scmp.lt.s32.totalorder %s31, 1
      %s652 = scalar_select %p651, %s31, 1
      %s653 = smul.addr %s652, 8
      %s654 = scalar_lea.vmem %s15, %s653
      %v656 = vld [vmem:[%s611] sm:$0xff]
      %v657 = vld [vmem:[%s611 + $0x8] sm:$0xff]
      %v658 = vpack.c.bf16 %v657, %v656
      %v659 = vld [vmem:[%s615] sm:$0xff]
      %v660 = vpack.c.bf16 %v659, %v659
      %v661 = vld [vmem:[%s620] sm:$0xf]
      %v662 = vld [vmem:[%s620 + $0x4] sm:$0xf]
      %v663 = vld [vmem:[%s620 + $0x8] sm:$0xf]
      %v664 = vld [vmem:[%s620 + $0xc] sm:$0xf]
      %v665 = vld [vmem:[%s620 + $0x10] sm:$0xf]
      %v666 = vld [vmem:[%s620 + $0x14] sm:$0xf]
      %v667 = vld [vmem:[%s620 + $0x18] sm:$0xf]
      %v668 = vld [vmem:[%s620 + $0x1c] sm:$0xf]
      %v669 = vld [vmem:[%s620 + $0x20] sm:$0xf]
      %v670 = vld [vmem:[%s620 + $0x24] sm:$0xf]
      %v671 = vld [vmem:[%s620 + $0x28] sm:$0xf]
      %v672 = vld [vmem:[%s620 + $0x2c] sm:$0xf]
      %v673 = vld [vmem:[%s620 + $0x30] sm:$0xf]
      %v674 = vld [vmem:[%s620 + $0x34] sm:$0xf]
      %v675 = vld [vmem:[%s620 + $0x38] sm:$0xf]
      %v676 = vld [vmem:[%s620 + $0x3c] sm:$0xf]
      %v693 = vunpack.c.l.b16 %v661
      %v694 = vunpack.c.l.b16 %v662
      %v695 = vunpack.c.l.b16 %v663
      %v696 = vunpack.c.l.b16 %v664
      %v697 = vunpack.c.l.b16 %v665
      %v698 = vunpack.c.l.b16 %v666
      %v699 = vunpack.c.l.b16 %v667
      %v700 = vunpack.c.l.b16 %v668
      %v701 = vunpack.c.l.b16 %v669
      %v702 = vunpack.c.l.b16 %v670
      %v703 = vunpack.c.l.b16 %v671
      %v704 = vunpack.c.l.b16 %v672
      %v705 = vunpack.c.l.b16 %v673
      %v706 = vunpack.c.l.b16 %v674
      %v707 = vunpack.c.l.b16 %v675
      %v708 = vunpack.c.l.b16 %v676
      %v709 = vpack.c.b16 %v694, %v693
      %v710 = vpack.c.b16 %v696, %v695
      %v711 = vpack.c.b16 %v698, %v697
      %v712 = vpack.c.b16 %v700, %v699
      %v713 = vpack.c.b16 %v702, %v701
      %v714 = vpack.c.b16 %v704, %v703
      %v715 = vpack.c.b16 %v706, %v705
      %v716 = vpack.c.b16 %v708, %v707
      %725 = vmatpush.bf16.msra.mxu0 %v716
      %726 = vmatpush.bf16.msra.mxu0 %v715
      %727 = vmatpush.bf16.msra.mxu0 %v714
      %728 = vmatpush.bf16.msra.mxu0 %v713
      %729 = vmatpush.bf16.msra.mxu0 %v712
      %730 = vmatpush.bf16.msra.mxu0 %v711
      %731 = vmatpush.bf16.msra.mxu0 %v710
      %732 = vmatpush.bf16.msra.mxu0 %v709
      %733 = vmatmul.bf16.gmra.mxu0 %v658
      %v734 = vpop.f32.mrf.mxu0
      %v735 = vadd.f32 0.0, %v734
      %v736 = vpop.f32.mrf.mxu0
      %v737 = vadd.f32 0.0, %v736
      %738 = vdwg.mxu0
      %v739 = vmul.f32 %v735, 0.17677669
      %v740 = vmul.f32 %v737, 0.17677669
      %v741 = vld [vmem:[%s625] sm:$0xf]
      %v742 = vld [vmem:[%s625 + $0x4] sm:$0xf]
      %v743 = vld [vmem:[%s625 + $0x8] sm:$0xf]
      %v744 = vld [vmem:[%s625 + $0xc] sm:$0xf]
      %v745 = vld [vmem:[%s625 + $0x10] sm:$0xf]
      %v746 = vld [vmem:[%s625 + $0x14] sm:$0xf]
      %v747 = vld [vmem:[%s625 + $0x18] sm:$0xf]
      %v748 = vld [vmem:[%s625 + $0x1c] sm:$0xf]
      %v749 = vld [vmem:[%s625 + $0x20] sm:$0xf]
      %v750 = vld [vmem:[%s625 + $0x24] sm:$0xf]
      %v751 = vld [vmem:[%s625 + $0x28] sm:$0xf]
      %v752 = vld [vmem:[%s625 + $0x2c] sm:$0xf]
      %v753 = vld [vmem:[%s625 + $0x30] sm:$0xf]
      %v754 = vld [vmem:[%s625 + $0x34] sm:$0xf]
      %v755 = vld [vmem:[%s625 + $0x38] sm:$0xf]
      %v756 = vld [vmem:[%s625 + $0x3c] sm:$0xf]
      %v773 = vunpack.c.l.b16 %v741
      %v774 = vunpack.c.l.b16 %v742
      %v775 = vunpack.c.l.b16 %v743
      %v776 = vunpack.c.l.b16 %v744
      %v777 = vunpack.c.l.b16 %v745
      %v778 = vunpack.c.l.b16 %v746
      %v779 = vunpack.c.l.b16 %v747
      %v780 = vunpack.c.l.b16 %v748
      %v781 = vunpack.c.l.b16 %v749
      %v782 = vunpack.c.l.b16 %v750
      %v783 = vunpack.c.l.b16 %v751
      %v784 = vunpack.c.l.b16 %v752
      %v785 = vunpack.c.l.b16 %v753
      %v786 = vunpack.c.l.b16 %v754
      %v787 = vunpack.c.l.b16 %v755
      %v788 = vunpack.c.l.b16 %v756
      %v789 = vpack.c.b16 %v774, %v773
      %v790 = vpack.c.b16 %v776, %v775
      %v791 = vpack.c.b16 %v778, %v777
      %v792 = vpack.c.b16 %v780, %v779
      %v793 = vpack.c.b16 %v782, %v781
      %v794 = vpack.c.b16 %v784, %v783
      %v795 = vpack.c.b16 %v786, %v785
      %v796 = vpack.c.b16 %v788, %v787
      %805 = vmatpush.bf16.msra.mxu0 %v796
      %806 = vmatpush.bf16.msra.mxu0 %v795
      %807 = vmatpush.bf16.msra.mxu0 %v794
      %808 = vmatpush.bf16.msra.mxu0 %v793
      %809 = vmatpush.bf16.msra.mxu0 %v792
      %810 = vmatpush.bf16.msra.mxu0 %v791
      %811 = vmatpush.bf16.msra.mxu0 %v790
      %812 = vmatpush.bf16.msra.mxu0 %v789
      %813 = vmatmul.bf16.gmra.mxu0 %v658
      %v814 = vpop.f32.mrf.mxu0
      %v815 = vadd.f32 0.0, %v814
      %v816 = vpop.f32.mrf.mxu0
      %v817 = vadd.f32 0.0, %v816
      %818 = vdwg.mxu0
      %v819 = vld [vmem:[%s630] sm:$0xf]
      %v820 = vld [vmem:[%s630 + $0x4] sm:$0xf]
      %v821 = vld [vmem:[%s630 + $0x8] sm:$0xf]
      %v822 = vld [vmem:[%s630 + $0xc] sm:$0xf]
      %v823 = vld [vmem:[%s630 + $0x10] sm:$0xf]
      %v824 = vld [vmem:[%s630 + $0x14] sm:$0xf]
      %v825 = vld [vmem:[%s630 + $0x18] sm:$0xf]
      %v826 = vld [vmem:[%s630 + $0x1c] sm:$0xf]
      %v835 = vunpack.c.l.b16 %v819
      %v836 = vunpack.c.l.b16 %v820
      %v837 = vunpack.c.l.b16 %v821
      %v838 = vunpack.c.l.b16 %v822
      %v839 = vunpack.c.l.b16 %v823
      %v840 = vunpack.c.l.b16 %v824
      %v841 = vunpack.c.l.b16 %v825
      %v842 = vunpack.c.l.b16 %v826
      %v843 = vpack.c.b16 %v836, %v835
      %v844 = vpack.c.b16 %v838, %v837
      %v845 = vpack.c.b16 %v840, %v839
      %v846 = vpack.c.b16 %v842, %v841
      %vm851 = vcmask 523264
      %v853 = vsel %vm851, %v660, 0
      %855 = vmatpush.bf16.msra.mxu0 0
      %856 = vmatpush.bf16.msra.mxu0 0
      %857 = vmatpush.bf16.msra.mxu0 0
      %858 = vmatpush.bf16.msra.mxu0 0
      %859 = vmatpush.bf16.msra.mxu0 %v846
      %860 = vmatpush.bf16.msra.mxu0 %v845
      %861 = vmatpush.bf16.msra.mxu0 %v844
      %862 = vmatpush.bf16.msra.mxu0 %v843
      %863 = vmatmul.bf16.gmra.mxu0 %v853
      %v864 = vpop.f32.mrf.mxu0
      %v865 = vadd.f32 0.0, %v864
      %v866 = vpop.f32.mrf.mxu0
      %867 = vdwg.mxu0
      %v868 = vld [vmem:[%s635] sm:$0xf]
      %v869 = vld [vmem:[%s635 + $0x4] sm:$0xf]
      %v870 = vld [vmem:[%s635 + $0x8] sm:$0xf]
      %v871 = vld [vmem:[%s635 + $0xc] sm:$0xf]
      %v872 = vld [vmem:[%s635 + $0x10] sm:$0xf]
      %v873 = vld [vmem:[%s635 + $0x14] sm:$0xf]
      %v874 = vld [vmem:[%s635 + $0x18] sm:$0xf]
      %v875 = vld [vmem:[%s635 + $0x1c] sm:$0xf]
      %v884 = vunpack.c.l.b16 %v868
      %v885 = vunpack.c.l.b16 %v869
      %v886 = vunpack.c.l.b16 %v870
      %v887 = vunpack.c.l.b16 %v871
      %v888 = vunpack.c.l.b16 %v872
      %v889 = vunpack.c.l.b16 %v873
      %v890 = vunpack.c.l.b16 %v874
      %v891 = vunpack.c.l.b16 %v875
      %v892 = vpack.c.b16 %v885, %v884
      %v893 = vpack.c.b16 %v887, %v886
      %v894 = vpack.c.b16 %v889, %v888
      %v895 = vpack.c.b16 %v891, %v890
      %900 = vmatpush.bf16.msra.mxu0 0
      %901 = vmatpush.bf16.msra.mxu0 0
      %902 = vmatpush.bf16.msra.mxu0 0
      %903 = vmatpush.bf16.msra.mxu0 0
      %904 = vmatpush.bf16.msra.mxu0 %v895
      %905 = vmatpush.bf16.msra.mxu0 %v894
      %906 = vmatpush.bf16.msra.mxu0 %v893
      %907 = vmatpush.bf16.msra.mxu0 %v892
      %908 = vmatmul.bf16.gmra.mxu0 %v853
      %v909 = vpop.f32.mrf.mxu0
      %v910 = vadd.f32 0.0, %v909
      %v911 = vpop.f32.mrf.mxu0
      %912 = vdwg.mxu0
      %v913 = vpack.c.bf16 %v740, %v739
      %v914 = vpack.c.bf16 %v865, %v865
      %vm915 = vcmask 261120
      %v917 = vsel %vm915, %v913, 0
      %v920 = vsel %vm915, %v914, 0
      %922 = vmatpush.bf16.xpose.msra.mxu0 0
      %923 = vmatpush.bf16.xpose.msra.mxu0 0
      %924 = vmatpush.bf16.xpose.msra.mxu0 0
      %925 = vmatpush.bf16.xpose.msra.mxu0 0
      %926 = vmatpush.bf16.xpose.msra.mxu0 0
      %927 = vmatpush.bf16.xpose.msra.mxu0 0
      %928 = vmatpush.bf16.xpose.msra.mxu0 0
      %929 = vmatpush.bf16.xpose.msra.mxu0 %v920
      %930 = vmatmul.bf16.gmra.mxu0 %v917
      %v931 = vpop.f32.mrf.mxu0
      %v932 = vadd.f32 0.0, %v931
      %v933 = vpop.f32.mrf.mxu0
      %v934 = vadd.f32 0.0, %v933
      %935 = vdwg.mxu0
      %vm936 = vcmask 64512
      %v937 = vsel %vm936, %v932, -inf
      %938 = vmax.xlane.f32.xlu0 %v937
      %v939 = vpop.xlane.xlu0 %938
      %v940 = vsel %vm936, %v934, -inf
      %941 = vmax.xlane.f32.xlu0 %v940
      %v942 = vpop.xlane.xlu0 %941
      %v943 = vsub.f32 %v932, %v939
      %v944 = vsub.f32 %v934, %v942
      %v945 = vmul.f32 %v943, 1.442695
      %v946 = vpow.pop %v945
      %v947 = vmul.f32 %v944, 1.442695
      %v948 = vpow.pop %v947
      %v949 = vsel %vm936, %v946, 0.0
      %950 = vadd.xlane.f32.xlu0 %v949
      %v951 = vpop.xlane.xlu0 %950
      %v952 = vsel %vm936, %v948, 0.0
      %953 = vadd.xlane.f32.xlu0 %v952
      %v954 = vpop.xlane.xlu0 %953
      %v955 = vrcp.pop %v951
      %v956 = vrcp.pop %v954
      %v957 = vmul.f32 %v946, %v955
      %v958 = vmul.f32 %v948, %v956
      %v959 = vpack.c.bf16 %v958, %v957
      %v960 = vpack.c.bf16 %v910, %v910
      %v962 = vsel %vm936, %v959, 0
      %vm964 = vcmask 1043456
      %v966 = vsel %vm964, %v960, 0
      %968 = vmatpush.bf16.msra.mxu0 0
      %969 = vmatpush.bf16.msra.mxu0 0
      %970 = vmatpush.bf16.msra.mxu0 0
      %971 = vmatpush.bf16.msra.mxu0 0
      %972 = vmatpush.bf16.msra.mxu0 0
      %973 = vmatpush.bf16.msra.mxu0 0
      %974 = vmatpush.bf16.msra.mxu0 0
      %975 = vmatpush.bf16.msra.mxu0 %v966
      %976 = vmatmul.bf16.gmra.mxu0 %v962
      %v977 = vpop.f32.mrf.mxu0
      %v978 = vadd.f32 0.0, %v977
      %v979 = vpop.f32.mrf.mxu0
      %v980 = vadd.f32 0.0, %v979
      %981 = vdwg.mxu0
      %982 = vmatpush.bf16.xpose.msra.mxu0 0
      %983 = vmatpush.bf16.xpose.msra.mxu0 0
      %984 = vmatpush.bf16.xpose.msra.mxu0 0
      %985 = vmatpush.bf16.xpose.msra.mxu0 0
      %986 = vmatpush.bf16.xpose.msra.mxu0 0
      %987 = vmatpush.bf16.xpose.msra.mxu0 0
      %988 = vmatpush.bf16.xpose.msra.mxu0 0
      %989 = vmatpush.bf16.xpose.msra.mxu0 %v917
      %990 = vmatmul.bf16.gmra.mxu0 %v920
      %v991 = vpop.f32.mrf.mxu0
      %v992 = vadd.f32 0.0, %v991
      %v993 = vpop.f32.mrf.mxu0
      %994 = vdwg.mxu0
      %vm995 = vcmask 130048
      %v996 = vsel %vm995, %v992, -inf
      %997 = vmax.xlane.f32.xlu0 %v996
      %v998 = vpop.xlane.xlu0 %997
      %v999 = vsub.f32 %v992, %v998
      %v1000 = vmul.f32 %v999, 1.442695
      %v1001 = vpow.pop %v1000
      %v1002 = vsel %vm995, %v1001, 0.0
      %1003 = vadd.xlane.f32.xlu0 %v1002
      %v1004 = vpop.xlane.xlu0 %1003
      %v1005 = vrcp.pop %v1004
      %v1006 = vmul.f32 %v1001, %v1005
      %v1007 = vpack.c.bf16 %v1006, %v1006
      %v1008 = vpack.c.bf16 %v817, %v815
      %v1010 = vsel %vm995, %v1007, 0
      %1012 = vmatpush.bf16.msra.mxu0 0
      %1013 = vmatpush.bf16.msra.mxu0 0
      %1014 = vmatpush.bf16.msra.mxu0 0
      %1015 = vmatpush.bf16.msra.mxu0 0
      %1016 = vmatpush.bf16.msra.mxu0 0
      %1017 = vmatpush.bf16.msra.mxu0 0
      %1018 = vmatpush.bf16.msra.mxu0 0
      %1019 = vmatpush.bf16.msra.mxu0 %v1008
      %1020 = vmatmul.bf16.gmra.mxu0 %v1010
      %v1021 = vpop.f32.mrf.mxu0
      %v1022 = vadd.f32 0.0, %v1021
      %v1023 = vpop.f32.mrf.mxu0
      %1024 = vdwg.mxu0
      %v1025 = vpack.c.bf16 %v980, %v978
      %v1026 = vld [vmem:[%s640] sm:$0xf]
      %v1027 = vld [vmem:[%s640 + $0x4] sm:$0xf]
      %v1028 = vld [vmem:[%s640 + $0x8] sm:$0xf]
      %v1029 = vld [vmem:[%s640 + $0xc] sm:$0xf]
      %v1034 = vunpack.c.l.b16 %v1026
      %v1035 = vunpack.c.l.b16 %v1027
      %v1036 = vunpack.c.l.b16 %v1028
      %v1037 = vunpack.c.l.b16 %v1029
      %v1038 = vpack.c.b16 %v1035, %v1034
      %v1039 = vpack.c.b16 %v1037, %v1036
      %v1043 = vsel %vm915, %v1025, 0
      %1045 = vmatpush.bf16.msra.mxu0 0
      %1046 = vmatpush.bf16.msra.mxu0 0
      %1047 = vmatpush.bf16.msra.mxu0 0
      %1048 = vmatpush.bf16.msra.mxu0 0
      %1049 = vmatpush.bf16.msra.mxu0 0
      %1050 = vmatpush.bf16.msra.mxu0 0
      %1051 = vmatpush.bf16.msra.mxu0 %v1039
      %1052 = vmatpush.bf16.msra.mxu0 %v1038
      %1053 = vmatmul.bf16.gmra.mxu0 %v1043
      %v1054 = vpop.f32.mrf.mxu0
      %v1055 = vadd.f32 0.0, %v1054
      %v1056 = vpop.f32.mrf.mxu0
      %v1057 = vadd.f32 0.0, %v1056
      %1058 = vdwg.mxu0
      %v1059 = vpack.c.bf16 %v1022, %v1022
      %v1060 = vld [vmem:[%s645] sm:$0xf]
      %v1061 = vld [vmem:[%s645 + $0x4] sm:$0xf]
      %v1062 = vld [vmem:[%s645 + $0x8] sm:$0xf]
      %v1063 = vld [vmem:[%s645 + $0xc] sm:$0xf]
      %v1068 = vunpack.c.l.b16 %v1060
      %v1069 = vunpack.c.l.b16 %v1061
      %v1070 = vunpack.c.l.b16 %v1062
      %v1071 = vunpack.c.l.b16 %v1063
      %v1072 = vpack.c.b16 %v1069, %v1068
      %v1073 = vpack.c.b16 %v1071, %v1070
      %v1077 = vsel %vm915, %v1059, 0
      %1079 = vmatpush.bf16.msra.mxu0 0
      %1080 = vmatpush.bf16.msra.mxu0 0
      %1081 = vmatpush.bf16.msra.mxu0 0
      %1082 = vmatpush.bf16.msra.mxu0 0
      %1083 = vmatpush.bf16.msra.mxu0 0
      %1084 = vmatpush.bf16.msra.mxu0 0
      %1085 = vmatpush.bf16.msra.mxu0 %v1073
      %1086 = vmatpush.bf16.msra.mxu0 %v1072
      %1087 = vmatmul.bf16.gmra.mxu0 %v1077
      %v1088 = vpop.f32.mrf.mxu0
      %v1089 = vadd.f32 0.0, %v1088
      %v1090 = vpop.f32.mrf.mxu0
      %1091 = vdwg.mxu0
      %p1092 = scmp.eq.s32.totalorder %s32, 0
      // Predicated region
      $region77: #{sa3_fwd.10} parent=75 // pred_check
        %p1093 = pneg %p1092
      $region78: #{sa3_fwd.10} parent=75 // pred_check_branch
        %1095 = sbr.rel (%p1093) target = $region80
      $region79: #{sa3_fwd.10} parent=75 // pred_region
        %1096 = vst [vmem:[%s650] sm:$0xff] %v1055
        %1097 = vst [vmem:[%s650 + $0x8] sm:$0xff] %v1057
        %1098 = vst.msk [vmem:[%s654] sm:$0xff] %vm851, %v1089
      $region80: #{sa3_fwd.10} parent=75 // pred_fallthru
        _
      %p1099 = scmp.ne.s32.totalorder %s32, 0
      // Predicated region
      $region81: #{sa3_fwd.10} parent=75 // pred_check
        %p1100 = pneg %p1099
      $region82: #{sa3_fwd.10} parent=75 // pred_check_branch
        %1102 = sbr.rel (%p1100) target = $region84
      $region83: #{sa3_fwd.10} parent=75 // pred_region
        %v1103 = vld [vmem:[%s650] sm:$0xff]
        %v1104 = vld [vmem:[%s650 + $0x8] sm:$0xff]
        %v1105 = vadd.f32 %v1103, %v1055
        %v1106 = vadd.f32 %v1104, %v1057
        %1107 = vst [vmem:[%s650] sm:$0xff] %v1105
        %1108 = vst [vmem:[%s650 + $0x8] sm:$0xff] %v1106
        %v1109 = vld [vmem:[%s654] sm:$0xff]
        %v1110 = vadd.f32 %v1109, %v1089
        %1111 = vst.msk [vmem:[%s654] sm:$0xff] %vm851, %v1110
      $region84: #{sa3_fwd.10} parent=75 // pred_fallthru
        _
      %p1112 = scmp.eq.s32.totalorder %s32, 3
      // Predicated region
      $region85: #{sa3_fwd.10} parent=75 // pred_check
        %p1113 = pneg %p1112
      $region86: #{sa3_fwd.10} parent=75 // pred_check_branch
        %1115 = sbr.rel (%p1113) target = $region88
      $region87: #{sa3_fwd.10} parent=75 // pred_region
        %v1116 = vld [vmem:[%s650] sm:$0xff]
        %v1117 = vld [vmem:[%s650 + $0x8] sm:$0xff]
        %v1118 = vld [vmem:[%s7] sm:$0x1]
        %v1120 = vperm.slane %v1118, 0
        %v1122 = vadd.f32 %v1116, %v1120
        %v1123 = vadd.f32 %v1117, %v1120
        %v1124 = vmul.f32 %v1122, 2.0
        %v1125 = vmul.f32 %v1123, 2.0
        %v1126 = vld [vmem:[%s654] sm:$0xff]
        %v1127 = vld [vmem:[%s9] sm:$0x1]
        %v1129 = vperm.slane %v1127, 0
        %v1131 = vadd.f32 %v1126, %v1129
        %v1132 = vmul.f32 %v1131, 2.0
        %v1133 = vld [vmem:[%s10] sm:$0x1]
        %v1134 = vld [vmem:[%s11] sm:$0x1]
        %1135 = vadd.xlane.f32.xlu0 %v1124
        %v1136 = vpop.xlane.xlu0 %1135
        %1137 = vadd.xlane.f32.xlu0 %v1125
        %v1138 = vpop.xlane.xlu0 %1137
        %v1139 = vrcp.pop 128.0
        %v1140 = vmul.f32 128.0, %v1139
        %v1141 = vsub.f32 1.0, %v1140
        %v1142 = vmul.f32 %v1139, %v1141
        %v1143 = vadd.f32 %v1139, %v1142
        %vm1144 = vweird.f32 %v1139
        %v1145 = vsel %vm1144, %v1139, %v1143
        %v1146 = vmul.f32 %v1136, %v1145
        %v1147 = vmul.f32 %v1138, %v1145
        %v1148 = vsub.f32 %v1124, %v1146
        %v1149 = vsub.f32 %v1125, %v1147
        %v1150 = vmul.f32 %v1148, %v1148
        %v1151 = vmul.f32 %v1149, %v1149
        %1152 = vadd.xlane.f32.xlu0 %v1150
        %v1153 = vpop.xlane.xlu0 %1152
        %1154 = vadd.xlane.f32.xlu0 %v1151
        %v1155 = vpop.xlane.xlu0 %1154
        %v1156 = vmul.f32 %v1153, 0.007874016
        %v1157 = vmul.f32 %v1155, 0.007874016
        %v1158 = vrsqrt.pop %v1156
        %v1159 = vmul.f32 %v1158, %v1156
        %v1160 = vmul.f32 %v1159, %v1158
        %v1161 = vmul.f32 0.5, %v1160
        %v1162 = vsub.f32 1.5, %v1161
        %v1163 = vmul.f32 %v1158, %v1162
        %v1164 = vmul.f32 %v1156, %v1163
        %vm1165 = vcmp.eq.f32.partialorder %v1156, inf
        %v1166 = vsel %vm1165, %v1156, %v1164
        %vm1167 = vcmp.eq.f32.partialorder %v1156, 0.0
        %v1168 = vand.u32 %v1156, 2147483648
        %v1169 = vsel %vm1167, %v1168, %v1166
        %v1170 = vrsqrt.pop %v1157
        %v1171 = vmul.f32 %v1170, %v1157
        %v1172 = vmul.f32 %v1171, %v1170
        %v1173 = vmul.f32 0.5, %v1172
        %v1174 = vsub.f32 1.5, %v1173
        %v1175 = vmul.f32 %v1170, %v1174
        %v1176 = vmul.f32 %v1157, %v1175
        %vm1177 = vcmp.eq.f32.partialorder %v1157, inf
        %v1178 = vsel %vm1177, %v1157, %v1176
        %vm1179 = vcmp.eq.f32.partialorder %v1157, 0.0
        %v1180 = vand.u32 %v1157, 2147483648
        %v1181 = vsel %vm1179, %v1180, %v1178
        %v1183 = vperm.slane %v1133, 0
        %v1185 = vmul.f32 %v1183, %v1148
        %v1186 = vmul.f32 %v1183, %v1149
        %v1187 = vadd.f32 %v1169, 1e-06
        %v1188 = vadd.f32 %v1181, 1e-06
        %v1189 = vrcp.pop %v1187
        %v1190 = vrcp.pop %v1188
        %v1191 = vmul.f32 %v1185, %v1189
        %v1192 = vmul.f32 %v1186, %v1190
        %v1194 = vperm.slane %v1134, 0
        %v1196 = vadd.f32 %v1191, %v1194
        %v1197 = vadd.f32 %v1192, %v1194
        %1198 = vst [vmem:[%s650] sm:$0xff] %v1196
        %1199 = vst [vmem:[%s650 + $0x8] sm:$0xff] %v1197
        %v1200 = vld [vmem:[%s12] sm:$0x1]
        %v1201 = vld [vmem:[%s13] sm:$0x1]
        %v1202 = vsel %vm851, %v1132, 0.0
        %1203 = vadd.xlane.f32.xlu0 %v1202
        %v1204 = vpop.xlane.xlu0 %1203
        %v1205 = vrcp.pop 64.0
        %v1206 = vmul.f32 64.0, %v1205
        %v1207 = vsub.f32 1.0, %v1206
        %v1208 = vmul.f32 %v1205, %v1207
        %v1209 = vadd.f32 %v1205, %v1208
        %vm1210 = vweird.f32 %v1205
        %v1211 = vsel %vm1210, %v1205, %v1209
        %v1212 = vmul.f32 %v1204, %v1211
        %v1213 = vsub.f32 %v1132, %v1212
        %v1214 = vmul.f32 %v1213, %v1213
        %v1215 = vsel %vm851, %v1214, 0.0
        %1216 = vadd.xlane.f32.xlu0 %v1215
        %v1217 = vpop.xlane.xlu0 %1216
        %v1218 = vmul.f32 %v1217, 0.015873017
        %v1219 = vrsqrt.pop %v1218
        %v1220 = vmul.f32 %v1219, %v1218
        %v1221 = vmul.f32 %v1220, %v1219
        %v1222 = vmul.f32 0.5, %v1221
        %v1223 = vsub.f32 1.5, %v1222
        %v1224 = vmul.f32 %v1219, %v1223
        %v1225 = vmul.f32 %v1218, %v1224
        %vm1226 = vcmp.eq.f32.partialorder %v1218, inf
        %v1227 = vsel %vm1226, %v1218, %v1225
        %vm1228 = vcmp.eq.f32.partialorder %v1218, 0.0
        %v1229 = vand.u32 %v1218, 2147483648
        %v1230 = vsel %vm1228, %v1229, %v1227
        %v1232 = vperm.slane %v1200, 0
        %v1234 = vmul.f32 %v1232, %v1213
        %v1235 = vadd.f32 %v1230, 1e-06
        %v1236 = vrcp.pop %v1235
        %v1237 = vmul.f32 %v1234, %v1236
        %v1239 = vperm.slane %v1201, 0
        %v1241 = vadd.f32 %v1237, %v1239
        %1242 = vst.msk [vmem:[%s654] sm:$0xff] %vm851, %v1241
      $region88: #{sa3_fwd.10} parent=75 // pred_fallthru
        _
      %p1243 = scmp.lt.s32.totalorder %s31, 1
      %s1244 = scalar_select %p1243, %s31, 1
      %s1245 = smul.addr %s1244, 2
      %s1246 = smul.addr %s1245, 8
      %s1247 = scalar_lea.vmem %s14, %s1246
      %p1248 = scmp.lt.s32.totalorder %s31, 1
      %s1249 = scalar_select %p1248, %s31, 1
      %s1250 = smul.addr %s1249, 8
      %s1251 = scalar_lea.vmem %s15, %s1250
      // Predicated region
      $region89: #{sa3_fwd.10} parent=75 // pred_check
        %p1252 = pneg %p391
      $region90: #{sa3_fwd.10} parent=75 // pred_check_branch
        %1254 = sbr.rel (%p1252) target = $region92
      $region91: #{sa3_fwd.10} parent=75 // pred_region
        _
      $region92: #{sa3_fwd.10} parent=75 // pred_fallthru
        _
      // Predicated region
      $region93: #{sa3_fwd.10} parent=75 // pred_check
        %p1255 = pneg %p417
      $region94: #{sa3_fwd.10} parent=75 // pred_check_branch
        %1257 = sbr.rel (%p1255) target = $region96
      $region95: #{sa3_fwd.10} parent=75 // pred_region
        _
      $region96: #{sa3_fwd.10} parent=75 // pred_fallthru
        _
    $region76: #{sa3_fwd.10} parent=5 // pred_fallthru
      _
    %p1258 = scmp.le.s32.totalorder 2, %s22
    // Predicated region
    $region97: #{sa3_fwd.10} parent=5 // pred_check
      %p1259 = pneg %p1258
    $region98: #{sa3_fwd.10} parent=5 // pred_check_branch
      %1261 = sbr.rel (%p1259) target = $region100
    $region99: #{sa3_fwd.10} parent=5 // pred_region
      %s1262 = ssub.s32 %s22, 2
      // Predicated region
      $region101: #{sa3_fwd.10} parent=99 // pred_check
        %p1263 = pneg %p397
      $region102: #{sa3_fwd.10} parent=99 // pred_check_branch
        %1265 = sbr.rel (%p1263) target = $region104
      $region103: #{sa3_fwd.10} parent=99 // pred_region
        %p1266 = scmp.lt.s32.totalorder %s33, 1
        %s1267 = scalar_select %p1266, %s33, 1
        %s1268 = smul.addr %s1267, 2
        %s1269 = smul.addr %s1268, 8
        %s1270 = scalar_lea.vmem %s14, %s1269
      $region104: #{sa3_fwd.10} parent=99 // pred_fallthru
        _
      // Predicated region
      $region105: #{sa3_fwd.10} parent=99 // pred_check
        %p1271 = pneg %p423
      $region106: #{sa3_fwd.10} parent=99 // pred_check_branch
        %1273 = sbr.rel (%p1271) target = $region108
      $region107: #{sa3_fwd.10} parent=99 // pred_region
        %p1274 = scmp.lt.s32.totalorder %s33, 1
        %s1275 = scalar_select %p1274, %s33, 1
        %s1276 = smul.addr %s1275, 8
        %s1277 = scalar_lea.vmem %s15, %s1276
      $region108: #{sa3_fwd.10} parent=99 // pred_fallthru
        _
    $region100: #{sa3_fwd.10} parent=5 // pred_fallthru
      _
  $region6: #{sa3_fwd.10} parent=0 // loop_footer
    %s26 = sadd.s32 1, %s22
  $region7: #{sa3_fwd.10} parent=0 // loop_footer_branch
    %21 = sbr.rel target = $region3
  $region8: #{sa3_fwd.10} parent=0 // loop_exit
    _

</llo_original>
